<compile_context>
chip_gen: v7x
topology: tpu7x:2x2x1
jax: 0.10.0
libtpu: 0.0.40
codegen_flags: <defaults>
</compile_context>

<pallas_src>
import functools

import jax
import jax.numpy as jnp
from jax.experimental import pallas as pl
from jax.experimental.pallas import tpu as pltpu


# ------------------------------ packed-parameter layout -----------------------------

HP = 128            # padded lane width (one full lane group)
GATES = 3           # PyTorch GRU gate order: r, z, n  (packed at lanes [0:H),[H:2H),[2H:3H))

# head blob (f32) row offsets
ATTN_OFF = 0
W1_OFF = 8
B1_OFF = W1_OFF + HP          # 136
W2_OFF = B1_OFF + 8           # 144
B2_OFF = W2_OFF + HP          # 272
W3_OFF = B2_OFF + 8           # 280
B3_OFF = W3_OFF + HP          # 408
HEAD_ROWS = B3_OFF + 8        # 416


# ------------------------- pure-JAX reference (unchanged math) ----------------------

def _gru_layer(seq, w_ih, w_hh, b_ih, b_hh, hidden):
    """Reference GRU layer. seq: (B,T,Din), w_ih: (3H,Din), w_hh: (3H,H), b_*: (1,3H)."""
    B, T, Din = seq.shape
    H = hidden
    x_flat = seq.reshape(B * T, Din)
    gi_all = (jnp.dot(x_flat, w_ih.T, preferred_element_type=jnp.float32) + b_ih)
    gi_all = gi_all.reshape(B, T, 3 * H)

    h = jnp.zeros((B, H), jnp.float32)
    outs = []
    for t in range(T):
        gi = gi_all[:, t, :]
        gh = jnp.dot(h, w_hh.T, preferred_element_type=jnp.float32) + b_hh
        r = jax.nn.sigmoid(gi[:, :H] + gh[:, :H])
        z = jax.nn.sigmoid(gi[:, H:2 * H] + gh[:, H:2 * H])
        n = jnp.tanh(gi[:, 2 * H:] + r * gh[:, 2 * H:])
        h = (1.0 - z) * n + z * h
        outs.append(h)
    return jnp.stack(outs, axis=1)


def _forward_math(x, wih0, whh0, bih0, bhh0,
                  wih1, whh1, bih1, bhh1,
                  wih2, whh2, bih2, bhh2,
                  wattn, w1, b1, w2, b2, w3, b3):
    """Pure-JAX f32 reference matching PyTorch EnhancedGRUModel.forward (eval mode)."""
    H = whh0.shape[1]
    B, T, _ = x.shape

    seq = x
    for (wih, whh, bih, bhh) in ((wih0, whh0, bih0, bhh0),
                                 (wih1, whh1, bih1, bhh1),
                                 (wih2, whh2, bih2, bhh2)):
        seq = _gru_layer(seq, wih, whh, bih, bhh, H)

    scores = jnp.dot(seq.reshape(B * T, H), wattn,
                     preferred_element_type=jnp.float32).reshape(B, T)
    m = jnp.max(scores, axis=1, keepdims=True)
    e = jnp.exp(scores - m)
    attn = e / jnp.sum(e, axis=1, keepdims=True)
    ctx = jnp.sum(seq * attn[:, :, None], axis=1)

    h1 = jnp.maximum(jnp.dot(ctx, w1.T, preferred_element_type=jnp.float32) + b1, 0.0)
    h2 = jnp.maximum(jnp.dot(h1, w2.T, preferred_element_type=jnp.float32) + b2, 0.0)
    return jnp.dot(h2, w3.T, preferred_element_type=jnp.float32) + b3


# ----------------------------------- Pallas kernel ----------------------------------

def enhanced_gru_kernel(x_ref, gw_ref, gb_ref, head_ref, out_ref,
                        seq0_ref, seq1_ref, gi_ref, *, hidden):
    H = hidden
    TB = x_ref.shape[0]                 # T * B (time-major, flat)
    B = out_ref.shape[0]
    T = TB // B
    num_layers = gb_ref.shape[0] // 2
    bufs = (seq0_ref, seq1_ref)

    # ----------------------------------- GRU stack -----------------------------------
    for layer in range(num_layers):
        wbase = layer * 2 * HP
        wihT = gw_ref[wbase:wbase + HP, :]                    # (HP,HP) bf16, pre-transposed
        whhT = gw_ref[wbase + HP:wbase + 2 * HP, :]           # (HP,HP) bf16, pre-transposed
        b_gi = gb_ref[2 * layer:2 * layer + 1, :]             # (1,HP) f32 folded input bias
        # n-gate hidden bias on the n lanes; broadcast hoisted out of the time loop
        bhn = jnp.broadcast_to(gb_ref[2 * layer + 1:2 * layer + 2, :], (B, HP))

        seq_in = x_ref[...] if layer == 0 else bufs[(layer - 1) % 2][...]   # (T*B, HP) f32
        out_buf = bufs[layer % 2]

        # Single MXU matmul for the input projection of all T steps (bf16 operands, f32 acc);
        # parked in VMEM scratch so per-step reads are plain 2-sublane slices.
        gi_ref[...] = jnp.dot(seq_in.astype(jnp.bfloat16), wihT,
                              preferred_element_type=jnp.float32) + b_gi

        h = jnp.zeros((B, HP), jnp.float32)
        for t in range(T):                                    # T=8: static unroll is fine
            git = gi_ref[t * B:(t + 1) * B, :]                # (B, HP), static 2-row slice
            gh = jnp.dot(h.astype(jnp.bfloat16), whhT,        # single 128x128 bf16 RHS slab
                         preferred_element_type=jnp.float32)
            # r @ lanes [0:H), z @ [H:2H) and its duplicate @ [3H:4H), n pre-act @ [2H:3H)
            sg = jax.nn.sigmoid(git + gh)
            r_n = pltpu.roll(sg, shift=2 * H, axis=1)         # r -> n lanes (64-roll, agnostic)
            n = jnp.tanh(git + r_n * (gh + bhn))              # n valid @ [2H:3H)
            z_h = pltpu.roll(sg, shift=H, axis=1)             # a z copy lands on [0:H) under
                                                              # either rotate convention (dup)
            n_h = pltpu.roll(n, shift=2 * H, axis=1)          # n -> h lanes (64-roll, agnostic)
            h = (1.0 - z_h) * n_h + z_h * h                   # valid @ [0:H); pad lanes bounded
            out_buf[t * B:(t + 1) * B, :] = h

    seq = bufs[(num_layers - 1) % 2]                          # (T*B, HP); lanes >= H are junk
                                                              # but killed by zero weight rows

    # -------------------------------- attention pooling ------------------------------
    # scores = Linear(H->1, no bias): lane-wise multiply + XLU reduce (no N=1 MXU matmul).
    wattn = head_ref[ATTN_OFF:ATTN_OFF + 1, :]                # (1, HP), zero beyond lane H
    rows = [seq[t * B:(t + 1) * B, :] for t in range(T)]
    sc = [jnp.sum(r * wattn, axis=-1, keepdims=True) for r in rows]        # (B,1) each
    m = sc[0]
    for t in range(1, T):
        m = jnp.maximum(m, sc[t])
    ex = [jnp.exp(s - m) for s in sc]
    den = ex[0]
    for t in range(1, T):
        den = den + ex[t]
    inv = pl.reciprocal(den, approx=True)                     # EUP slot, off the VPU path
    ctx = rows[0] * (ex[0] * inv)
    for t in range(1, T):
        ctx = ctx + rows[t] * (ex[t] * inv)                   # (B, HP)

    # ------------------------------------ MLP head -----------------------------------
    # Head matmuls run once (off the 24-step serial chain) -> kept f32 for output margin.
    w1T = head_ref[W1_OFF:W1_OFF + HP, :]
    b1 = head_ref[B1_OFF:B1_OFF + 1, :]
    w2T = head_ref[W2_OFF:W2_OFF + HP, :]
    b2 = head_ref[B2_OFF:B2_OFF + 1, :]
    w3T = head_ref[W3_OFF:W3_OFF + HP, :]
    b3 = head_ref[B3_OFF:B3_OFF + 1, :]

    h1 = jnp.maximum(jnp.dot(ctx, w1T, preferred_element_type=jnp.float32) + b1, 0.0)
    h2 = jnp.maximum(jnp.dot(h1, w2T, preferred_element_type=jnp.float32) + b2, 0.0)
    out_ref[...] = (jnp.dot(h2, w3T, preferred_element_type=jnp.float32) + b3
                    ).astype(out_ref.dtype)                   # lane-dense (B, 128)


# --------------------------- wrapper-side parameter packing -------------------------

def pack_params(params, input_size, hidden_size, output_size, num_layers=3):
    """Pre-transpose, pack gates into 3H(+dup) lanes, fold r/z hidden biases.

    Returns (gru_weights_bf16, gru_biases_f32, head_f32).  Called ONCE at init;
    not on the per-call hot path.
    """
    H = hidden_size
    assert input_size <= HP and 4 * H <= HP and 2 * H <= HP and output_size <= HP

    gw = jnp.zeros((num_layers * 2 * HP, HP), jnp.float32)
    gb = jnp.zeros((num_layers * 2, HP), jnp.float32)
    for layer in range(num_layers):
        din = input_size if layer == 0 else H
        wih = params[f"wih{layer}"].astype(jnp.float32)     # (3H, din)
        whh = params[f"whh{layer}"].astype(jnp.float32)     # (3H, H)
        bih = params[f"bih{layer}"][0].astype(jnp.float32)  # (3H,)
        bhh = params[f"bhh{layer}"][0].astype(jnp.float32)  # (3H,)
        base = layer * 2 * HP
        for g in range(GATES):
            gw = gw.at[base:base + din, g * H:(g + 1) * H].set(wih[g * H:(g + 1) * H, :].T)
            gw = gw.at[base + HP:base + HP + H, g * H:(g + 1) * H].set(whh[g * H:(g + 1) * H, :].T)
        # duplicate the z gate into the spare fourth lane group [3H:4H) so that a +-H lane
        # roll puts a z copy onto h's lanes regardless of the hardware rotate direction.
        gw = gw.at[base:base + din, 3 * H:4 * H].set(wih[H:2 * H, :].T)
        gw = gw.at[base + HP:base + HP + H, 3 * H:4 * H].set(whh[H:2 * H, :].T)
        # folded input-side bias: r/z get bih+bhh, n gets bih only (bhh_n stays inside r*(.))
        gb = gb.at[2 * layer, 0:H].set(bih[0:H] + bhh[0:H])
        gb = gb.at[2 * layer, H:2 * H].set(bih[H:2 * H] + bhh[H:2 * H])
        gb = gb.at[2 * layer, 2 * H:3 * H].set(bih[2 * H:3 * H])
        gb = gb.at[2 * layer, 3 * H:4 * H].set(bih[H:2 * H] + bhh[H:2 * H])   # z duplicate
        gb = gb.at[2 * layer + 1, 2 * H:3 * H].set(bhh[2 * H:3 * H])          # bhh_n on n lanes

    head = jnp.zeros((HEAD_ROWS, HP), jnp.float32)
    head = head.at[ATTN_OFF, 0:H].set(params["wattn"][:, 0].astype(jnp.float32))
    head = head.at[W1_OFF:W1_OFF + H, 0:2 * H].set(params["w1"].T.astype(jnp.float32))
    head = head.at[B1_OFF, 0:2 * H].set(params["b1"][0].astype(jnp.float32))
    head = head.at[W2_OFF:W2_OFF + 2 * H, 0:H].set(params["w2"].T.astype(jnp.float32))
    head = head.at[B2_OFF, 0:H].set(params["b2"][0].astype(jnp.float32))
    head = head.at[W3_OFF:W3_OFF + H, 0:output_size].set(params["w3"].T.astype(jnp.float32))
    head = head.at[B3_OFF, 0:output_size].set(params["b3"][0].astype(jnp.float32))
    return gw.astype(jnp.bfloat16), gb, head


@functools.partial(jax.jit, static_argnames=("hidden_size", "output_size"))
def enhanced_gru_forward(x, gru_w, gru_b, head, *, hidden_size, output_size):
    B, T, D = x.shape
    # layout plumbing: time-major, flattened to (T*B, lanes), zero-padded to 128 lanes
    xp = jnp.transpose(x.astype(jnp.float32), (1, 0, 2)).reshape(T * B, D)
    xp = jnp.pad(xp, ((0, 0), (0, HP - D)))

    kernel = functools.partial(enhanced_gru_kernel, hidden=hidden_size)
    vmem = lambda: pl.BlockSpec(memory_space=pltpu.MemorySpace.VMEM)
    out = pl.pallas_call(
        kernel,
        out_shape=jax.ShapeDtypeStruct((B, HP), jnp.float32),    # lane-dense output block
        in_specs=[vmem(), vmem(), vmem(), vmem()],
        out_specs=vmem(),
        scratch_shapes=[pltpu.VMEM((T * B, HP), jnp.float32),    # seq ping (flat, no padding)
                        pltpu.VMEM((T * B, HP), jnp.float32),    # seq pong
                        pltpu.VMEM((T * B, HP), jnp.float32)],   # gi precompute
    )(xp, gru_w, gru_b, head)
    return out[:, :output_size]


# -------------------------------- parameter init ------------------------------------

def init_params(key, input_size, hidden_size, output_size, num_layers=3):
    """Deterministic init mirroring PyTorch shapes (uniform(-1/sqrt(fan), 1/sqrt(fan)))."""
    H = hidden_size
    p = {}
    keys = jax.random.split(key, 32)
    k_iter = iter(keys)

    def u(k, shape, fan):
        bound = 1.0 / jnp.sqrt(jnp.float32(fan))
        return jax.random.uniform(k, shape, jnp.float32, -bound, bound)

    for layer in range(num_layers):
        din = input_size if layer == 0 else H
        p[f"wih{layer}"] = u(next(k_iter), (3 * H, din), H)
        p[f"whh{layer}"] = u(next(k_iter), (3 * H, H), H)
        p[f"bih{layer}"] = u(next(k_iter), (1, 3 * H), H)
        p[f"bhh{layer}"] = u(next(k_iter), (1, 3 * H), H)

    p["wattn"] = u(next(k_iter), (H, 1), H)      # Linear(H, 1, bias=False), stored transposed
    p["w1"] = u(next(k_iter), (2 * H, H), H)
    p["b1"] = u(next(k_iter), (1, 2 * H), H)
    p["w2"] = u(next(k_iter), (H, 2 * H), 2 * H)
    p["b2"] = u(next(k_iter), (1, H), 2 * H)
    p["w3"] = u(next(k_iter), (output_size, H), H)
    p["b3"] = u(next(k_iter), (1, output_size), H)
    return p


# -------------------------------------- main ----------------------------------------

if __name__ == "__main__":
    B, T = 2, 8
    INPUT_SIZE, HIDDEN_SIZE, OUTPUT_SIZE = 16, 32, 8

    key = jax.random.PRNGKey(0)
    kx, kp = jax.random.split(key)
    x = jax.random.normal(kx, (B, T, INPUT_SIZE), jnp.float32)
    params = init_params(kp, INPUT_SIZE, HIDDEN_SIZE, OUTPUT_SIZE)

    # pack once (off the per-call hot path), then call the jitted forward with the blobs
    gru_w, gru_b, head = pack_params(params, INPUT_SIZE, HIDDEN_SIZE, OUTPUT_SIZE)
    out = enhanced_gru_forward(x, gru_w, gru_b, head,
                               hidden_size=HIDDEN_SIZE, output_size=OUTPUT_SIZE)
    out = jax.block_until_ready(out)

    # pure-JAX f32 reference (original un-padded, un-transposed math) as a sanity check
    ref = _forward_math(
        x,
        params["wih0"], params["whh0"], params["bih0"], params["bhh0"],
        params["wih1"], params["whh1"], params["bih1"], params["bhh1"],
        params["wih2"], params["whh2"], params["bih2"], params["bhh2"],
        params["wattn"],
        params["w1"], params["b1"], params["w2"], params["b2"],
        params["w3"], params["b3"])
    ref = jax.block_until_ready(ref)

    assert out.shape == (B, OUTPUT_SIZE)
    assert bool(jnp.all(jnp.isfinite(out)))
    # bf16 MXU operands in the GRU recurrence vs a pure-f32 reference -> bf16-level tolerance
    assert bool(jnp.allclose(out, ref, atol=3e-2, rtol=3e-2))
    print("KERNEL_OK")
</pallas_src>

<mosaic_0001>
module attributes {stable_mosaic.version = 11 : i64} {
  func.func @enhanced_gru_kernel(%arg0: memref<16x128xf32, #tpu.memory_space<vmem>>, %arg1: memref<768x128xbf16, #tpu.memory_space<vmem>>, %arg2: memref<6x128xf32, #tpu.memory_space<vmem>>, %arg3: memref<416x128xf32, #tpu.memory_space<vmem>>, %arg4: memref<2x128xf32, #tpu.memory_space<vmem>>, %arg5: memref<16x128xf32, #tpu.memory_space<vmem>>, %arg6: memref<16x128xf32, #tpu.memory_space<vmem>>, %arg7: memref<16x128xf32, #tpu.memory_space<vmem>>) attributes {dimension_semantics = [], scalar_prefetch = 0 : i64, scratch_operands = 3 : i64, tpu.core_type = #tpu.core_type<tc>} {
    %c0 = arith.constant 0 : index
    %c0_0 = arith.constant 0 : index
    %0 = vector.load %arg1[%c0, %c0_0] : memref<768x128xbf16, #tpu.memory_space<vmem>>, vector<128x128xbf16>
    %c128 = arith.constant 128 : index
    %c0_1 = arith.constant 0 : index
    %1 = vector.load %arg1[%c128, %c0_1] : memref<768x128xbf16, #tpu.memory_space<vmem>>, vector<128x128xbf16>
    %c0_2 = arith.constant 0 : index
    %c0_3 = arith.constant 0 : index
    %2 = vector.load %arg2[%c0_2, %c0_3] : memref<6x128xf32, #tpu.memory_space<vmem>>, vector<1x128xf32>
    %c1 = arith.constant 1 : index
    %c0_4 = arith.constant 0 : index
    %3 = vector.load %arg2[%c1, %c0_4] : memref<6x128xf32, #tpu.memory_space<vmem>>, vector<1x128xf32>
    %4 = vector.shape_cast %3 : vector<1x128xf32> to vector<1x128xf32>
    %5 = vector.broadcast %4 : vector<1x128xf32> to vector<2x128xf32>
    %c0_5 = arith.constant 0 : index
    %c0_6 = arith.constant 0 : index
    %6 = vector.load %arg0[%c0_5, %c0_6] : memref<16x128xf32, #tpu.memory_space<vmem>>, vector<16x128xf32>
    %7 = arith.truncf %6 : vector<16x128xf32> to vector<16x128xbf16>
    %cst = arith.constant dense<0.000000e+00> : vector<16x128xf32>
    %8 = tpu.matmul %7, %0, %cst {dimension_numbers = #tpu.dot_dimension_numbers<[1], [0], [0], [1], [0, 0, 1, 1], [], []>} : vector<16x128xbf16>, vector<128x128xbf16>, vector<16x128xf32> -> vector<16x128xf32>
    %9 = vector.broadcast %2 : vector<1x128xf32> to vector<16x128xf32>
    %10 = arith.addf %8, %9 : vector<16x128xf32>
    %c0_7 = arith.constant 0 : index
    %c0_8 = arith.constant 0 : index
    %11 = vector.load %arg7[%c0_7, %c0_8] : memref<16x128xf32, #tpu.memory_space<vmem>>, vector<16x128xf32>
    tpu.vector_store %arg7[%c0_7, %c0_8], %10 {strides = array<i32>} : memref<16x128xf32, #tpu.memory_space<vmem>>, vector<16x128xf32>,
    %cst_9 = arith.constant 0.000000e+00 : f32
    %12 = vector.broadcast %cst_9 : f32 to vector<2x128xf32>
    %c0_10 = arith.constant 0 : index
    %c0_11 = arith.constant 0 : index
    %13 = vector.load %arg7[%c0_10, %c0_11] : memref<16x128xf32, #tpu.memory_space<vmem>>, vector<2x128xf32>
    %14 = arith.truncf %12 : vector<2x128xf32> to vector<2x128xbf16>
    %cst_12 = arith.constant dense<0.000000e+00> : vector<2x128xf32>
    %15 = tpu.matmul %14, %1, %cst_12 {dimension_numbers = #tpu.dot_dimension_numbers<[1], [0], [0], [1], [0, 0, 1, 1], [], []>} : vector<2x128xbf16>, vector<128x128xbf16>, vector<2x128xf32> -> vector<2x128xf32>
    %16 = arith.addf %13, %15 : vector<2x128xf32>
    %17 = arith.negf %16 : vector<2x128xf32>
    %18 = math.exp %17 : vector<2x128xf32>
    %cst_13 = arith.constant 1.000000e+00 : f32
    %19 = vector.broadcast %cst_13 : f32 to vector<2x128xf32>
    %20 = arith.addf %19, %18 : vector<2x128xf32>
    %21 = arith.divf %19, %20 : vector<2x128xf32>
    %c64_i32 = arith.constant 64 : i32
    %22 = tpu.dynamic_rotate %21 by %c64_i32 dim 1 : vector<2x128xf32>, i32 -> vector<2x128xf32>
    %23 = arith.addf %15, %5 : vector<2x128xf32>
    %24 = arith.mulf %22, %23 : vector<2x128xf32>
    %25 = arith.addf %13, %24 : vector<2x128xf32>
    %26 = math.tanh %25 : vector<2x128xf32>
    %c32_i32 = arith.constant 32 : i32
    %27 = tpu.dynamic_rotate %21 by %c32_i32 dim 1 : vector<2x128xf32>, i32 -> vector<2x128xf32>
    %c64_i32_14 = arith.constant 64 : i32
    %28 = tpu.dynamic_rotate %26 by %c64_i32_14 dim 1 : vector<2x128xf32>, i32 -> vector<2x128xf32>
    %cst_15 = arith.constant 1.000000e+00 : f32
    %29 = vector.broadcast %cst_15 : f32 to vector<2x128xf32>
    %30 = arith.subf %29, %27 : vector<2x128xf32>
    %31 = arith.mulf %30, %28 : vector<2x128xf32>
    %32 = arith.mulf %27, %12 : vector<2x128xf32>
    %33 = arith.addf %31, %32 : vector<2x128xf32>
    %c0_16 = arith.constant 0 : index
    %c0_17 = arith.constant 0 : index
    %34 = vector.load %arg5[%c0_16, %c0_17] : memref<16x128xf32, #tpu.memory_space<vmem>>, vector<2x128xf32>
    tpu.vector_store %arg5[%c0_16, %c0_17], %33 {strides = array<i32>} : memref<16x128xf32, #tpu.memory_space<vmem>>, vector<2x128xf32>,
    %c2 = arith.constant 2 : index
    %c0_18 = arith.constant 0 : index
    %35 = vector.load %arg7[%c2, %c0_18] : memref<16x128xf32, #tpu.memory_space<vmem>>, vector<2x128xf32>
    %36 = arith.truncf %33 : vector<2x128xf32> to vector<2x128xbf16>
    %cst_19 = arith.constant dense<0.000000e+00> : vector<2x128xf32>
    %37 = tpu.matmul %36, %1, %cst_19 {dimension_numbers = #tpu.dot_dimension_numbers<[1], [0], [0], [1], [0, 0, 1, 1], [], []>} : vector<2x128xbf16>, vector<128x128xbf16>, vector<2x128xf32> -> vector<2x128xf32>
    %38 = arith.addf %35, %37 : vector<2x128xf32>
    %39 = arith.negf %38 : vector<2x128xf32>
    %40 = math.exp %39 : vector<2x128xf32>
    %cst_20 = arith.constant 1.000000e+00 : f32
    %41 = vector.broadcast %cst_20 : f32 to vector<2x128xf32>
    %42 = arith.addf %41, %40 : vector<2x128xf32>
    %43 = arith.divf %41, %42 : vector<2x128xf32>
    %c64_i32_21 = arith.constant 64 : i32
    %44 = tpu.dynamic_rotate %43 by %c64_i32_21 dim 1 : vector<2x128xf32>, i32 -> vector<2x128xf32>
    %45 = arith.addf %37, %5 : vector<2x128xf32>
    %46 = arith.mulf %44, %45 : vector<2x128xf32>
    %47 = arith.addf %35, %46 : vector<2x128xf32>
    %48 = math.tanh %47 : vector<2x128xf32>
    %c32_i32_22 = arith.constant 32 : i32
    %49 = tpu.dynamic_rotate %43 by %c32_i32_22 dim 1 : vector<2x128xf32>, i32 -> vector<2x128xf32>
    %c64_i32_23 = arith.constant 64 : i32
    %50 = tpu.dynamic_rotate %48 by %c64_i32_23 dim 1 : vector<2x128xf32>, i32 -> vector<2x128xf32>
    %cst_24 = arith.constant 1.000000e+00 : f32
    %51 = vector.broadcast %cst_24 : f32 to vector<2x128xf32>
    %52 = arith.subf %51, %49 : vector<2x128xf32>
    %53 = arith.mulf %52, %50 : vector<2x128xf32>
    %54 = arith.mulf %49, %33 : vector<2x128xf32>
    %55 = arith.addf %53, %54 : vector<2x128xf32>
    %c2_25 = arith.constant 2 : index
    %c0_26 = arith.constant 0 : index
    %56 = vector.load %arg5[%c2_25, %c0_26] : memref<16x128xf32, #tpu.memory_space<vmem>>, vector<2x128xf32>
    tpu.vector_store %arg5[%c2_25, %c0_26], %55 {strides = array<i32>} : memref<16x128xf32, #tpu.memory_space<vmem>>, vector<2x128xf32>,
    %c4 = arith.constant 4 : index
    %c0_27 = arith.constant 0 : index
    %57 = vector.load %arg7[%c4, %c0_27] : memref<16x128xf32, #tpu.memory_space<vmem>>, vector<2x128xf32>
    %58 = arith.truncf %55 : vector<2x128xf32> to vector<2x128xbf16>
    %cst_28 = arith.constant dense<0.000000e+00> : vector<2x128xf32>
    %59 = tpu.matmul %58, %1, %cst_28 {dimension_numbers = #tpu.dot_dimension_numbers<[1], [0], [0], [1], [0, 0, 1, 1], [], []>} : vector<2x128xbf16>, vector<128x128xbf16>, vector<2x128xf32> -> vector<2x128xf32>
    %60 = arith.addf %57, %59 : vector<2x128xf32>
    %61 = arith.negf %60 : vector<2x128xf32>
    %62 = math.exp %61 : vector<2x128xf32>
    %cst_29 = arith.constant 1.000000e+00 : f32
    %63 = vector.broadcast %cst_29 : f32 to vector<2x128xf32>
    %64 = arith.addf %63, %62 : vector<2x128xf32>
    %65 = arith.divf %63, %64 : vector<2x128xf32>
    %c64_i32_30 = arith.constant 64 : i32
    %66 = tpu.dynamic_rotate %65 by %c64_i32_30 dim 1 : vector<2x128xf32>, i32 -> vector<2x128xf32>
    %67 = arith.addf %59, %5 : vector<2x128xf32>
    %68 = arith.mulf %66, %67 : vector<2x128xf32>
    %69 = arith.addf %57, %68 : vector<2x128xf32>
    %70 = math.tanh %69 : vector<2x128xf32>
    %c32_i32_31 = arith.constant 32 : i32
    %71 = tpu.dynamic_rotate %65 by %c32_i32_31 dim 1 : vector<2x128xf32>, i32 -> vector<2x128xf32>
    %c64_i32_32 = arith.constant 64 : i32
    %72 = tpu.dynamic_rotate %70 by %c64_i32_32 dim 1 : vector<2x128xf32>, i32 -> vector<2x128xf32>
    %cst_33 = arith.constant 1.000000e+00 : f32
    %73 = vector.broadcast %cst_33 : f32 to vector<2x128xf32>
    %74 = arith.subf %73, %71 : vector<2x128xf32>
    %75 = arith.mulf %74, %72 : vector<2x128xf32>
    %76 = arith.mulf %71, %55 : vector<2x128xf32>
    %77 = arith.addf %75, %76 : vector<2x128xf32>
    %c4_34 = arith.constant 4 : index
    %c0_35 = arith.constant 0 : index
    %78 = vector.load %arg5[%c4_34, %c0_35] : memref<16x128xf32, #tpu.memory_space<vmem>>, vector<2x128xf32>
    tpu.vector_store %arg5[%c4_34, %c0_35], %77 {strides = array<i32>} : memref<16x128xf32, #tpu.memory_space<vmem>>, vector<2x128xf32>,
    %c6 = arith.constant 6 : index
    %c0_36 = arith.constant 0 : index
    %79 = vector.load %arg7[%c6, %c0_36] : memref<16x128xf32, #tpu.memory_space<vmem>>, vector<2x128xf32>
    %80 = arith.truncf %77 : vector<2x128xf32> to vector<2x128xbf16>
    %cst_37 = arith.constant dense<0.000000e+00> : vector<2x128xf32>
    %81 = tpu.matmul %80, %1, %cst_37 {dimension_numbers = #tpu.dot_dimension_numbers<[1], [0], [0], [1], [0, 0, 1, 1], [], []>} : vector<2x128xbf16>, vector<128x128xbf16>, vector<2x128xf32> -> vector<2x128xf32>
    %82 = arith.addf %79, %81 : vector<2x128xf32>
    %83 = arith.negf %82 : vector<2x128xf32>
    %84 = math.exp %83 : vector<2x128xf32>
    %cst_38 = arith.constant 1.000000e+00 : f32
    %85 = vector.broadcast %cst_38 : f32 to vector<2x128xf32>
    %86 = arith.addf %85, %84 : vector<2x128xf32>
    %87 = arith.divf %85, %86 : vector<2x128xf32>
    %c64_i32_39 = arith.constant 64 : i32
    %88 = tpu.dynamic_rotate %87 by %c64_i32_39 dim 1 : vector<2x128xf32>, i32 -> vector<2x128xf32>
    %89 = arith.addf %81, %5 : vector<2x128xf32>
    %90 = arith.mulf %88, %89 : vector<2x128xf32>
    %91 = arith.addf %79, %90 : vector<2x128xf32>
    %92 = math.tanh %91 : vector<2x128xf32>
    %c32_i32_40 = arith.constant 32 : i32
    %93 = tpu.dynamic_rotate %87 by %c32_i32_40 dim 1 : vector<2x128xf32>, i32 -> vector<2x128xf32>
    %c64_i32_41 = arith.constant 64 : i32
    %94 = tpu.dynamic_rotate %92 by %c64_i32_41 dim 1 : vector<2x128xf32>, i32 -> vector<2x128xf32>
    %cst_42 = arith.constant 1.000000e+00 : f32
    %95 = vector.broadcast %cst_42 : f32 to vector<2x128xf32>
    %96 = arith.subf %95, %93 : vector<2x128xf32>
    %97 = arith.mulf %96, %94 : vector<2x128xf32>
    %98 = arith.mulf %93, %77 : vector<2x128xf32>
    %99 = arith.addf %97, %98 : vector<2x128xf32>
    %c6_43 = arith.constant 6 : index
    %c0_44 = arith.constant 0 : index
    %100 = vector.load %arg5[%c6_43, %c0_44] : memref<16x128xf32, #tpu.memory_space<vmem>>, vector<2x128xf32>
    tpu.vector_store %arg5[%c6_43, %c0_44], %99 {strides = array<i32>} : memref<16x128xf32, #tpu.memory_space<vmem>>, vector<2x128xf32>,
    %c8 = arith.constant 8 : index
    %c0_45 = arith.constant 0 : index
    %101 = vector.load %arg7[%c8, %c0_45] : memref<16x128xf32, #tpu.memory_space<vmem>>, vector<2x128xf32>
    %102 = arith.truncf %99 : vector<2x128xf32> to vector<2x128xbf16>
    %cst_46 = arith.constant dense<0.000000e+00> : vector<2x128xf32>
    %103 = tpu.matmul %102, %1, %cst_46 {dimension_numbers = #tpu.dot_dimension_numbers<[1], [0], [0], [1], [0, 0, 1, 1], [], []>} : vector<2x128xbf16>, vector<128x128xbf16>, vector<2x128xf32> -> vector<2x128xf32>
    %104 = arith.addf %101, %103 : vector<2x128xf32>
    %105 = arith.negf %104 : vector<2x128xf32>
    %106 = math.exp %105 : vector<2x128xf32>
    %cst_47 = arith.constant 1.000000e+00 : f32
    %107 = vector.broadcast %cst_47 : f32 to vector<2x128xf32>
    %108 = arith.addf %107, %106 : vector<2x128xf32>
    %109 = arith.divf %107, %108 : vector<2x128xf32>
    %c64_i32_48 = arith.constant 64 : i32
    %110 = tpu.dynamic_rotate %109 by %c64_i32_48 dim 1 : vector<2x128xf32>, i32 -> vector<2x128xf32>
    %111 = arith.addf %103, %5 : vector<2x128xf32>
    %112 = arith.mulf %110, %111 : vector<2x128xf32>
    %113 = arith.addf %101, %112 : vector<2x128xf32>
    %114 = math.tanh %113 : vector<2x128xf32>
    %c32_i32_49 = arith.constant 32 : i32
    %115 = tpu.dynamic_rotate %109 by %c32_i32_49 dim 1 : vector<2x128xf32>, i32 -> vector<2x128xf32>
    %c64_i32_50 = arith.constant 64 : i32
    %116 = tpu.dynamic_rotate %114 by %c64_i32_50 dim 1 : vector<2x128xf32>, i32 -> vector<2x128xf32>
    %cst_51 = arith.constant 1.000000e+00 : f32
    %117 = vector.broadcast %cst_51 : f32 to vector<2x128xf32>
    %118 = arith.subf %117, %115 : vector<2x128xf32>
    %119 = arith.mulf %118, %116 : vector<2x128xf32>
    %120 = arith.mulf %115, %99 : vector<2x128xf32>
    %121 = arith.addf %119, %120 : vector<2x128xf32>
    %c8_52 = arith.constant 8 : index
    %c0_53 = arith.constant 0 : index
    %122 = vector.load %arg5[%c8_52, %c0_53] : memref<16x128xf32, #tpu.memory_space<vmem>>, vector<2x128xf32>
    tpu.vector_store %arg5[%c8_52, %c0_53], %121 {strides = array<i32>} : memref<16x128xf32, #tpu.memory_space<vmem>>, vector<2x128xf32>,
    %c10 = arith.constant 10 : index
    %c0_54 = arith.constant 0 : index
    %123 = vector.load %arg7[%c10, %c0_54] : memref<16x128xf32, #tpu.memory_space<vmem>>, vector<2x128xf32>
    %124 = arith.truncf %121 : vector<2x128xf32> to vector<2x128xbf16>
    %cst_55 = arith.constant dense<0.000000e+00> : vector<2x128xf32>
    %125 = tpu.matmul %124, %1, %cst_55 {dimension_numbers = #tpu.dot_dimension_numbers<[1], [0], [0], [1], [0, 0, 1, 1], [], []>} : vector<2x128xbf16>, vector<128x128xbf16>, vector<2x128xf32> -> vector<2x128xf32>
    %126 = arith.addf %123, %125 : vector<2x128xf32>
    %127 = arith.negf %126 : vector<2x128xf32>
    %128 = math.exp %127 : vector<2x128xf32>
    %cst_56 = arith.constant 1.000000e+00 : f32
    %129 = vector.broadcast %cst_56 : f32 to vector<2x128xf32>
    %130 = arith.addf %129, %128 : vector<2x128xf32>
    %131 = arith.divf %129, %130 : vector<2x128xf32>
    %c64_i32_57 = arith.constant 64 : i32
    %132 = tpu.dynamic_rotate %131 by %c64_i32_57 dim 1 : vector<2x128xf32>, i32 -> vector<2x128xf32>
    %133 = arith.addf %125, %5 : vector<2x128xf32>
    %134 = arith.mulf %132, %133 : vector<2x128xf32>
    %135 = arith.addf %123, %134 : vector<2x128xf32>
    %136 = math.tanh %135 : vector<2x128xf32>
    %c32_i32_58 = arith.constant 32 : i32
    %137 = tpu.dynamic_rotate %131 by %c32_i32_58 dim 1 : vector<2x128xf32>, i32 -> vector<2x128xf32>
    %c64_i32_59 = arith.constant 64 : i32
    %138 = tpu.dynamic_rotate %136 by %c64_i32_59 dim 1 : vector<2x128xf32>, i32 -> vector<2x128xf32>
    %cst_60 = arith.constant 1.000000e+00 : f32
    %139 = vector.broadcast %cst_60 : f32 to vector<2x128xf32>
    %140 = arith.subf %139, %137 : vector<2x128xf32>
    %141 = arith.mulf %140, %138 : vector<2x128xf32>
    %142 = arith.mulf %137, %121 : vector<2x128xf32>
    %143 = arith.addf %141, %142 : vector<2x128xf32>
    %c10_61 = arith.constant 10 : index
    %c0_62 = arith.constant 0 : index
    %144 = vector.load %arg5[%c10_61, %c0_62] : memref<16x128xf32, #tpu.memory_space<vmem>>, vector<2x128xf32>
    tpu.vector_store %arg5[%c10_61, %c0_62], %143 {strides = array<i32>} : memref<16x128xf32, #tpu.memory_space<vmem>>, vector<2x128xf32>,
    %c12 = arith.constant 12 : index
    %c0_63 = arith.constant 0 : index
    %145 = vector.load %arg7[%c12, %c0_63] : memref<16x128xf32, #tpu.memory_space<vmem>>, vector<2x128xf32>
    %146 = arith.truncf %143 : vector<2x128xf32> to vector<2x128xbf16>
    %cst_64 = arith.constant dense<0.000000e+00> : vector<2x128xf32>
    %147 = tpu.matmul %146, %1, %cst_64 {dimension_numbers = #tpu.dot_dimension_numbers<[1], [0], [0], [1], [0, 0, 1, 1], [], []>} : vector<2x128xbf16>, vector<128x128xbf16>, vector<2x128xf32> -> vector<2x128xf32>
    %148 = arith.addf %145, %147 : vector<2x128xf32>
    %149 = arith.negf %148 : vector<2x128xf32>
    %150 = math.exp %149 : vector<2x128xf32>
    %cst_65 = arith.constant 1.000000e+00 : f32
    %151 = vector.broadcast %cst_65 : f32 to vector<2x128xf32>
    %152 = arith.addf %151, %150 : vector<2x128xf32>
    %153 = arith.divf %151, %152 : vector<2x128xf32>
    %c64_i32_66 = arith.constant 64 : i32
    %154 = tpu.dynamic_rotate %153 by %c64_i32_66 dim 1 : vector<2x128xf32>, i32 -> vector<2x128xf32>
    %155 = arith.addf %147, %5 : vector<2x128xf32>
    %156 = arith.mulf %154, %155 : vector<2x128xf32>
    %157 = arith.addf %145, %156 : vector<2x128xf32>
    %158 = math.tanh %157 : vector<2x128xf32>
    %c32_i32_67 = arith.constant 32 : i32
    %159 = tpu.dynamic_rotate %153 by %c32_i32_67 dim 1 : vector<2x128xf32>, i32 -> vector<2x128xf32>
    %c64_i32_68 = arith.constant 64 : i32
    %160 = tpu.dynamic_rotate %158 by %c64_i32_68 dim 1 : vector<2x128xf32>, i32 -> vector<2x128xf32>
    %cst_69 = arith.constant 1.000000e+00 : f32
    %161 = vector.broadcast %cst_69 : f32 to vector<2x128xf32>
    %162 = arith.subf %161, %159 : vector<2x128xf32>
    %163 = arith.mulf %162, %160 : vector<2x128xf32>
    %164 = arith.mulf %159, %143 : vector<2x128xf32>
    %165 = arith.addf %163, %164 : vector<2x128xf32>
    %c12_70 = arith.constant 12 : index
    %c0_71 = arith.constant 0 : index
    %166 = vector.load %arg5[%c12_70, %c0_71] : memref<16x128xf32, #tpu.memory_space<vmem>>, vector<2x128xf32>
    tpu.vector_store %arg5[%c12_70, %c0_71], %165 {strides = array<i32>} : memref<16x128xf32, #tpu.memory_space<vmem>>, vector<2x128xf32>,
    %c14 = arith.constant 14 : index
    %c0_72 = arith.constant 0 : index
    %167 = vector.load %arg7[%c14, %c0_72] : memref<16x128xf32, #tpu.memory_space<vmem>>, vector<2x128xf32>
    %168 = arith.truncf %165 : vector<2x128xf32> to vector<2x128xbf16>
    %cst_73 = arith.constant dense<0.000000e+00> : vector<2x128xf32>
    %169 = tpu.matmul %168, %1, %cst_73 {dimension_numbers = #tpu.dot_dimension_numbers<[1], [0], [0], [1], [0, 0, 1, 1], [], []>} : vector<2x128xbf16>, vector<128x128xbf16>, vector<2x128xf32> -> vector<2x128xf32>
    %170 = arith.addf %167, %169 : vector<2x128xf32>
    %171 = arith.negf %170 : vector<2x128xf32>
    %172 = math.exp %171 : vector<2x128xf32>
    %cst_74 = arith.constant 1.000000e+00 : f32
    %173 = vector.broadcast %cst_74 : f32 to vector<2x128xf32>
    %174 = arith.addf %173, %172 : vector<2x128xf32>
    %175 = arith.divf %173, %174 : vector<2x128xf32>
    %c64_i32_75 = arith.constant 64 : i32
    %176 = tpu.dynamic_rotate %175 by %c64_i32_75 dim 1 : vector<2x128xf32>, i32 -> vector<2x128xf32>
    %177 = arith.addf %169, %5 : vector<2x128xf32>
    %178 = arith.mulf %176, %177 : vector<2x128xf32>
    %179 = arith.addf %167, %178 : vector<2x128xf32>
    %180 = math.tanh %179 : vector<2x128xf32>
    %c32_i32_76 = arith.constant 32 : i32
    %181 = tpu.dynamic_rotate %175 by %c32_i32_76 dim 1 : vector<2x128xf32>, i32 -> vector<2x128xf32>
    %c64_i32_77 = arith.constant 64 : i32
    %182 = tpu.dynamic_rotate %180 by %c64_i32_77 dim 1 : vector<2x128xf32>, i32 -> vector<2x128xf32>
    %cst_78 = arith.constant 1.000000e+00 : f32
    %183 = vector.broadcast %cst_78 : f32 to vector<2x128xf32>
    %184 = arith.subf %183, %181 : vector<2x128xf32>
    %185 = arith.mulf %184, %182 : vector<2x128xf32>
    %186 = arith.mulf %181, %165 : vector<2x128xf32>
    %187 = arith.addf %185, %186 : vector<2x128xf32>
    %c14_79 = arith.constant 14 : index
    %c0_80 = arith.constant 0 : index
    %188 = vector.load %arg5[%c14_79, %c0_80] : memref<16x128xf32, #tpu.memory_space<vmem>>, vector<2x128xf32>
    tpu.vector_store %arg5[%c14_79, %c0_80], %187 {strides = array<i32>} : memref<16x128xf32, #tpu.memory_space<vmem>>, vector<2x128xf32>,
    %c256 = arith.constant 256 : index
    %c0_81 = arith.constant 0 : index
    %189 = vector.load %arg1[%c256, %c0_81] : memref<768x128xbf16, #tpu.memory_space<vmem>>, vector<128x128xbf16>
    %c384 = arith.constant 384 : index
    %c0_82 = arith.constant 0 : index
    %190 = vector.load %arg1[%c384, %c0_82] : memref<768x128xbf16, #tpu.memory_space<vmem>>, vector<128x128xbf16>
    %c2_83 = arith.constant 2 : index
    %c0_84 = arith.constant 0 : index
    %191 = vector.load %arg2[%c2_83, %c0_84] : memref<6x128xf32, #tpu.memory_space<vmem>>, vector<1x128xf32>
    %c3 = arith.constant 3 : index
    %c0_85 = arith.constant 0 : index
    %192 = vector.load %arg2[%c3, %c0_85] : memref<6x128xf32, #tpu.memory_space<vmem>>, vector<1x128xf32>
    %193 = vector.shape_cast %192 : vector<1x128xf32> to vector<1x128xf32>
    %194 = vector.broadcast %193 : vector<1x128xf32> to vector<2x128xf32>
    %c0_86 = arith.constant 0 : index
    %c0_87 = arith.constant 0 : index
    %195 = vector.load %arg5[%c0_86, %c0_87] : memref<16x128xf32, #tpu.memory_space<vmem>>, vector<16x128xf32>
    %196 = arith.truncf %195 : vector<16x128xf32> to vector<16x128xbf16>
    %cst_88 = arith.constant dense<0.000000e+00> : vector<16x128xf32>
    %197 = tpu.matmul %196, %189, %cst_88 {dimension_numbers = #tpu.dot_dimension_numbers<[1], [0], [0], [1], [0, 0, 1, 1], [], []>} : vector<16x128xbf16>, vector<128x128xbf16>, vector<16x128xf32> -> vector<16x128xf32>
    %198 = vector.broadcast %191 : vector<1x128xf32> to vector<16x128xf32>
    %199 = arith.addf %197, %198 : vector<16x128xf32>
    %c0_89 = arith.constant 0 : index
    %c0_90 = arith.constant 0 : index
    %200 = vector.load %arg7[%c0_89, %c0_90] : memref<16x128xf32, #tpu.memory_space<vmem>>, vector<16x128xf32>
    tpu.vector_store %arg7[%c0_89, %c0_90], %199 {strides = array<i32>} : memref<16x128xf32, #tpu.memory_space<vmem>>, vector<16x128xf32>,
    %cst_91 = arith.constant 0.000000e+00 : f32
    %201 = vector.broadcast %cst_91 : f32 to vector<2x128xf32>
    %c0_92 = arith.constant 0 : index
    %c0_93 = arith.constant 0 : index
    %202 = vector.load %arg7[%c0_92, %c0_93] : memref<16x128xf32, #tpu.memory_space<vmem>>, vector<2x128xf32>
    %203 = arith.truncf %201 : vector<2x128xf32> to vector<2x128xbf16>
    %cst_94 = arith.constant dense<0.000000e+00> : vector<2x128xf32>
    %204 = tpu.matmul %203, %190, %cst_94 {dimension_numbers = #tpu.dot_dimension_numbers<[1], [0], [0], [1], [0, 0, 1, 1], [], []>} : vector<2x128xbf16>, vector<128x128xbf16>, vector<2x128xf32> -> vector<2x128xf32>
    %205 = arith.addf %202, %204 : vector<2x128xf32>
    %206 = arith.negf %205 : vector<2x128xf32>
    %207 = math.exp %206 : vector<2x128xf32>
    %cst_95 = arith.constant 1.000000e+00 : f32
    %208 = vector.broadcast %cst_95 : f32 to vector<2x128xf32>
    %209 = arith.addf %208, %207 : vector<2x128xf32>
    %210 = arith.divf %208, %209 : vector<2x128xf32>
    %c64_i32_96 = arith.constant 64 : i32
    %211 = tpu.dynamic_rotate %210 by %c64_i32_96 dim 1 : vector<2x128xf32>, i32 -> vector<2x128xf32>
    %212 = arith.addf %204, %194 : vector<2x128xf32>
    %213 = arith.mulf %211, %212 : vector<2x128xf32>
    %214 = arith.addf %202, %213 : vector<2x128xf32>
    %215 = math.tanh %214 : vector<2x128xf32>
    %c32_i32_97 = arith.constant 32 : i32
    %216 = tpu.dynamic_rotate %210 by %c32_i32_97 dim 1 : vector<2x128xf32>, i32 -> vector<2x128xf32>
    %c64_i32_98 = arith.constant 64 : i32
    %217 = tpu.dynamic_rotate %215 by %c64_i32_98 dim 1 : vector<2x128xf32>, i32 -> vector<2x128xf32>
    %cst_99 = arith.constant 1.000000e+00 : f32
    %218 = vector.broadcast %cst_99 : f32 to vector<2x128xf32>
    %219 = arith.subf %218, %216 : vector<2x128xf32>
    %220 = arith.mulf %219, %217 : vector<2x128xf32>
    %221 = arith.mulf %216, %201 : vector<2x128xf32>
    %222 = arith.addf %220, %221 : vector<2x128xf32>
    %c0_100 = arith.constant 0 : index
    %c0_101 = arith.constant 0 : index
    %223 = vector.load %arg6[%c0_100, %c0_101] : memref<16x128xf32, #tpu.memory_space<vmem>>, vector<2x128xf32>
    tpu.vector_store %arg6[%c0_100, %c0_101], %222 {strides = array<i32>} : memref<16x128xf32, #tpu.memory_space<vmem>>, vector<2x128xf32>,
    %c2_102 = arith.constant 2 : index
    %c0_103 = arith.constant 0 : index
    %224 = vector.load %arg7[%c2_102, %c0_103] : memref<16x128xf32, #tpu.memory_space<vmem>>, vector<2x128xf32>
    %225 = arith.truncf %222 : vector<2x128xf32> to vector<2x128xbf16>
    %cst_104 = arith.constant dense<0.000000e+00> : vector<2x128xf32>
    %226 = tpu.matmul %225, %190, %cst_104 {dimension_numbers = #tpu.dot_dimension_numbers<[1], [0], [0], [1], [0, 0, 1, 1], [], []>} : vector<2x128xbf16>, vector<128x128xbf16>, vector<2x128xf32> -> vector<2x128xf32>
    %227 = arith.addf %224, %226 : vector<2x128xf32>
    %228 = arith.negf %227 : vector<2x128xf32>
    %229 = math.exp %228 : vector<2x128xf32>
    %cst_105 = arith.constant 1.000000e+00 : f32
    %230 = vector.broadcast %cst_105 : f32 to vector<2x128xf32>
    %231 = arith.addf %230, %229 : vector<2x128xf32>
    %232 = arith.divf %230, %231 : vector<2x128xf32>
    %c64_i32_106 = arith.constant 64 : i32
    %233 = tpu.dynamic_rotate %232 by %c64_i32_106 dim 1 : vector<2x128xf32>, i32 -> vector<2x128xf32>
    %234 = arith.addf %226, %194 : vector<2x128xf32>
    %235 = arith.mulf %233, %234 : vector<2x128xf32>
    %236 = arith.addf %224, %235 : vector<2x128xf32>
    %237 = math.tanh %236 : vector<2x128xf32>
    %c32_i32_107 = arith.constant 32 : i32
    %238 = tpu.dynamic_rotate %232 by %c32_i32_107 dim 1 : vector<2x128xf32>, i32 -> vector<2x128xf32>
    %c64_i32_108 = arith.constant 64 : i32
    %239 = tpu.dynamic_rotate %237 by %c64_i32_108 dim 1 : vector<2x128xf32>, i32 -> vector<2x128xf32>
    %cst_109 = arith.constant 1.000000e+00 : f32
    %240 = vector.broadcast %cst_109 : f32 to vector<2x128xf32>
    %241 = arith.subf %240, %238 : vector<2x128xf32>
    %242 = arith.mulf %241, %239 : vector<2x128xf32>
    %243 = arith.mulf %238, %222 : vector<2x128xf32>
    %244 = arith.addf %242, %243 : vector<2x128xf32>
    %c2_110 = arith.constant 2 : index
    %c0_111 = arith.constant 0 : index
    %245 = vector.load %arg6[%c2_110, %c0_111] : memref<16x128xf32, #tpu.memory_space<vmem>>, vector<2x128xf32>
    tpu.vector_store %arg6[%c2_110, %c0_111], %244 {strides = array<i32>} : memref<16x128xf32, #tpu.memory_space<vmem>>, vector<2x128xf32>,
    %c4_112 = arith.constant 4 : index
    %c0_113 = arith.constant 0 : index
    %246 = vector.load %arg7[%c4_112, %c0_113] : memref<16x128xf32, #tpu.memory_space<vmem>>, vector<2x128xf32>
    %247 = arith.truncf %244 : vector<2x128xf32> to vector<2x128xbf16>
    %cst_114 = arith.constant dense<0.000000e+00> : vector<2x128xf32>
    %248 = tpu.matmul %247, %190, %cst_114 {dimension_numbers = #tpu.dot_dimension_numbers<[1], [0], [0], [1], [0, 0, 1, 1], [], []>} : vector<2x128xbf16>, vector<128x128xbf16>, vector<2x128xf32> -> vector<2x128xf32>
    %249 = arith.addf %246, %248 : vector<2x128xf32>
    %250 = arith.negf %249 : vector<2x128xf32>
    %251 = math.exp %250 : vector<2x128xf32>
    %cst_115 = arith.constant 1.000000e+00 : f32
    %252 = vector.broadcast %cst_115 : f32 to vector<2x128xf32>
    %253 = arith.addf %252, %251 : vector<2x128xf32>
    %254 = arith.divf %252, %253 : vector<2x128xf32>
    %c64_i32_116 = arith.constant 64 : i32
    %255 = tpu.dynamic_rotate %254 by %c64_i32_116 dim 1 : vector<2x128xf32>, i32 -> vector<2x128xf32>
    %256 = arith.addf %248, %194 : vector<2x128xf32>
    %257 = arith.mulf %255, %256 : vector<2x128xf32>
    %258 = arith.addf %246, %257 : vector<2x128xf32>
    %259 = math.tanh %258 : vector<2x128xf32>
    %c32_i32_117 = arith.constant 32 : i32
    %260 = tpu.dynamic_rotate %254 by %c32_i32_117 dim 1 : vector<2x128xf32>, i32 -> vector<2x128xf32>
    %c64_i32_118 = arith.constant 64 : i32
    %261 = tpu.dynamic_rotate %259 by %c64_i32_118 dim 1 : vector<2x128xf32>, i32 -> vector<2x128xf32>
    %cst_119 = arith.constant 1.000000e+00 : f32
    %262 = vector.broadcast %cst_119 : f32 to vector<2x128xf32>
    %263 = arith.subf %262, %260 : vector<2x128xf32>
    %264 = arith.mulf %263, %261 : vector<2x128xf32>
    %265 = arith.mulf %260, %244 : vector<2x128xf32>
    %266 = arith.addf %264, %265 : vector<2x128xf32>
    %c4_120 = arith.constant 4 : index
    %c0_121 = arith.constant 0 : index
    %267 = vector.load %arg6[%c4_120, %c0_121] : memref<16x128xf32, #tpu.memory_space<vmem>>, vector<2x128xf32>
    tpu.vector_store %arg6[%c4_120, %c0_121], %266 {strides = array<i32>} : memref<16x128xf32, #tpu.memory_space<vmem>>, vector<2x128xf32>,
    %c6_122 = arith.constant 6 : index
    %c0_123 = arith.constant 0 : index
    %268 = vector.load %arg7[%c6_122, %c0_123] : memref<16x128xf32, #tpu.memory_space<vmem>>, vector<2x128xf32>
    %269 = arith.truncf %266 : vector<2x128xf32> to vector<2x128xbf16>
    %cst_124 = arith.constant dense<0.000000e+00> : vector<2x128xf32>
    %270 = tpu.matmul %269, %190, %cst_124 {dimension_numbers = #tpu.dot_dimension_numbers<[1], [0], [0], [1], [0, 0, 1, 1], [], []>} : vector<2x128xbf16>, vector<128x128xbf16>, vector<2x128xf32> -> vector<2x128xf32>
    %271 = arith.addf %268, %270 : vector<2x128xf32>
    %272 = arith.negf %271 : vector<2x128xf32>
    %273 = math.exp %272 : vector<2x128xf32>
    %cst_125 = arith.constant 1.000000e+00 : f32
    %274 = vector.broadcast %cst_125 : f32 to vector<2x128xf32>
    %275 = arith.addf %274, %273 : vector<2x128xf32>
    %276 = arith.divf %274, %275 : vector<2x128xf32>
    %c64_i32_126 = arith.constant 64 : i32
    %277 = tpu.dynamic_rotate %276 by %c64_i32_126 dim 1 : vector<2x128xf32>, i32 -> vector<2x128xf32>
    %278 = arith.addf %270, %194 : vector<2x128xf32>
    %279 = arith.mulf %277, %278 : vector<2x128xf32>
    %280 = arith.addf %268, %279 : vector<2x128xf32>
    %281 = math.tanh %280 : vector<2x128xf32>
    %c32_i32_127 = arith.constant 32 : i32
    %282 = tpu.dynamic_rotate %276 by %c32_i32_127 dim 1 : vector<2x128xf32>, i32 -> vector<2x128xf32>
    %c64_i32_128 = arith.constant 64 : i32
    %283 = tpu.dynamic_rotate %281 by %c64_i32_128 dim 1 : vector<2x128xf32>, i32 -> vector<2x128xf32>
    %cst_129 = arith.constant 1.000000e+00 : f32
    %284 = vector.broadcast %cst_129 : f32 to vector<2x128xf32>
    %285 = arith.subf %284, %282 : vector<2x128xf32>
    %286 = arith.mulf %285, %283 : vector<2x128xf32>
    %287 = arith.mulf %282, %266 : vector<2x128xf32>
    %288 = arith.addf %286, %287 : vector<2x128xf32>
    %c6_130 = arith.constant 6 : index
    %c0_131 = arith.constant 0 : index
    %289 = vector.load %arg6[%c6_130, %c0_131] : memref<16x128xf32, #tpu.memory_space<vmem>>, vector<2x128xf32>
    tpu.vector_store %arg6[%c6_130, %c0_131], %288 {strides = array<i32>} : memref<16x128xf32, #tpu.memory_space<vmem>>, vector<2x128xf32>,
    %c8_132 = arith.constant 8 : index
    %c0_133 = arith.constant 0 : index
    %290 = vector.load %arg7[%c8_132, %c0_133] : memref<16x128xf32, #tpu.memory_space<vmem>>, vector<2x128xf32>
    %291 = arith.truncf %288 : vector<2x128xf32> to vector<2x128xbf16>
    %cst_134 = arith.constant dense<0.000000e+00> : vector<2x128xf32>
    %292 = tpu.matmul %291, %190, %cst_134 {dimension_numbers = #tpu.dot_dimension_numbers<[1], [0], [0], [1], [0, 0, 1, 1], [], []>} : vector<2x128xbf16>, vector<128x128xbf16>, vector<2x128xf32> -> vector<2x128xf32>
    %293 = arith.addf %290, %292 : vector<2x128xf32>
    %294 = arith.negf %293 : vector<2x128xf32>
    %295 = math.exp %294 : vector<2x128xf32>
    %cst_135 = arith.constant 1.000000e+00 : f32
    %296 = vector.broadcast %cst_135 : f32 to vector<2x128xf32>
    %297 = arith.addf %296, %295 : vector<2x128xf32>
    %298 = arith.divf %296, %297 : vector<2x128xf32>
    %c64_i32_136 = arith.constant 64 : i32
    %299 = tpu.dynamic_rotate %298 by %c64_i32_136 dim 1 : vector<2x128xf32>, i32 -> vector<2x128xf32>
    %300 = arith.addf %292, %194 : vector<2x128xf32>
    %301 = arith.mulf %299, %300 : vector<2x128xf32>
    %302 = arith.addf %290, %301 : vector<2x128xf32>
    %303 = math.tanh %302 : vector<2x128xf32>
    %c32_i32_137 = arith.constant 32 : i32
    %304 = tpu.dynamic_rotate %298 by %c32_i32_137 dim 1 : vector<2x128xf32>, i32 -> vector<2x128xf32>
    %c64_i32_138 = arith.constant 64 : i32
    %305 = tpu.dynamic_rotate %303 by %c64_i32_138 dim 1 : vector<2x128xf32>, i32 -> vector<2x128xf32>
    %cst_139 = arith.constant 1.000000e+00 : f32
    %306 = vector.broadcast %cst_139 : f32 to vector<2x128xf32>
    %307 = arith.subf %306, %304 : vector<2x128xf32>
    %308 = arith.mulf %307, %305 : vector<2x128xf32>
    %309 = arith.mulf %304, %288 : vector<2x128xf32>
    %310 = arith.addf %308, %309 : vector<2x128xf32>
    %c8_140 = arith.constant 8 : index
    %c0_141 = arith.constant 0 : index
    %311 = vector.load %arg6[%c8_140, %c0_141] : memref<16x128xf32, #tpu.memory_space<vmem>>, vector<2x128xf32>
    tpu.vector_store %arg6[%c8_140, %c0_141], %310 {strides = array<i32>} : memref<16x128xf32, #tpu.memory_space<vmem>>, vector<2x128xf32>,
    %c10_142 = arith.constant 10 : index
    %c0_143 = arith.constant 0 : index
    %312 = vector.load %arg7[%c10_142, %c0_143] : memref<16x128xf32, #tpu.memory_space<vmem>>, vector<2x128xf32>
    %313 = arith.truncf %310 : vector<2x128xf32> to vector<2x128xbf16>
    %cst_144 = arith.constant dense<0.000000e+00> : vector<2x128xf32>
    %314 = tpu.matmul %313, %190, %cst_144 {dimension_numbers = #tpu.dot_dimension_numbers<[1], [0], [0], [1], [0, 0, 1, 1], [], []>} : vector<2x128xbf16>, vector<128x128xbf16>, vector<2x128xf32> -> vector<2x128xf32>
    %315 = arith.addf %312, %314 : vector<2x128xf32>
    %316 = arith.negf %315 : vector<2x128xf32>
    %317 = math.exp %316 : vector<2x128xf32>
    %cst_145 = arith.constant 1.000000e+00 : f32
    %318 = vector.broadcast %cst_145 : f32 to vector<2x128xf32>
    %319 = arith.addf %318, %317 : vector<2x128xf32>
    %320 = arith.divf %318, %319 : vector<2x128xf32>
    %c64_i32_146 = arith.constant 64 : i32
    %321 = tpu.dynamic_rotate %320 by %c64_i32_146 dim 1 : vector<2x128xf32>, i32 -> vector<2x128xf32>
    %322 = arith.addf %314, %194 : vector<2x128xf32>
    %323 = arith.mulf %321, %322 : vector<2x128xf32>
    %324 = arith.addf %312, %323 : vector<2x128xf32>
    %325 = math.tanh %324 : vector<2x128xf32>
    %c32_i32_147 = arith.constant 32 : i32
    %326 = tpu.dynamic_rotate %320 by %c32_i32_147 dim 1 : vector<2x128xf32>, i32 -> vector<2x128xf32>
    %c64_i32_148 = arith.constant 64 : i32
    %327 = tpu.dynamic_rotate %325 by %c64_i32_148 dim 1 : vector<2x128xf32>, i32 -> vector<2x128xf32>
    %cst_149 = arith.constant 1.000000e+00 : f32
    %328 = vector.broadcast %cst_149 : f32 to vector<2x128xf32>
    %329 = arith.subf %328, %326 : vector<2x128xf32>
    %330 = arith.mulf %329, %327 : vector<2x128xf32>
    %331 = arith.mulf %326, %310 : vector<2x128xf32>
    %332 = arith.addf %330, %331 : vector<2x128xf32>
    %c10_150 = arith.constant 10 : index
    %c0_151 = arith.constant 0 : index
    %333 = vector.load %arg6[%c10_150, %c0_151] : memref<16x128xf32, #tpu.memory_space<vmem>>, vector<2x128xf32>
    tpu.vector_store %arg6[%c10_150, %c0_151], %332 {strides = array<i32>} : memref<16x128xf32, #tpu.memory_space<vmem>>, vector<2x128xf32>,
    %c12_152 = arith.constant 12 : index
    %c0_153 = arith.constant 0 : index
    %334 = vector.load %arg7[%c12_152, %c0_153] : memref<16x128xf32, #tpu.memory_space<vmem>>, vector<2x128xf32>
    %335 = arith.truncf %332 : vector<2x128xf32> to vector<2x128xbf16>
    %cst_154 = arith.constant dense<0.000000e+00> : vector<2x128xf32>
    %336 = tpu.matmul %335, %190, %cst_154 {dimension_numbers = #tpu.dot_dimension_numbers<[1], [0], [0], [1], [0, 0, 1, 1], [], []>} : vector<2x128xbf16>, vector<128x128xbf16>, vector<2x128xf32> -> vector<2x128xf32>
    %337 = arith.addf %334, %336 : vector<2x128xf32>
    %338 = arith.negf %337 : vector<2x128xf32>
    %339 = math.exp %338 : vector<2x128xf32>
    %cst_155 = arith.constant 1.000000e+00 : f32
    %340 = vector.broadcast %cst_155 : f32 to vector<2x128xf32>
    %341 = arith.addf %340, %339 : vector<2x128xf32>
    %342 = arith.divf %340, %341 : vector<2x128xf32>
    %c64_i32_156 = arith.constant 64 : i32
    %343 = tpu.dynamic_rotate %342 by %c64_i32_156 dim 1 : vector<2x128xf32>, i32 -> vector<2x128xf32>
    %344 = arith.addf %336, %194 : vector<2x128xf32>
    %345 = arith.mulf %343, %344 : vector<2x128xf32>
    %346 = arith.addf %334, %345 : vector<2x128xf32>
    %347 = math.tanh %346 : vector<2x128xf32>
    %c32_i32_157 = arith.constant 32 : i32
    %348 = tpu.dynamic_rotate %342 by %c32_i32_157 dim 1 : vector<2x128xf32>, i32 -> vector<2x128xf32>
    %c64_i32_158 = arith.constant 64 : i32
    %349 = tpu.dynamic_rotate %347 by %c64_i32_158 dim 1 : vector<2x128xf32>, i32 -> vector<2x128xf32>
    %cst_159 = arith.constant 1.000000e+00 : f32
    %350 = vector.broadcast %cst_159 : f32 to vector<2x128xf32>
    %351 = arith.subf %350, %348 : vector<2x128xf32>
    %352 = arith.mulf %351, %349 : vector<2x128xf32>
    %353 = arith.mulf %348, %332 : vector<2x128xf32>
    %354 = arith.addf %352, %353 : vector<2x128xf32>
    %c12_160 = arith.constant 12 : index
    %c0_161 = arith.constant 0 : index
    %355 = vector.load %arg6[%c12_160, %c0_161] : memref<16x128xf32, #tpu.memory_space<vmem>>, vector<2x128xf32>
    tpu.vector_store %arg6[%c12_160, %c0_161], %354 {strides = array<i32>} : memref<16x128xf32, #tpu.memory_space<vmem>>, vector<2x128xf32>,
    %c14_162 = arith.constant 14 : index
    %c0_163 = arith.constant 0 : index
    %356 = vector.load %arg7[%c14_162, %c0_163] : memref<16x128xf32, #tpu.memory_space<vmem>>, vector<2x128xf32>
    %357 = arith.truncf %354 : vector<2x128xf32> to vector<2x128xbf16>
    %cst_164 = arith.constant dense<0.000000e+00> : vector<2x128xf32>
    %358 = tpu.matmul %357, %190, %cst_164 {dimension_numbers = #tpu.dot_dimension_numbers<[1], [0], [0], [1], [0, 0, 1, 1], [], []>} : vector<2x128xbf16>, vector<128x128xbf16>, vector<2x128xf32> -> vector<2x128xf32>
    %359 = arith.addf %356, %358 : vector<2x128xf32>
    %360 = arith.negf %359 : vector<2x128xf32>
    %361 = math.exp %360 : vector<2x128xf32>
    %cst_165 = arith.constant 1.000000e+00 : f32
    %362 = vector.broadcast %cst_165 : f32 to vector<2x128xf32>
    %363 = arith.addf %362, %361 : vector<2x128xf32>
    %364 = arith.divf %362, %363 : vector<2x128xf32>
    %c64_i32_166 = arith.constant 64 : i32
    %365 = tpu.dynamic_rotate %364 by %c64_i32_166 dim 1 : vector<2x128xf32>, i32 -> vector<2x128xf32>
    %366 = arith.addf %358, %194 : vector<2x128xf32>
    %367 = arith.mulf %365, %366 : vector<2x128xf32>
    %368 = arith.addf %356, %367 : vector<2x128xf32>
    %369 = math.tanh %368 : vector<2x128xf32>
    %c32_i32_167 = arith.constant 32 : i32
    %370 = tpu.dynamic_rotate %364 by %c32_i32_167 dim 1 : vector<2x128xf32>, i32 -> vector<2x128xf32>
    %c64_i32_168 = arith.constant 64 : i32
    %371 = tpu.dynamic_rotate %369 by %c64_i32_168 dim 1 : vector<2x128xf32>, i32 -> vector<2x128xf32>
    %cst_169 = arith.constant 1.000000e+00 : f32
    %372 = vector.broadcast %cst_169 : f32 to vector<2x128xf32>
    %373 = arith.subf %372, %370 : vector<2x128xf32>
    %374 = arith.mulf %373, %371 : vector<2x128xf32>
    %375 = arith.mulf %370, %354 : vector<2x128xf32>
    %376 = arith.addf %374, %375 : vector<2x128xf32>
    %c14_170 = arith.constant 14 : index
    %c0_171 = arith.constant 0 : index
    %377 = vector.load %arg6[%c14_170, %c0_171] : memref<16x128xf32, #tpu.memory_space<vmem>>, vector<2x128xf32>
    tpu.vector_store %arg6[%c14_170, %c0_171], %376 {strides = array<i32>} : memref<16x128xf32, #tpu.memory_space<vmem>>, vector<2x128xf32>,
    %c512 = arith.constant 512 : index
    %c0_172 = arith.constant 0 : index
    %378 = vector.load %arg1[%c512, %c0_172] : memref<768x128xbf16, #tpu.memory_space<vmem>>, vector<128x128xbf16>
    %c640 = arith.constant 640 : index
    %c0_173 = arith.constant 0 : index
    %379 = vector.load %arg1[%c640, %c0_173] : memref<768x128xbf16, #tpu.memory_space<vmem>>, vector<128x128xbf16>
    %c4_174 = arith.constant 4 : index
    %c0_175 = arith.constant 0 : index
    %380 = vector.load %arg2[%c4_174, %c0_175] : memref<6x128xf32, #tpu.memory_space<vmem>>, vector<1x128xf32>
    %c5 = arith.constant 5 : index
    %c0_176 = arith.constant 0 : index
    %381 = vector.load %arg2[%c5, %c0_176] : memref<6x128xf32, #tpu.memory_space<vmem>>, vector<1x128xf32>
    %382 = vector.shape_cast %381 : vector<1x128xf32> to vector<1x128xf32>
    %383 = vector.broadcast %382 : vector<1x128xf32> to vector<2x128xf32>
    %c0_177 = arith.constant 0 : index
    %c0_178 = arith.constant 0 : index
    %384 = vector.load %arg6[%c0_177, %c0_178] : memref<16x128xf32, #tpu.memory_space<vmem>>, vector<16x128xf32>
    %385 = arith.truncf %384 : vector<16x128xf32> to vector<16x128xbf16>
    %cst_179 = arith.constant dense<0.000000e+00> : vector<16x128xf32>
    %386 = tpu.matmul %385, %378, %cst_179 {dimension_numbers = #tpu.dot_dimension_numbers<[1], [0], [0], [1], [0, 0, 1, 1], [], []>} : vector<16x128xbf16>, vector<128x128xbf16>, vector<16x128xf32> -> vector<16x128xf32>
    %387 = vector.broadcast %380 : vector<1x128xf32> to vector<16x128xf32>
    %388 = arith.addf %386, %387 : vector<16x128xf32>
    %c0_180 = arith.constant 0 : index
    %c0_181 = arith.constant 0 : index
    %389 = vector.load %arg7[%c0_180, %c0_181] : memref<16x128xf32, #tpu.memory_space<vmem>>, vector<16x128xf32>
    tpu.vector_store %arg7[%c0_180, %c0_181], %388 {strides = array<i32>} : memref<16x128xf32, #tpu.memory_space<vmem>>, vector<16x128xf32>,
    %cst_182 = arith.constant 0.000000e+00 : f32
    %390 = vector.broadcast %cst_182 : f32 to vector<2x128xf32>
    %c0_183 = arith.constant 0 : index
    %c0_184 = arith.constant 0 : index
    %391 = vector.load %arg7[%c0_183, %c0_184] : memref<16x128xf32, #tpu.memory_space<vmem>>, vector<2x128xf32>
    %392 = arith.truncf %390 : vector<2x128xf32> to vector<2x128xbf16>
    %cst_185 = arith.constant dense<0.000000e+00> : vector<2x128xf32>
    %393 = tpu.matmul %392, %379, %cst_185 {dimension_numbers = #tpu.dot_dimension_numbers<[1], [0], [0], [1], [0, 0, 1, 1], [], []>} : vector<2x128xbf16>, vector<128x128xbf16>, vector<2x128xf32> -> vector<2x128xf32>
    %394 = arith.addf %391, %393 : vector<2x128xf32>
    %395 = arith.negf %394 : vector<2x128xf32>
    %396 = math.exp %395 : vector<2x128xf32>
    %cst_186 = arith.constant 1.000000e+00 : f32
    %397 = vector.broadcast %cst_186 : f32 to vector<2x128xf32>
    %398 = arith.addf %397, %396 : vector<2x128xf32>
    %399 = arith.divf %397, %398 : vector<2x128xf32>
    %c64_i32_187 = arith.constant 64 : i32
    %400 = tpu.dynamic_rotate %399 by %c64_i32_187 dim 1 : vector<2x128xf32>, i32 -> vector<2x128xf32>
    %401 = arith.addf %393, %383 : vector<2x128xf32>
    %402 = arith.mulf %400, %401 : vector<2x128xf32>
    %403 = arith.addf %391, %402 : vector<2x128xf32>
    %404 = math.tanh %403 : vector<2x128xf32>
    %c32_i32_188 = arith.constant 32 : i32
    %405 = tpu.dynamic_rotate %399 by %c32_i32_188 dim 1 : vector<2x128xf32>, i32 -> vector<2x128xf32>
    %c64_i32_189 = arith.constant 64 : i32
    %406 = tpu.dynamic_rotate %404 by %c64_i32_189 dim 1 : vector<2x128xf32>, i32 -> vector<2x128xf32>
    %cst_190 = arith.constant 1.000000e+00 : f32
    %407 = vector.broadcast %cst_190 : f32 to vector<2x128xf32>
    %408 = arith.subf %407, %405 : vector<2x128xf32>
    %409 = arith.mulf %408, %406 : vector<2x128xf32>
    %410 = arith.mulf %405, %390 : vector<2x128xf32>
    %411 = arith.addf %409, %410 : vector<2x128xf32>
    %c0_191 = arith.constant 0 : index
    %c0_192 = arith.constant 0 : index
    %412 = vector.load %arg5[%c0_191, %c0_192] : memref<16x128xf32, #tpu.memory_space<vmem>>, vector<2x128xf32>
    tpu.vector_store %arg5[%c0_191, %c0_192], %411 {strides = array<i32>} : memref<16x128xf32, #tpu.memory_space<vmem>>, vector<2x128xf32>,
    %c2_193 = arith.constant 2 : index
    %c0_194 = arith.constant 0 : index
    %413 = vector.load %arg7[%c2_193, %c0_194] : memref<16x128xf32, #tpu.memory_space<vmem>>, vector<2x128xf32>
    %414 = arith.truncf %411 : vector<2x128xf32> to vector<2x128xbf16>
    %cst_195 = arith.constant dense<0.000000e+00> : vector<2x128xf32>
    %415 = tpu.matmul %414, %379, %cst_195 {dimension_numbers = #tpu.dot_dimension_numbers<[1], [0], [0], [1], [0, 0, 1, 1], [], []>} : vector<2x128xbf16>, vector<128x128xbf16>, vector<2x128xf32> -> vector<2x128xf32>
    %416 = arith.addf %413, %415 : vector<2x128xf32>
    %417 = arith.negf %416 : vector<2x128xf32>
    %418 = math.exp %417 : vector<2x128xf32>
    %cst_196 = arith.constant 1.000000e+00 : f32
    %419 = vector.broadcast %cst_196 : f32 to vector<2x128xf32>
    %420 = arith.addf %419, %418 : vector<2x128xf32>
    %421 = arith.divf %419, %420 : vector<2x128xf32>
    %c64_i32_197 = arith.constant 64 : i32
    %422 = tpu.dynamic_rotate %421 by %c64_i32_197 dim 1 : vector<2x128xf32>, i32 -> vector<2x128xf32>
    %423 = arith.addf %415, %383 : vector<2x128xf32>
    %424 = arith.mulf %422, %423 : vector<2x128xf32>
    %425 = arith.addf %413, %424 : vector<2x128xf32>
    %426 = math.tanh %425 : vector<2x128xf32>
    %c32_i32_198 = arith.constant 32 : i32
    %427 = tpu.dynamic_rotate %421 by %c32_i32_198 dim 1 : vector<2x128xf32>, i32 -> vector<2x128xf32>
    %c64_i32_199 = arith.constant 64 : i32
    %428 = tpu.dynamic_rotate %426 by %c64_i32_199 dim 1 : vector<2x128xf32>, i32 -> vector<2x128xf32>
    %cst_200 = arith.constant 1.000000e+00 : f32
    %429 = vector.broadcast %cst_200 : f32 to vector<2x128xf32>
    %430 = arith.subf %429, %427 : vector<2x128xf32>
    %431 = arith.mulf %430, %428 : vector<2x128xf32>
    %432 = arith.mulf %427, %411 : vector<2x128xf32>
    %433 = arith.addf %431, %432 : vector<2x128xf32>
    %c2_201 = arith.constant 2 : index
    %c0_202 = arith.constant 0 : index
    %434 = vector.load %arg5[%c2_201, %c0_202] : memref<16x128xf32, #tpu.memory_space<vmem>>, vector<2x128xf32>
    tpu.vector_store %arg5[%c2_201, %c0_202], %433 {strides = array<i32>} : memref<16x128xf32, #tpu.memory_space<vmem>>, vector<2x128xf32>,
    %c4_203 = arith.constant 4 : index
    %c0_204 = arith.constant 0 : index
    %435 = vector.load %arg7[%c4_203, %c0_204] : memref<16x128xf32, #tpu.memory_space<vmem>>, vector<2x128xf32>
    %436 = arith.truncf %433 : vector<2x128xf32> to vector<2x128xbf16>
    %cst_205 = arith.constant dense<0.000000e+00> : vector<2x128xf32>
    %437 = tpu.matmul %436, %379, %cst_205 {dimension_numbers = #tpu.dot_dimension_numbers<[1], [0], [0], [1], [0, 0, 1, 1], [], []>} : vector<2x128xbf16>, vector<128x128xbf16>, vector<2x128xf32> -> vector<2x128xf32>
    %438 = arith.addf %435, %437 : vector<2x128xf32>
    %439 = arith.negf %438 : vector<2x128xf32>
    %440 = math.exp %439 : vector<2x128xf32>
    %cst_206 = arith.constant 1.000000e+00 : f32
    %441 = vector.broadcast %cst_206 : f32 to vector<2x128xf32>
    %442 = arith.addf %441, %440 : vector<2x128xf32>
    %443 = arith.divf %441, %442 : vector<2x128xf32>
    %c64_i32_207 = arith.constant 64 : i32
    %444 = tpu.dynamic_rotate %443 by %c64_i32_207 dim 1 : vector<2x128xf32>, i32 -> vector<2x128xf32>
    %445 = arith.addf %437, %383 : vector<2x128xf32>
    %446 = arith.mulf %444, %445 : vector<2x128xf32>
    %447 = arith.addf %435, %446 : vector<2x128xf32>
    %448 = math.tanh %447 : vector<2x128xf32>
    %c32_i32_208 = arith.constant 32 : i32
    %449 = tpu.dynamic_rotate %443 by %c32_i32_208 dim 1 : vector<2x128xf32>, i32 -> vector<2x128xf32>
    %c64_i32_209 = arith.constant 64 : i32
    %450 = tpu.dynamic_rotate %448 by %c64_i32_209 dim 1 : vector<2x128xf32>, i32 -> vector<2x128xf32>
    %cst_210 = arith.constant 1.000000e+00 : f32
    %451 = vector.broadcast %cst_210 : f32 to vector<2x128xf32>
    %452 = arith.subf %451, %449 : vector<2x128xf32>
    %453 = arith.mulf %452, %450 : vector<2x128xf32>
    %454 = arith.mulf %449, %433 : vector<2x128xf32>
    %455 = arith.addf %453, %454 : vector<2x128xf32>
    %c4_211 = arith.constant 4 : index
    %c0_212 = arith.constant 0 : index
    %456 = vector.load %arg5[%c4_211, %c0_212] : memref<16x128xf32, #tpu.memory_space<vmem>>, vector<2x128xf32>
    tpu.vector_store %arg5[%c4_211, %c0_212], %455 {strides = array<i32>} : memref<16x128xf32, #tpu.memory_space<vmem>>, vector<2x128xf32>,
    %c6_213 = arith.constant 6 : index
    %c0_214 = arith.constant 0 : index
    %457 = vector.load %arg7[%c6_213, %c0_214] : memref<16x128xf32, #tpu.memory_space<vmem>>, vector<2x128xf32>
    %458 = arith.truncf %455 : vector<2x128xf32> to vector<2x128xbf16>
    %cst_215 = arith.constant dense<0.000000e+00> : vector<2x128xf32>
    %459 = tpu.matmul %458, %379, %cst_215 {dimension_numbers = #tpu.dot_dimension_numbers<[1], [0], [0], [1], [0, 0, 1, 1], [], []>} : vector<2x128xbf16>, vector<128x128xbf16>, vector<2x128xf32> -> vector<2x128xf32>
    %460 = arith.addf %457, %459 : vector<2x128xf32>
    %461 = arith.negf %460 : vector<2x128xf32>
    %462 = math.exp %461 : vector<2x128xf32>
    %cst_216 = arith.constant 1.000000e+00 : f32
    %463 = vector.broadcast %cst_216 : f32 to vector<2x128xf32>
    %464 = arith.addf %463, %462 : vector<2x128xf32>
    %465 = arith.divf %463, %464 : vector<2x128xf32>
    %c64_i32_217 = arith.constant 64 : i32
    %466 = tpu.dynamic_rotate %465 by %c64_i32_217 dim 1 : vector<2x128xf32>, i32 -> vector<2x128xf32>
    %467 = arith.addf %459, %383 : vector<2x128xf32>
    %468 = arith.mulf %466, %467 : vector<2x128xf32>
    %469 = arith.addf %457, %468 : vector<2x128xf32>
    %470 = math.tanh %469 : vector<2x128xf32>
    %c32_i32_218 = arith.constant 32 : i32
    %471 = tpu.dynamic_rotate %465 by %c32_i32_218 dim 1 : vector<2x128xf32>, i32 -> vector<2x128xf32>
    %c64_i32_219 = arith.constant 64 : i32
    %472 = tpu.dynamic_rotate %470 by %c64_i32_219 dim 1 : vector<2x128xf32>, i32 -> vector<2x128xf32>
    %cst_220 = arith.constant 1.000000e+00 : f32
    %473 = vector.broadcast %cst_220 : f32 to vector<2x128xf32>
    %474 = arith.subf %473, %471 : vector<2x128xf32>
    %475 = arith.mulf %474, %472 : vector<2x128xf32>
    %476 = arith.mulf %471, %455 : vector<2x128xf32>
    %477 = arith.addf %475, %476 : vector<2x128xf32>
    %c6_221 = arith.constant 6 : index
    %c0_222 = arith.constant 0 : index
    %478 = vector.load %arg5[%c6_221, %c0_222] : memref<16x128xf32, #tpu.memory_space<vmem>>, vector<2x128xf32>
    tpu.vector_store %arg5[%c6_221, %c0_222], %477 {strides = array<i32>} : memref<16x128xf32, #tpu.memory_space<vmem>>, vector<2x128xf32>,
    %c8_223 = arith.constant 8 : index
    %c0_224 = arith.constant 0 : index
    %479 = vector.load %arg7[%c8_223, %c0_224] : memref<16x128xf32, #tpu.memory_space<vmem>>, vector<2x128xf32>
    %480 = arith.truncf %477 : vector<2x128xf32> to vector<2x128xbf16>
    %cst_225 = arith.constant dense<0.000000e+00> : vector<2x128xf32>
    %481 = tpu.matmul %480, %379, %cst_225 {dimension_numbers = #tpu.dot_dimension_numbers<[1], [0], [0], [1], [0, 0, 1, 1], [], []>} : vector<2x128xbf16>, vector<128x128xbf16>, vector<2x128xf32> -> vector<2x128xf32>
    %482 = arith.addf %479, %481 : vector<2x128xf32>
    %483 = arith.negf %482 : vector<2x128xf32>
    %484 = math.exp %483 : vector<2x128xf32>
    %cst_226 = arith.constant 1.000000e+00 : f32
    %485 = vector.broadcast %cst_226 : f32 to vector<2x128xf32>
    %486 = arith.addf %485, %484 : vector<2x128xf32>
    %487 = arith.divf %485, %486 : vector<2x128xf32>
    %c64_i32_227 = arith.constant 64 : i32
    %488 = tpu.dynamic_rotate %487 by %c64_i32_227 dim 1 : vector<2x128xf32>, i32 -> vector<2x128xf32>
    %489 = arith.addf %481, %383 : vector<2x128xf32>
    %490 = arith.mulf %488, %489 : vector<2x128xf32>
    %491 = arith.addf %479, %490 : vector<2x128xf32>
    %492 = math.tanh %491 : vector<2x128xf32>
    %c32_i32_228 = arith.constant 32 : i32
    %493 = tpu.dynamic_rotate %487 by %c32_i32_228 dim 1 : vector<2x128xf32>, i32 -> vector<2x128xf32>
    %c64_i32_229 = arith.constant 64 : i32
    %494 = tpu.dynamic_rotate %492 by %c64_i32_229 dim 1 : vector<2x128xf32>, i32 -> vector<2x128xf32>
    %cst_230 = arith.constant 1.000000e+00 : f32
    %495 = vector.broadcast %cst_230 : f32 to vector<2x128xf32>
    %496 = arith.subf %495, %493 : vector<2x128xf32>
    %497 = arith.mulf %496, %494 : vector<2x128xf32>
    %498 = arith.mulf %493, %477 : vector<2x128xf32>
    %499 = arith.addf %497, %498 : vector<2x128xf32>
    %c8_231 = arith.constant 8 : index
    %c0_232 = arith.constant 0 : index
    %500 = vector.load %arg5[%c8_231, %c0_232] : memref<16x128xf32, #tpu.memory_space<vmem>>, vector<2x128xf32>
    tpu.vector_store %arg5[%c8_231, %c0_232], %499 {strides = array<i32>} : memref<16x128xf32, #tpu.memory_space<vmem>>, vector<2x128xf32>,
    %c10_233 = arith.constant 10 : index
    %c0_234 = arith.constant 0 : index
    %501 = vector.load %arg7[%c10_233, %c0_234] : memref<16x128xf32, #tpu.memory_space<vmem>>, vector<2x128xf32>
    %502 = arith.truncf %499 : vector<2x128xf32> to vector<2x128xbf16>
    %cst_235 = arith.constant dense<0.000000e+00> : vector<2x128xf32>
    %503 = tpu.matmul %502, %379, %cst_235 {dimension_numbers = #tpu.dot_dimension_numbers<[1], [0], [0], [1], [0, 0, 1, 1], [], []>} : vector<2x128xbf16>, vector<128x128xbf16>, vector<2x128xf32> -> vector<2x128xf32>
    %504 = arith.addf %501, %503 : vector<2x128xf32>
    %505 = arith.negf %504 : vector<2x128xf32>
    %506 = math.exp %505 : vector<2x128xf32>
    %cst_236 = arith.constant 1.000000e+00 : f32
    %507 = vector.broadcast %cst_236 : f32 to vector<2x128xf32>
    %508 = arith.addf %507, %506 : vector<2x128xf32>
    %509 = arith.divf %507, %508 : vector<2x128xf32>
    %c64_i32_237 = arith.constant 64 : i32
    %510 = tpu.dynamic_rotate %509 by %c64_i32_237 dim 1 : vector<2x128xf32>, i32 -> vector<2x128xf32>
    %511 = arith.addf %503, %383 : vector<2x128xf32>
    %512 = arith.mulf %510, %511 : vector<2x128xf32>
    %513 = arith.addf %501, %512 : vector<2x128xf32>
    %514 = math.tanh %513 : vector<2x128xf32>
    %c32_i32_238 = arith.constant 32 : i32
    %515 = tpu.dynamic_rotate %509 by %c32_i32_238 dim 1 : vector<2x128xf32>, i32 -> vector<2x128xf32>
    %c64_i32_239 = arith.constant 64 : i32
    %516 = tpu.dynamic_rotate %514 by %c64_i32_239 dim 1 : vector<2x128xf32>, i32 -> vector<2x128xf32>
    %cst_240 = arith.constant 1.000000e+00 : f32
    %517 = vector.broadcast %cst_240 : f32 to vector<2x128xf32>
    %518 = arith.subf %517, %515 : vector<2x128xf32>
    %519 = arith.mulf %518, %516 : vector<2x128xf32>
    %520 = arith.mulf %515, %499 : vector<2x128xf32>
    %521 = arith.addf %519, %520 : vector<2x128xf32>
    %c10_241 = arith.constant 10 : index
    %c0_242 = arith.constant 0 : index
    %522 = vector.load %arg5[%c10_241, %c0_242] : memref<16x128xf32, #tpu.memory_space<vmem>>, vector<2x128xf32>
    tpu.vector_store %arg5[%c10_241, %c0_242], %521 {strides = array<i32>} : memref<16x128xf32, #tpu.memory_space<vmem>>, vector<2x128xf32>,
    %c12_243 = arith.constant 12 : index
    %c0_244 = arith.constant 0 : index
    %523 = vector.load %arg7[%c12_243, %c0_244] : memref<16x128xf32, #tpu.memory_space<vmem>>, vector<2x128xf32>
    %524 = arith.truncf %521 : vector<2x128xf32> to vector<2x128xbf16>
    %cst_245 = arith.constant dense<0.000000e+00> : vector<2x128xf32>
    %525 = tpu.matmul %524, %379, %cst_245 {dimension_numbers = #tpu.dot_dimension_numbers<[1], [0], [0], [1], [0, 0, 1, 1], [], []>} : vector<2x128xbf16>, vector<128x128xbf16>, vector<2x128xf32> -> vector<2x128xf32>
    %526 = arith.addf %523, %525 : vector<2x128xf32>
    %527 = arith.negf %526 : vector<2x128xf32>
    %528 = math.exp %527 : vector<2x128xf32>
    %cst_246 = arith.constant 1.000000e+00 : f32
    %529 = vector.broadcast %cst_246 : f32 to vector<2x128xf32>
    %530 = arith.addf %529, %528 : vector<2x128xf32>
    %531 = arith.divf %529, %530 : vector<2x128xf32>
    %c64_i32_247 = arith.constant 64 : i32
    %532 = tpu.dynamic_rotate %531 by %c64_i32_247 dim 1 : vector<2x128xf32>, i32 -> vector<2x128xf32>
    %533 = arith.addf %525, %383 : vector<2x128xf32>
    %534 = arith.mulf %532, %533 : vector<2x128xf32>
    %535 = arith.addf %523, %534 : vector<2x128xf32>
    %536 = math.tanh %535 : vector<2x128xf32>
    %c32_i32_248 = arith.constant 32 : i32
    %537 = tpu.dynamic_rotate %531 by %c32_i32_248 dim 1 : vector<2x128xf32>, i32 -> vector<2x128xf32>
    %c64_i32_249 = arith.constant 64 : i32
    %538 = tpu.dynamic_rotate %536 by %c64_i32_249 dim 1 : vector<2x128xf32>, i32 -> vector<2x128xf32>
    %cst_250 = arith.constant 1.000000e+00 : f32
    %539 = vector.broadcast %cst_250 : f32 to vector<2x128xf32>
    %540 = arith.subf %539, %537 : vector<2x128xf32>
    %541 = arith.mulf %540, %538 : vector<2x128xf32>
    %542 = arith.mulf %537, %521 : vector<2x128xf32>
    %543 = arith.addf %541, %542 : vector<2x128xf32>
    %c12_251 = arith.constant 12 : index
    %c0_252 = arith.constant 0 : index
    %544 = vector.load %arg5[%c12_251, %c0_252] : memref<16x128xf32, #tpu.memory_space<vmem>>, vector<2x128xf32>
    tpu.vector_store %arg5[%c12_251, %c0_252], %543 {strides = array<i32>} : memref<16x128xf32, #tpu.memory_space<vmem>>, vector<2x128xf32>,
    %c14_253 = arith.constant 14 : index
    %c0_254 = arith.constant 0 : index
    %545 = vector.load %arg7[%c14_253, %c0_254] : memref<16x128xf32, #tpu.memory_space<vmem>>, vector<2x128xf32>
    %546 = arith.truncf %543 : vector<2x128xf32> to vector<2x128xbf16>
    %cst_255 = arith.constant dense<0.000000e+00> : vector<2x128xf32>
    %547 = tpu.matmul %546, %379, %cst_255 {dimension_numbers = #tpu.dot_dimension_numbers<[1], [0], [0], [1], [0, 0, 1, 1], [], []>} : vector<2x128xbf16>, vector<128x128xbf16>, vector<2x128xf32> -> vector<2x128xf32>
    %548 = arith.addf %545, %547 : vector<2x128xf32>
    %549 = arith.negf %548 : vector<2x128xf32>
    %550 = math.exp %549 : vector<2x128xf32>
    %cst_256 = arith.constant 1.000000e+00 : f32
    %551 = vector.broadcast %cst_256 : f32 to vector<2x128xf32>
    %552 = arith.addf %551, %550 : vector<2x128xf32>
    %553 = arith.divf %551, %552 : vector<2x128xf32>
    %c64_i32_257 = arith.constant 64 : i32
    %554 = tpu.dynamic_rotate %553 by %c64_i32_257 dim 1 : vector<2x128xf32>, i32 -> vector<2x128xf32>
    %555 = arith.addf %547, %383 : vector<2x128xf32>
    %556 = arith.mulf %554, %555 : vector<2x128xf32>
    %557 = arith.addf %545, %556 : vector<2x128xf32>
    %558 = math.tanh %557 : vector<2x128xf32>
    %c32_i32_258 = arith.constant 32 : i32
    %559 = tpu.dynamic_rotate %553 by %c32_i32_258 dim 1 : vector<2x128xf32>, i32 -> vector<2x128xf32>
    %c64_i32_259 = arith.constant 64 : i32
    %560 = tpu.dynamic_rotate %558 by %c64_i32_259 dim 1 : vector<2x128xf32>, i32 -> vector<2x128xf32>
    %cst_260 = arith.constant 1.000000e+00 : f32
    %561 = vector.broadcast %cst_260 : f32 to vector<2x128xf32>
    %562 = arith.subf %561, %559 : vector<2x128xf32>
    %563 = arith.mulf %562, %560 : vector<2x128xf32>
    %564 = arith.mulf %559, %543 : vector<2x128xf32>
    %565 = arith.addf %563, %564 : vector<2x128xf32>
    %c14_261 = arith.constant 14 : index
    %c0_262 = arith.constant 0 : index
    %566 = vector.load %arg5[%c14_261, %c0_262] : memref<16x128xf32, #tpu.memory_space<vmem>>, vector<2x128xf32>
    tpu.vector_store %arg5[%c14_261, %c0_262], %565 {strides = array<i32>} : memref<16x128xf32, #tpu.memory_space<vmem>>, vector<2x128xf32>,
    %c0_263 = arith.constant 0 : index
    %c0_264 = arith.constant 0 : index
    %567 = vector.load %arg3[%c0_263, %c0_264] : memref<416x128xf32, #tpu.memory_space<vmem>>, vector<1x128xf32>
    %c0_265 = arith.constant 0 : index
    %c0_266 = arith.constant 0 : index
    %568 = vector.load %arg5[%c0_265, %c0_266] : memref<16x128xf32, #tpu.memory_space<vmem>>, vector<2x128xf32>
    %c2_267 = arith.constant 2 : index
    %c0_268 = arith.constant 0 : index
    %569 = vector.load %arg5[%c2_267, %c0_268] : memref<16x128xf32, #tpu.memory_space<vmem>>, vector<2x128xf32>
    %c4_269 = arith.constant 4 : index
    %c0_270 = arith.constant 0 : index
    %570 = vector.load %arg5[%c4_269, %c0_270] : memref<16x128xf32, #tpu.memory_space<vmem>>, vector<2x128xf32>
    %c6_271 = arith.constant 6 : index
    %c0_272 = arith.constant 0 : index
    %571 = vector.load %arg5[%c6_271, %c0_272] : memref<16x128xf32, #tpu.memory_space<vmem>>, vector<2x128xf32>
    %c8_273 = arith.constant 8 : index
    %c0_274 = arith.constant 0 : index
    %572 = vector.load %arg5[%c8_273, %c0_274] : memref<16x128xf32, #tpu.memory_space<vmem>>, vector<2x128xf32>
    %c10_275 = arith.constant 10 : index
    %c0_276 = arith.constant 0 : index
    %573 = vector.load %arg5[%c10_275, %c0_276] : memref<16x128xf32, #tpu.memory_space<vmem>>, vector<2x128xf32>
    %c12_277 = arith.constant 12 : index
    %c0_278 = arith.constant 0 : index
    %574 = vector.load %arg5[%c12_277, %c0_278] : memref<16x128xf32, #tpu.memory_space<vmem>>, vector<2x128xf32>
    %c14_279 = arith.constant 14 : index
    %c0_280 = arith.constant 0 : index
    %575 = vector.load %arg5[%c14_279, %c0_280] : memref<16x128xf32, #tpu.memory_space<vmem>>, vector<2x128xf32>
    %576 = vector.broadcast %567 : vector<1x128xf32> to vector<2x128xf32>
    %577 = arith.mulf %568, %576 : vector<2x128xf32>
    %cst_281 = arith.constant dense<0.000000e+00> : vector<2xf32>
    %578 = vector.multi_reduction <add>, %577, %cst_281 [1] : vector<2x128xf32> to vector<2xf32>
    %579 = vector.shape_cast %578 : vector<2xf32> to vector<2x1xf32>
    %580 = vector.broadcast %567 : vector<1x128xf32> to vector<2x128xf32>
    %581 = arith.mulf %569, %580 : vector<2x128xf32>
    %cst_282 = arith.constant dense<0.000000e+00> : vector<2xf32>
    %582 = vector.multi_reduction <add>, %581, %cst_282 [1] : vector<2x128xf32> to vector<2xf32>
    %583 = vector.shape_cast %582 : vector<2xf32> to vector<2x1xf32>
    %584 = vector.broadcast %567 : vector<1x128xf32> to vector<2x128xf32>
    %585 = arith.mulf %570, %584 : vector<2x128xf32>
    %cst_283 = arith.constant dense<0.000000e+00> : vector<2xf32>
    %586 = vector.multi_reduction <add>, %585, %cst_283 [1] : vector<2x128xf32> to vector<2xf32>
    %587 = vector.shape_cast %586 : vector<2xf32> to vector<2x1xf32>
    %588 = vector.broadcast %567 : vector<1x128xf32> to vector<2x128xf32>
    %589 = arith.mulf %571, %588 : vector<2x128xf32>
    %cst_284 = arith.constant dense<0.000000e+00> : vector<2xf32>
    %590 = vector.multi_reduction <add>, %589, %cst_284 [1] : vector<2x128xf32> to vector<2xf32>
    %591 = vector.shape_cast %590 : vector<2xf32> to vector<2x1xf32>
    %592 = vector.broadcast %567 : vector<1x128xf32> to vector<2x128xf32>
    %593 = arith.mulf %572, %592 : vector<2x128xf32>
    %cst_285 = arith.constant dense<0.000000e+00> : vector<2xf32>
    %594 = vector.multi_reduction <add>, %593, %cst_285 [1] : vector<2x128xf32> to vector<2xf32>
    %595 = vector.shape_cast %594 : vector<2xf32> to vector<2x1xf32>
    %596 = vector.broadcast %567 : vector<1x128xf32> to vector<2x128xf32>
    %597 = arith.mulf %573, %596 : vector<2x128xf32>
    %cst_286 = arith.constant dense<0.000000e+00> : vector<2xf32>
    %598 = vector.multi_reduction <add>, %597, %cst_286 [1] : vector<2x128xf32> to vector<2xf32>
    %599 = vector.shape_cast %598 : vector<2xf32> to vector<2x1xf32>
    %600 = vector.broadcast %567 : vector<1x128xf32> to vector<2x128xf32>
    %601 = arith.mulf %574, %600 : vector<2x128xf32>
    %cst_287 = arith.constant dense<0.000000e+00> : vector<2xf32>
    %602 = vector.multi_reduction <add>, %601, %cst_287 [1] : vector<2x128xf32> to vector<2xf32>
    %603 = vector.shape_cast %602 : vector<2xf32> to vector<2x1xf32>
    %604 = vector.broadcast %567 : vector<1x128xf32> to vector<2x128xf32>
    %605 = arith.mulf %575, %604 : vector<2x128xf32>
    %cst_288 = arith.constant dense<0.000000e+00> : vector<2xf32>
    %606 = vector.multi_reduction <add>, %605, %cst_288 [1] : vector<2x128xf32> to vector<2xf32>
    %607 = vector.shape_cast %606 : vector<2xf32> to vector<2x1xf32>
    %608 = arith.maximumf %579, %583 : vector<2x1xf32>
    %609 = arith.maximumf %608, %587 : vector<2x1xf32>
    %610 = arith.maximumf %609, %591 : vector<2x1xf32>
    %611 = arith.maximumf %610, %595 : vector<2x1xf32>
    %612 = arith.maximumf %611, %599 : vector<2x1xf32>
    %613 = arith.maximumf %612, %603 : vector<2x1xf32>
    %614 = arith.maximumf %613, %607 : vector<2x1xf32>
    %615 = arith.subf %579, %614 : vector<2x1xf32>
    %616 = math.exp %615 : vector<2x1xf32>
    %617 = arith.subf %583, %614 : vector<2x1xf32>
    %618 = math.exp %617 : vector<2x1xf32>
    %619 = arith.subf %587, %614 : vector<2x1xf32>
    %620 = math.exp %619 : vector<2x1xf32>
    %621 = arith.subf %591, %614 : vector<2x1xf32>
    %622 = math.exp %621 : vector<2x1xf32>
    %623 = arith.subf %595, %614 : vector<2x1xf32>
    %624 = math.exp %623 : vector<2x1xf32>
    %625 = arith.subf %599, %614 : vector<2x1xf32>
    %626 = math.exp %625 : vector<2x1xf32>
    %627 = arith.subf %603, %614 : vector<2x1xf32>
    %628 = math.exp %627 : vector<2x1xf32>
    %629 = arith.subf %607, %614 : vector<2x1xf32>
    %630 = math.exp %629 : vector<2x1xf32>
    %631 = arith.addf %616, %618 : vector<2x1xf32>
    %632 = arith.addf %631, %620 : vector<2x1xf32>
    %633 = arith.addf %632, %622 : vector<2x1xf32>
    %634 = arith.addf %633, %624 : vector<2x1xf32>
    %635 = arith.addf %634, %626 : vector<2x1xf32>
    %636 = arith.addf %635, %628 : vector<2x1xf32>
    %637 = arith.addf %636, %630 : vector<2x1xf32>
    %638 = tpu.reciprocal %637 {approx = true} : vector<2x1xf32> -> vector<2x1xf32>
    %639 = arith.mulf %616, %638 : vector<2x1xf32>
    %640 = vector.broadcast %639 : vector<2x1xf32> to vector<2x128xf32>
    %641 = arith.mulf %568, %640 : vector<2x128xf32>
    %642 = arith.mulf %618, %638 : vector<2x1xf32>
    %643 = vector.broadcast %642 : vector<2x1xf32> to vector<2x128xf32>
    %644 = arith.mulf %569, %643 : vector<2x128xf32>
    %645 = arith.addf %641, %644 : vector<2x128xf32>
    %646 = arith.mulf %620, %638 : vector<2x1xf32>
    %647 = vector.broadcast %646 : vector<2x1xf32> to vector<2x128xf32>
    %648 = arith.mulf %570, %647 : vector<2x128xf32>
    %649 = arith.addf %645, %648 : vector<2x128xf32>
    %650 = arith.mulf %622, %638 : vector<2x1xf32>
    %651 = vector.broadcast %650 : vector<2x1xf32> to vector<2x128xf32>
    %652 = arith.mulf %571, %651 : vector<2x128xf32>
    %653 = arith.addf %649, %652 : vector<2x128xf32>
    %654 = arith.mulf %624, %638 : vector<2x1xf32>
    %655 = vector.broadcast %654 : vector<2x1xf32> to vector<2x128xf32>
    %656 = arith.mulf %572, %655 : vector<2x128xf32>
    %657 = arith.addf %653, %656 : vector<2x128xf32>
    %658 = arith.mulf %626, %638 : vector<2x1xf32>
    %659 = vector.broadcast %658 : vector<2x1xf32> to vector<2x128xf32>
    %660 = arith.mulf %573, %659 : vector<2x128xf32>
    %661 = arith.addf %657, %660 : vector<2x128xf32>
    %662 = arith.mulf %628, %638 : vector<2x1xf32>
    %663 = vector.broadcast %662 : vector<2x1xf32> to vector<2x128xf32>
    %664 = arith.mulf %574, %663 : vector<2x128xf32>
    %665 = arith.addf %661, %664 : vector<2x128xf32>
    %666 = arith.mulf %630, %638 : vector<2x1xf32>
    %667 = vector.broadcast %666 : vector<2x1xf32> to vector<2x128xf32>
    %668 = arith.mulf %575, %667 : vector<2x128xf32>
    %669 = arith.addf %665, %668 : vector<2x128xf32>
    %c8_289 = arith.constant 8 : index
    %c0_290 = arith.constant 0 : index
    %670 = vector.load %arg3[%c8_289, %c0_290] : memref<416x128xf32, #tpu.memory_space<vmem>>, vector<128x128xf32>
    %c136 = arith.constant 136 : index
    %c0_291 = arith.constant 0 : index
    %671 = vector.load %arg3[%c136, %c0_291] : memref<416x128xf32, #tpu.memory_space<vmem>>, vector<1x128xf32>
    %c144 = arith.constant 144 : index
    %c0_292 = arith.constant 0 : index
    %672 = vector.load %arg3[%c144, %c0_292] : memref<416x128xf32, #tpu.memory_space<vmem>>, vector<128x128xf32>
    %c272 = arith.constant 272 : index
    %c0_293 = arith.constant 0 : index
    %673 = vector.load %arg3[%c272, %c0_293] : memref<416x128xf32, #tpu.memory_space<vmem>>, vector<1x128xf32>
    %c280 = arith.constant 280 : index
    %c0_294 = arith.constant 0 : index
    %674 = vector.load %arg3[%c280, %c0_294] : memref<416x128xf32, #tpu.memory_space<vmem>>, vector<128x128xf32>
    %c408 = arith.constant 408 : index
    %c0_295 = arith.constant 0 : index
    %675 = vector.load %arg3[%c408, %c0_295] : memref<416x128xf32, #tpu.memory_space<vmem>>, vector<1x128xf32>
    %cst_296 = arith.constant dense<0.000000e+00> : vector<2x128xf32>
    %676 = tpu.matmul %669, %670, %cst_296 {dimension_numbers = #tpu.dot_dimension_numbers<[1], [0], [0], [1], [0, 0, 1, 1], [], []>} : vector<2x128xf32>, vector<128x128xf32>, vector<2x128xf32> -> vector<2x128xf32>
    %677 = vector.broadcast %671 : vector<1x128xf32> to vector<2x128xf32>
    %678 = arith.addf %676, %677 : vector<2x128xf32>
    %cst_297 = arith.constant 0.000000e+00 : f32
    %679 = vector.broadcast %cst_297 : f32 to vector<2x128xf32>
    %680 = arith.maximumf %678, %679 : vector<2x128xf32>
    %cst_298 = arith.constant dense<0.000000e+00> : vector<2x128xf32>
    %681 = tpu.matmul %680, %672, %cst_298 {dimension_numbers = #tpu.dot_dimension_numbers<[1], [0], [0], [1], [0, 0, 1, 1], [], []>} : vector<2x128xf32>, vector<128x128xf32>, vector<2x128xf32> -> vector<2x128xf32>
    %682 = vector.broadcast %673 : vector<1x128xf32> to vector<2x128xf32>
    %683 = arith.addf %681, %682 : vector<2x128xf32>
    %cst_299 = arith.constant 0.000000e+00 : f32
    %684 = vector.broadcast %cst_299 : f32 to vector<2x128xf32>
    %685 = arith.maximumf %683, %684 : vector<2x128xf32>
    %cst_300 = arith.constant dense<0.000000e+00> : vector<2x128xf32>
    %686 = tpu.matmul %685, %674, %cst_300 {dimension_numbers = #tpu.dot_dimension_numbers<[1], [0], [0], [1], [0, 0, 1, 1], [], []>} : vector<2x128xf32>, vector<128x128xf32>, vector<2x128xf32> -> vector<2x128xf32>
    %687 = vector.broadcast %675 : vector<1x128xf32> to vector<2x128xf32>
    %688 = arith.addf %686, %687 : vector<2x128xf32>
    %c0_301 = arith.constant 0 : index
    %c0_302 = arith.constant 0 : index
    %689 = vector.load %arg4[%c0_301, %c0_302] : memref<2x128xf32, #tpu.memory_space<vmem>>, vector<2x128xf32>
    tpu.vector_store %arg4[%c0_301, %c0_302], %688 {strides = array<i32>} : memref<2x128xf32, #tpu.memory_space<vmem>>, vector<2x128xf32>,
    return
  }
}

</mosaic_0001>

<llo_original>
// kernel: enhanced_gru_forward.1
$region0: #{enhanced_gru_forward.1}
  #allocation0 [shape = 'u32[]', space=smem, size = 0x4, offset = 0x4, fixed_abs, tag = 'smem constant byte address 0x4 - core index']
  #allocation1 [shape = 'u32[144,128]{1,0:T(1,128)}', space=vmem, size = 0x12000, scoped, tag = 'internal scratch']
  #allocation2 [shape = 'f32[16,128]{1,0:T(8,128)}', space=vmem, size = 0x2000, scoped, tag = 'scratch operand']
  #allocation3 [shape = 'f32[16,128]{1,0:T(8,128)}', space=vmem, size = 0x2000, scoped, tag = 'scratch operand']
  #allocation4 [shape = 'f32[16,128]{1,0:T(8,128)}', space=vmem, size = 0x2000, scoped, tag = 'scratch operand']
  %s0 = inlined_call_operand.vmem [shape: f32[16,128], index: 0, kind: input, shape index: {}]
  %s1 = inlined_call_operand.hbm [shape: bf16[768,128], index: 1, kind: input, shape index: {}]
  %s2 = inlined_call_operand.vmem [shape: f32[6,128], index: 2, kind: input, shape index: {}]
  %s3 = inlined_call_operand.hbm [shape: f32[416,128], index: 3, kind: input, shape index: {}]
  %s4 = inlined_call_operand.hbm [shape: f32[2,128], index: 4, kind: output, shape index: {}]
  %s5 = sld [smem:[#allocation0]]
  $region34: #{enhanced_gru_forward.1} parent=0
    _
  %s7 = ssub.s32 1, %s5
  %s8 = scalar_select 0, %s7, %s5
  $region1: #{enhanced_gru_forward.1} parent=0
    #allocation5 [shape = 'u8[196608]{0}', space=vmem, size = 0x30000, scoped, tag = 'input window, operand 1, single buffered']
    #allocation6 [shape = 's32[1]{0}', space=sflag, size = 0x4, scoped, tag = 'scoped memory for enhanced_gru_forward.1']
    #allocation7 [shape = 's32[1]{0}', space=sflag, size = 0x4, scoped, tag = 'scoped memory for enhanced_gru_forward.1']
    #allocation8 [shape = 'u8[212992]{0}', space=vmem, size = 0x34000, scoped, tag = 'input window, operand 3, single buffered']
    #allocation9 [shape = 's32[1]{0}', space=sflag, size = 0x4, scoped, tag = 'scoped memory for enhanced_gru_forward.1']
    #allocation10 [shape = 'u8[1024]{0}', space=vmem, size = 0x400, scoped, tag = 'output window, operand 0, single buffered']
    %9 = vsyncpa [#allocation6], 0
    %10 = vsyncpa [#allocation9], 0
    %11 = vsyncpa [#allocation7], 0
    // Predicated region
    $region2: #{enhanced_gru_forward.1} parent=1 // pred_check
      _
    $region3: #{enhanced_gru_forward.1} parent=1 // pred_check_branch
      %13 = sbr.rel (0) target = $region5
    $region4: #{enhanced_gru_forward.1} parent=1 // pred_region
      _
    $region5: #{enhanced_gru_forward.1} parent=1 // pred_fallthru
      _
    // Predicated region
    $region6: #{enhanced_gru_forward.1} parent=1 // pred_check
      _
    $region7: #{enhanced_gru_forward.1} parent=1 // pred_check_branch
      %15 = sbr.rel (0) target = $region9
    $region8: #{enhanced_gru_forward.1} parent=1 // pred_region
      %s17 = ssub.s32 6144, 6144
      %18 = vsyncadd [#allocation6], %s17
      %s19 = sshll.u32 [#allocation5], 4
      %s20 = int_to_ptr.vmem [resolvable:$true] %s19
      %25 = dma.hbm_to_vmem [thread:$0]  %s1, 6144, %s20, [#allocation6], 64, 64, 4
    $region9: #{enhanced_gru_forward.1} parent=1 // pred_fallthru
      _
    // Predicated region
    $region10: #{enhanced_gru_forward.1} parent=1 // pred_check
      _
    $region11: #{enhanced_gru_forward.1} parent=1 // pred_check_branch
      %27 = sbr.rel (0) target = $region13
    $region12: #{enhanced_gru_forward.1} parent=1 // pred_region
      _
    $region13: #{enhanced_gru_forward.1} parent=1 // pred_fallthru
      _
    // Predicated region
    $region14: #{enhanced_gru_forward.1} parent=1 // pred_check
      _
    $region15: #{enhanced_gru_forward.1} parent=1 // pred_check_branch
      %29 = sbr.rel (0) target = $region17
    $region16: #{enhanced_gru_forward.1} parent=1 // pred_region
      %s31 = ssub.s32 6656, 6656
      %32 = vsyncadd [#allocation9], %s31
      %s33 = sshll.u32 [#allocation8], 4
      %s34 = int_to_ptr.vmem [resolvable:$true] %s33
      %39 = dma.hbm_to_vmem [thread:$0]  %s3, 6656, %s34, [#allocation9], 128, 128, 8
    $region17: #{enhanced_gru_forward.1} parent=1 // pred_fallthru
      _
    // Predicated region
    $region18: #{enhanced_gru_forward.1} parent=1 // pred_check
      _
    $region19: #{enhanced_gru_forward.1} parent=1 // pred_check_branch
      %41 = sbr.rel (0) target = $region21
    $region20: #{enhanced_gru_forward.1} parent=1 // pred_region
      %42 = dma.done [#allocation6], 6144
    $region21: #{enhanced_gru_forward.1} parent=1 // pred_fallthru
      _
    // Predicated region
    $region22: #{enhanced_gru_forward.1} parent=1 // pred_check
      _
    $region23: #{enhanced_gru_forward.1} parent=1 // pred_check_branch
      %44 = sbr.rel (0) target = $region25
    $region24: #{enhanced_gru_forward.1} parent=1 // pred_region
      %45 = dma.done [#allocation9], 6656
    $region25: #{enhanced_gru_forward.1} parent=1 // pred_fallthru
      _
    %v47 = vld [vmem:[#allocation5] sm:$0xf]
    %v48 = vld [vmem:[#allocation5 + $0x4] sm:$0xf]
    %v49 = vld [vmem:[#allocation5 + $0x8] sm:$0xf]
    %v50 = vld [vmem:[#allocation5 + $0xc] sm:$0xf]
    %v51 = vld [vmem:[#allocation5 + $0x10] sm:$0xf]
    %v52 = vld [vmem:[#allocation5 + $0x14] sm:$0xf]
    %v53 = vld [vmem:[#allocation5 + $0x18] sm:$0xf]
    %v54 = vld [vmem:[#allocation5 + $0x1c] sm:$0xf]
    %v55 = vld [vmem:[#allocation5 + $0x20] sm:$0xf]
    %v56 = vld [vmem:[#allocation5 + $0x24] sm:$0xf]
    %v57 = vld [vmem:[#allocation5 + $0x28] sm:$0xf]
    %v58 = vld [vmem:[#allocation5 + $0x2c] sm:$0xf]
    %v59 = vld [vmem:[#allocation5 + $0x30] sm:$0xf]
    %v60 = vld [vmem:[#allocation5 + $0x34] sm:$0xf]
    %v61 = vld [vmem:[#allocation5 + $0x38] sm:$0xf]
    %v62 = vld [vmem:[#allocation5 + $0x3c] sm:$0xf]
    %v63 = vld [vmem:[#allocation5 + $0x40] sm:$0xf]
    %v64 = vld [vmem:[#allocation5 + $0x44] sm:$0xf]
    %v65 = vld [vmem:[#allocation5 + $0x48] sm:$0xf]
    %v66 = vld [vmem:[#allocation5 + $0x4c] sm:$0xf]
    %v67 = vld [vmem:[#allocation5 + $0x50] sm:$0xf]
    %v68 = vld [vmem:[#allocation5 + $0x54] sm:$0xf]
    %v69 = vld [vmem:[#allocation5 + $0x58] sm:$0xf]
    %v70 = vld [vmem:[#allocation5 + $0x5c] sm:$0xf]
    %v71 = vld [vmem:[#allocation5 + $0x60] sm:$0xf]
    %v72 = vld [vmem:[#allocation5 + $0x64] sm:$0xf]
    %v73 = vld [vmem:[#allocation5 + $0x68] sm:$0xf]
    %v74 = vld [vmem:[#allocation5 + $0x6c] sm:$0xf]
    %v75 = vld [vmem:[#allocation5 + $0x70] sm:$0xf]
    %v76 = vld [vmem:[#allocation5 + $0x74] sm:$0xf]
    %v77 = vld [vmem:[#allocation5 + $0x78] sm:$0xf]
    %v78 = vld [vmem:[#allocation5 + $0x7c] sm:$0xf]
    %v79 = vld [vmem:[%s2] sm:$0x1]
    %v80 = vld [vmem:[%s2 + $0x1] sm:$0x1]
    %v81 = vlaneseq
    %v82 = vshrl.u32 %v81, 7
    %v83 = vsub.s32 0, %v82
    %v84 = vrot.slane %v80, %v83
    %v85 = vld [vmem:[%s0] sm:$0xff]
    %v86 = vld [vmem:[%s0 + $0x8] sm:$0xff]
    %v87 = vpack.c.bf16 %v86, %v85
    %v88 = vlaneseq
    %v89 = vshrl.u32 %v88, 7
    %v90 = vsub.s32 0, %v89
    %v91 = vrot.slane %v79, %v90
    %v108 = vunpack.c.l.b16 %v47
    %v109 = vunpack.c.l.b16 %v48
    %v110 = vunpack.c.l.b16 %v49
    %v111 = vunpack.c.l.b16 %v50
    %v112 = vunpack.c.l.b16 %v51
    %v113 = vunpack.c.l.b16 %v52
    %v114 = vunpack.c.l.b16 %v53
    %v115 = vunpack.c.l.b16 %v54
    %v116 = vunpack.c.l.b16 %v55
    %v117 = vunpack.c.l.b16 %v56
    %v118 = vunpack.c.l.b16 %v57
    %v119 = vunpack.c.l.b16 %v58
    %v120 = vunpack.c.l.b16 %v59
    %v121 = vunpack.c.l.b16 %v60
    %v122 = vunpack.c.l.b16 %v61
    %v123 = vunpack.c.l.b16 %v62
    %v124 = vpack.c.b16 %v109, %v108
    %v125 = vpack.c.b16 %v111, %v110
    %v126 = vpack.c.b16 %v113, %v112
    %v127 = vpack.c.b16 %v115, %v114
    %v128 = vpack.c.b16 %v117, %v116
    %v129 = vpack.c.b16 %v119, %v118
    %v130 = vpack.c.b16 %v121, %v120
    %v131 = vpack.c.b16 %v123, %v122
    %140 = vmatprep.subr.bf16.mxu0 0
    %141 = vmatpush1.bf16.msra.mxu0 %v124
    %142 = vmatprep.subr.bf16.mxu0 0
    %143 = vmatpush1.bf16.msra.mxu0 %v125
    %144 = vmatprep.subr.bf16.mxu0 0
    %145 = vmatpush1.bf16.msra.mxu0 %v126
    %146 = vmatprep.subr.bf16.mxu0 0
    %147 = vmatpush1.bf16.msra.mxu0 %v127
    %148 = vmatprep.subr.bf16.mxu0 0
    %149 = vmatpush1.bf16.msra.mxu0 %v128
    %150 = vmatprep.subr.bf16.mxu0 0
    %151 = vmatpush1.bf16.msra.mxu0 %v129
    %152 = vmatprep.subr.bf16.mxu0 0
    %153 = vmatpush1.bf16.msra.mxu0 %v130
    %154 = vmatprep.subr.bf16.mxu0 0
    %155 = vmatpush1.bf16.msra.mxu0 %v131
    %156 = vmatprep.subr.bf16.mxu0 0
    %157 = vmatpush1.bf16.msra.mxu0 0
    %158 = vmatprep.subr.bf16.mxu0 0
    %159 = vmatpush1.bf16.msra.mxu0 0
    %160 = vmatprep.subr.bf16.mxu0 0
    %161 = vmatpush1.bf16.msra.mxu0 0
    %162 = vmatprep.subr.bf16.mxu0 0
    %163 = vmatpush1.bf16.msra.mxu0 0
    %164 = vmatprep.subr.bf16.mxu0 0
    %165 = vmatpush1.bf16.msra.mxu0 0
    %166 = vmatprep.subr.bf16.mxu0 0
    %167 = vmatpush1.bf16.msra.mxu0 0
    %168 = vmatprep.subr.bf16.mxu0 0
    %169 = vmatpush1.bf16.msra.mxu0 0
    %170 = vmatprep.subr.bf16.mxu0 0
    %171 = vmatpush1.bf16.msra.mxu0 0
    %172 = vmatprep.mubr.bf16.mxu0 0
    %173 = vmatmul.mubr.bf16.gmra.mrb[0].mxu0 %v87
    %v174 = vpop.f32.mrb[0].mxu0
    %v175 = vadd.f32 %v91, %v174
    %v176 = vpop.f32.mrb[0].mxu0
    %v177 = vpop.f32.mrb[0].mxu0
    %v178 = vadd.f32 %v91, %v177
    %v179 = vpop.f32.mrb[0].mxu0
    %180 = vdwg.mxu0
    %181 = vst [vmem:[#allocation4] sm:$0xff] %v175
    %182 = vst [vmem:[#allocation4 + $0x8] sm:$0xff] %v178
    %v183 = vld [vmem:[#allocation4] sm:$0x3]
    %v200 = vunpack.c.l.b16 %v63
    %v201 = vunpack.c.l.b16 %v64
    %v202 = vunpack.c.l.b16 %v65
    %v203 = vunpack.c.l.b16 %v66
    %v204 = vunpack.c.l.b16 %v67
    %v205 = vunpack.c.l.b16 %v68
    %v206 = vunpack.c.l.b16 %v69
    %v207 = vunpack.c.l.b16 %v70
    %v208 = vunpack.c.l.b16 %v71
    %v209 = vunpack.c.l.b16 %v72
    %v210 = vunpack.c.l.b16 %v73
    %v211 = vunpack.c.l.b16 %v74
    %v212 = vunpack.c.l.b16 %v75
    %v213 = vunpack.c.l.b16 %v76
    %v214 = vunpack.c.l.b16 %v77
    %v215 = vunpack.c.l.b16 %v78
    %v216 = vpack.c.b16 %v201, %v200
    %v217 = vpack.c.b16 %v203, %v202
    %v218 = vpack.c.b16 %v205, %v204
    %v219 = vpack.c.b16 %v207, %v206
    %v220 = vpack.c.b16 %v209, %v208
    %v221 = vpack.c.b16 %v211, %v210
    %v222 = vpack.c.b16 %v213, %v212
    %v223 = vpack.c.b16 %v215, %v214
    %232 = vmatprep.subr.bf16.mxu0 0
    %233 = vmatpush1.bf16.msra.mxu0 %v216
    %234 = vmatprep.subr.bf16.mxu0 0
    %235 = vmatpush1.bf16.msra.mxu0 %v217
    %236 = vmatprep.subr.bf16.mxu0 0
    %237 = vmatpush1.bf16.msra.mxu0 %v218
    %238 = vmatprep.subr.bf16.mxu0 0
    %239 = vmatpush1.bf16.msra.mxu0 %v219
    %240 = vmatprep.subr.bf16.mxu0 0
    %241 = vmatpush1.bf16.msra.mxu0 %v220
    %242 = vmatprep.subr.bf16.mxu0 0
    %243 = vmatpush1.bf16.msra.mxu0 %v221
    %244 = vmatprep.subr.bf16.mxu0 0
    %245 = vmatpush1.bf16.msra.mxu0 %v222
    %246 = vmatprep.subr.bf16.mxu0 0
    %247 = vmatpush1.bf16.msra.mxu0 %v223
    %248 = vmatprep.subr.bf16.mxu0 0
    %249 = vmatpush1.bf16.msra.mxu0 0
    %250 = vmatprep.subr.bf16.mxu0 0
    %251 = vmatpush1.bf16.msra.mxu0 0
    %252 = vmatprep.subr.bf16.mxu0 0
    %253 = vmatpush1.bf16.msra.mxu0 0
    %254 = vmatprep.subr.bf16.mxu0 0
    %255 = vmatpush1.bf16.msra.mxu0 0
    %256 = vmatprep.subr.bf16.mxu0 0
    %257 = vmatpush1.bf16.msra.mxu0 0
    %258 = vmatprep.subr.bf16.mxu0 0
    %259 = vmatpush1.bf16.msra.mxu0 0
    %260 = vmatprep.subr.bf16.mxu0 0
    %261 = vmatpush1.bf16.msra.mxu0 0
    %262 = vmatprep.subr.bf16.mxu0 0
    %263 = vmatpush1.bf16.msra.mxu0 0
    %264 = vmatprep.mubr.bf16.mxu0 0
    %265 = vmatmul.mubr.bf16.gmra.mrb[0].mxu0 0
    %v266 = vpop.f32.mrb[0].mxu0
    %v267 = vadd.f32 0.0, %v266
    %v268 = vpop.f32.mrb[0].mxu0
    %v269 = vpop.f32.mrb[0].mxu0
    %v270 = vpop.f32.mrb[0].mxu0
    %271 = vdwg.mxu0
    %v272 = vadd.f32 %v183, %v267
    %v273 = vxor.u32 %v272, 2147483648
    %v274 = vmul.f32 %v273, 1.442695
    %v275 = vpow.pop %v274
    %v276 = vadd.f32 %v275, 1.0
    %v277 = vrcp.pop %v276
    %v278 = vmul.f32 1.0, %v277
    %279 = vrot.lane.b32.xlu0 %v278, 64
    %v280 = vpop.permute.xlu0 %279
    %v281 = vadd.f32 %v267, %v84
    %v282 = vmul.f32 %v280, %v281
    %v283 = vadd.f32 %v183, %v282
    %v284 = vtanh.pop %v283
    %285 = vrot.lane.b32.xlu0 %v278, 32
    %v286 = vpop.permute.xlu0 %285
    %287 = vrot.lane.b32.xlu0 %v284, 64
    %v288 = vpop.permute.xlu0 %287
    %v289 = vsub.f32 1.0, %v286
    %v290 = vmul.f32 %v289, %v288
    %v291 = vmul.f32 %v286, 0.0
    %v292 = vadd.f32 %v290, %v291
    %293 = vst [vmem:[#allocation2] sm:$0x3] %v292
    %v294 = vld [vmem:[#allocation4 + $0x2] sm:$0x3]
    %v295 = vpack.c.bf16 %v292, %v292
    %296 = vmatprep.subr.bf16.mxu0 0
    %297 = vmatpush1.bf16.msra.mxu0 %v216
    %298 = vmatprep.subr.bf16.mxu0 0
    %299 = vmatpush1.bf16.msra.mxu0 %v217
    %300 = vmatprep.subr.bf16.mxu0 0
    %301 = vmatpush1.bf16.msra.mxu0 %v218
    %302 = vmatprep.subr.bf16.mxu0 0
    %303 = vmatpush1.bf16.msra.mxu0 %v219
    %304 = vmatprep.subr.bf16.mxu0 0
    %305 = vmatpush1.bf16.msra.mxu0 %v220
    %306 = vmatprep.subr.bf16.mxu0 0
    %307 = vmatpush1.bf16.msra.mxu0 %v221
    %308 = vmatprep.subr.bf16.mxu0 0
    %309 = vmatpush1.bf16.msra.mxu0 %v222
    %310 = vmatprep.subr.bf16.mxu0 0
    %311 = vmatpush1.bf16.msra.mxu0 %v223
    %312 = vmatprep.subr.bf16.mxu0 0
    %313 = vmatpush1.bf16.msra.mxu0 0
    %314 = vmatprep.subr.bf16.mxu0 0
    %315 = vmatpush1.bf16.msra.mxu0 0
    %316 = vmatprep.subr.bf16.mxu0 0
    %317 = vmatpush1.bf16.msra.mxu0 0
    %318 = vmatprep.subr.bf16.mxu0 0
    %319 = vmatpush1.bf16.msra.mxu0 0
    %320 = vmatprep.subr.bf16.mxu0 0
    %321 = vmatpush1.bf16.msra.mxu0 0
    %322 = vmatprep.subr.bf16.mxu0 0
    %323 = vmatpush1.bf16.msra.mxu0 0
    %324 = vmatprep.subr.bf16.mxu0 0
    %325 = vmatpush1.bf16.msra.mxu0 0
    %326 = vmatprep.subr.bf16.mxu0 0
    %327 = vmatpush1.bf16.msra.mxu0 0
    %328 = vmatprep.mubr.bf16.mxu0 0
    %329 = vmatmul.mubr.bf16.gmra.mrb[0].mxu0 %v295
    %v330 = vpop.f32.mrb[0].mxu0
    %v331 = vadd.f32 0.0, %v330
    %v332 = vpop.f32.mrb[0].mxu0
    %v333 = vpop.f32.mrb[0].mxu0
    %v334 = vpop.f32.mrb[0].mxu0
    %335 = vdwg.mxu0
    %v336 = vadd.f32 %v294, %v331
    %v337 = vxor.u32 %v336, 2147483648
    %v338 = vmul.f32 %v337, 1.442695
    %v339 = vpow.pop %v338
    %v340 = vadd.f32 %v339, 1.0
    %v341 = vrcp.pop %v340
    %v342 = vmul.f32 1.0, %v341
    %343 = vrot.lane.b32.xlu0 %v342, 64
    %v344 = vpop.permute.xlu0 %343
    %v345 = vadd.f32 %v331, %v84
    %v346 = vmul.f32 %v344, %v345
    %v347 = vadd.f32 %v294, %v346
    %v348 = vtanh.pop %v347
    %349 = vrot.lane.b32.xlu0 %v342, 32
    %v350 = vpop.permute.xlu0 %349
    %351 = vrot.lane.b32.xlu0 %v348, 64
    %v352 = vpop.permute.xlu0 %351
    %v353 = vsub.f32 1.0, %v350
    %v354 = vmul.f32 %v353, %v352
    %v355 = vmul.f32 %v350, %v292
    %v356 = vadd.f32 %v354, %v355
    %357 = vst [vmem:[#allocation2 + $0x2] sm:$0x3] %v356
    %v358 = vld [vmem:[#allocation4 + $0x4] sm:$0x3]
    %v359 = vpack.c.bf16 %v356, %v356
    %360 = vmatprep.subr.bf16.mxu0 0
    %361 = vmatpush1.bf16.msra.mxu0 %v216
    %362 = vmatprep.subr.bf16.mxu0 0
    %363 = vmatpush1.bf16.msra.mxu0 %v217
    %364 = vmatprep.subr.bf16.mxu0 0
    %365 = vmatpush1.bf16.msra.mxu0 %v218
    %366 = vmatprep.subr.bf16.mxu0 0
    %367 = vmatpush1.bf16.msra.mxu0 %v219
    %368 = vmatprep.subr.bf16.mxu0 0
    %369 = vmatpush1.bf16.msra.mxu0 %v220
    %370 = vmatprep.subr.bf16.mxu0 0
    %371 = vmatpush1.bf16.msra.mxu0 %v221
    %372 = vmatprep.subr.bf16.mxu0 0
    %373 = vmatpush1.bf16.msra.mxu0 %v222
    %374 = vmatprep.subr.bf16.mxu0 0
    %375 = vmatpush1.bf16.msra.mxu0 %v223
    %376 = vmatprep.subr.bf16.mxu0 0
    %377 = vmatpush1.bf16.msra.mxu0 0
    %378 = vmatprep.subr.bf16.mxu0 0
    %379 = vmatpush1.bf16.msra.mxu0 0
    %380 = vmatprep.subr.bf16.mxu0 0
    %381 = vmatpush1.bf16.msra.mxu0 0
    %382 = vmatprep.subr.bf16.mxu0 0
    %383 = vmatpush1.bf16.msra.mxu0 0
    %384 = vmatprep.subr.bf16.mxu0 0
    %385 = vmatpush1.bf16.msra.mxu0 0
    %386 = vmatprep.subr.bf16.mxu0 0
    %387 = vmatpush1.bf16.msra.mxu0 0
    %388 = vmatprep.subr.bf16.mxu0 0
    %389 = vmatpush1.bf16.msra.mxu0 0
    %390 = vmatprep.subr.bf16.mxu0 0
    %391 = vmatpush1.bf16.msra.mxu0 0
    %392 = vmatprep.mubr.bf16.mxu0 0
    %393 = vmatmul.mubr.bf16.gmra.mrb[0].mxu0 %v359
    %v394 = vpop.f32.mrb[0].mxu0
    %v395 = vadd.f32 0.0, %v394
    %v396 = vpop.f32.mrb[0].mxu0
    %v397 = vpop.f32.mrb[0].mxu0
    %v398 = vpop.f32.mrb[0].mxu0
    %399 = vdwg.mxu0
    %v400 = vadd.f32 %v358, %v395
    %v401 = vxor.u32 %v400, 2147483648
    %v402 = vmul.f32 %v401, 1.442695
    %v403 = vpow.pop %v402
    %v404 = vadd.f32 %v403, 1.0
    %v405 = vrcp.pop %v404
    %v406 = vmul.f32 1.0, %v405
    %407 = vrot.lane.b32.xlu0 %v406, 64
    %v408 = vpop.permute.xlu0 %407
    %v409 = vadd.f32 %v395, %v84
    %v410 = vmul.f32 %v408, %v409
    %v411 = vadd.f32 %v358, %v410
    %v412 = vtanh.pop %v411
    %413 = vrot.lane.b32.xlu0 %v406, 32
    %v414 = vpop.permute.xlu0 %413
    %415 = vrot.lane.b32.xlu0 %v412, 64
    %v416 = vpop.permute.xlu0 %415
    %v417 = vsub.f32 1.0, %v414
    %v418 = vmul.f32 %v417, %v416
    %v419 = vmul.f32 %v414, %v356
    %v420 = vadd.f32 %v418, %v419
    %421 = vst [vmem:[#allocation2 + $0x4] sm:$0x3] %v420
    %v422 = vld [vmem:[#allocation4 + $0x6] sm:$0x3]
    %v423 = vpack.c.bf16 %v420, %v420
    %424 = vmatprep.subr.bf16.mxu0 0
    %425 = vmatpush1.bf16.msra.mxu0 %v216
    %426 = vmatprep.subr.bf16.mxu0 0
    %427 = vmatpush1.bf16.msra.mxu0 %v217
    %428 = vmatprep.subr.bf16.mxu0 0
    %429 = vmatpush1.bf16.msra.mxu0 %v218
    %430 = vmatprep.subr.bf16.mxu0 0
    %431 = vmatpush1.bf16.msra.mxu0 %v219
    %432 = vmatprep.subr.bf16.mxu0 0
    %433 = vmatpush1.bf16.msra.mxu0 %v220
    %434 = vmatprep.subr.bf16.mxu0 0
    %435 = vmatpush1.bf16.msra.mxu0 %v221
    %436 = vmatprep.subr.bf16.mxu0 0
    %437 = vmatpush1.bf16.msra.mxu0 %v222
    %438 = vmatprep.subr.bf16.mxu0 0
    %439 = vmatpush1.bf16.msra.mxu0 %v223
    %440 = vmatprep.subr.bf16.mxu0 0
    %441 = vmatpush1.bf16.msra.mxu0 0
    %442 = vmatprep.subr.bf16.mxu0 0
    %443 = vmatpush1.bf16.msra.mxu0 0
    %444 = vmatprep.subr.bf16.mxu0 0
    %445 = vmatpush1.bf16.msra.mxu0 0
    %446 = vmatprep.subr.bf16.mxu0 0
    %447 = vmatpush1.bf16.msra.mxu0 0
    %448 = vmatprep.subr.bf16.mxu0 0
    %449 = vmatpush1.bf16.msra.mxu0 0
    %450 = vmatprep.subr.bf16.mxu0 0
    %451 = vmatpush1.bf16.msra.mxu0 0
    %452 = vmatprep.subr.bf16.mxu0 0
    %453 = vmatpush1.bf16.msra.mxu0 0
    %454 = vmatprep.subr.bf16.mxu0 0
    %455 = vmatpush1.bf16.msra.mxu0 0
    %456 = vmatprep.mubr.bf16.mxu0 0
    %457 = vmatmul.mubr.bf16.gmra.mrb[0].mxu0 %v423
    %v458 = vpop.f32.mrb[0].mxu0
    %v459 = vadd.f32 0.0, %v458
    %v460 = vpop.f32.mrb[0].mxu0
    %v461 = vpop.f32.mrb[0].mxu0
    %v462 = vpop.f32.mrb[0].mxu0
    %463 = vdwg.mxu0
    %v464 = vadd.f32 %v422, %v459
    %v465 = vxor.u32 %v464, 2147483648
    %v466 = vmul.f32 %v465, 1.442695
    %v467 = vpow.pop %v466
    %v468 = vadd.f32 %v467, 1.0
    %v469 = vrcp.pop %v468
    %v470 = vmul.f32 1.0, %v469
    %471 = vrot.lane.b32.xlu0 %v470, 64
    %v472 = vpop.permute.xlu0 %471
    %v473 = vadd.f32 %v459, %v84
    %v474 = vmul.f32 %v472, %v473
    %v475 = vadd.f32 %v422, %v474
    %v476 = vtanh.pop %v475
    %477 = vrot.lane.b32.xlu0 %v470, 32
    %v478 = vpop.permute.xlu0 %477
    %479 = vrot.lane.b32.xlu0 %v476, 64
    %v480 = vpop.permute.xlu0 %479
    %v481 = vsub.f32 1.0, %v478
    %v482 = vmul.f32 %v481, %v480
    %v483 = vmul.f32 %v478, %v420
    %v484 = vadd.f32 %v482, %v483
    %485 = vst [vmem:[#allocation2 + $0x6] sm:$0x3] %v484
    %v486 = vld [vmem:[#allocation4 + $0x8] sm:$0x3]
    %v487 = vpack.c.bf16 %v484, %v484
    %488 = vmatprep.subr.bf16.mxu0 0
    %489 = vmatpush1.bf16.msra.mxu0 %v216
    %490 = vmatprep.subr.bf16.mxu0 0
    %491 = vmatpush1.bf16.msra.mxu0 %v217
    %492 = vmatprep.subr.bf16.mxu0 0
    %493 = vmatpush1.bf16.msra.mxu0 %v218
    %494 = vmatprep.subr.bf16.mxu0 0
    %495 = vmatpush1.bf16.msra.mxu0 %v219
    %496 = vmatprep.subr.bf16.mxu0 0
    %497 = vmatpush1.bf16.msra.mxu0 %v220
    %498 = vmatprep.subr.bf16.mxu0 0
    %499 = vmatpush1.bf16.msra.mxu0 %v221
    %500 = vmatprep.subr.bf16.mxu0 0
    %501 = vmatpush1.bf16.msra.mxu0 %v222
    %502 = vmatprep.subr.bf16.mxu0 0
    %503 = vmatpush1.bf16.msra.mxu0 %v223
    %504 = vmatprep.subr.bf16.mxu0 0
    %505 = vmatpush1.bf16.msra.mxu0 0
    %506 = vmatprep.subr.bf16.mxu0 0
    %507 = vmatpush1.bf16.msra.mxu0 0
    %508 = vmatprep.subr.bf16.mxu0 0
    %509 = vmatpush1.bf16.msra.mxu0 0
    %510 = vmatprep.subr.bf16.mxu0 0
    %511 = vmatpush1.bf16.msra.mxu0 0
    %512 = vmatprep.subr.bf16.mxu0 0
    %513 = vmatpush1.bf16.msra.mxu0 0
    %514 = vmatprep.subr.bf16.mxu0 0
    %515 = vmatpush1.bf16.msra.mxu0 0
    %516 = vmatprep.subr.bf16.mxu0 0
    %517 = vmatpush1.bf16.msra.mxu0 0
    %518 = vmatprep.subr.bf16.mxu0 0
    %519 = vmatpush1.bf16.msra.mxu0 0
    %520 = vmatprep.mubr.bf16.mxu0 0
    %521 = vmatmul.mubr.bf16.gmra.mrb[0].mxu0 %v487
    %v522 = vpop.f32.mrb[0].mxu0
    %v523 = vadd.f32 0.0, %v522
    %v524 = vpop.f32.mrb[0].mxu0
    %v525 = vpop.f32.mrb[0].mxu0
    %v526 = vpop.f32.mrb[0].mxu0
    %527 = vdwg.mxu0
    %v528 = vadd.f32 %v486, %v523
    %v529 = vxor.u32 %v528, 2147483648
    %v530 = vmul.f32 %v529, 1.442695
    %v531 = vpow.pop %v530
    %v532 = vadd.f32 %v531, 1.0
    %v533 = vrcp.pop %v532
    %v534 = vmul.f32 1.0, %v533
    %535 = vrot.lane.b32.xlu0 %v534, 64
    %v536 = vpop.permute.xlu0 %535
    %v537 = vadd.f32 %v523, %v84
    %v538 = vmul.f32 %v536, %v537
    %v539 = vadd.f32 %v486, %v538
    %v540 = vtanh.pop %v539
    %541 = vrot.lane.b32.xlu0 %v534, 32
    %v542 = vpop.permute.xlu0 %541
    %543 = vrot.lane.b32.xlu0 %v540, 64
    %v544 = vpop.permute.xlu0 %543
    %v545 = vsub.f32 1.0, %v542
    %v546 = vmul.f32 %v545, %v544
    %v547 = vmul.f32 %v542, %v484
    %v548 = vadd.f32 %v546, %v547
    %549 = vst [vmem:[#allocation2 + $0x8] sm:$0x3] %v548
    %v550 = vld [vmem:[#allocation4 + $0xa] sm:$0x3]
    %v551 = vpack.c.bf16 %v548, %v548
    %552 = vmatprep.subr.bf16.mxu0 0
    %553 = vmatpush1.bf16.msra.mxu0 %v216
    %554 = vmatprep.subr.bf16.mxu0 0
    %555 = vmatpush1.bf16.msra.mxu0 %v217
    %556 = vmatprep.subr.bf16.mxu0 0
    %557 = vmatpush1.bf16.msra.mxu0 %v218
    %558 = vmatprep.subr.bf16.mxu0 0
    %559 = vmatpush1.bf16.msra.mxu0 %v219
    %560 = vmatprep.subr.bf16.mxu0 0
    %561 = vmatpush1.bf16.msra.mxu0 %v220
    %562 = vmatprep.subr.bf16.mxu0 0
    %563 = vmatpush1.bf16.msra.mxu0 %v221
    %564 = vmatprep.subr.bf16.mxu0 0
    %565 = vmatpush1.bf16.msra.mxu0 %v222
    %566 = vmatprep.subr.bf16.mxu0 0
    %567 = vmatpush1.bf16.msra.mxu0 %v223
    %568 = vmatprep.subr.bf16.mxu0 0
    %569 = vmatpush1.bf16.msra.mxu0 0
    %570 = vmatprep.subr.bf16.mxu0 0
    %571 = vmatpush1.bf16.msra.mxu0 0
    %572 = vmatprep.subr.bf16.mxu0 0
    %573 = vmatpush1.bf16.msra.mxu0 0
    %574 = vmatprep.subr.bf16.mxu0 0
    %575 = vmatpush1.bf16.msra.mxu0 0
    %576 = vmatprep.subr.bf16.mxu0 0
    %577 = vmatpush1.bf16.msra.mxu0 0
    %578 = vmatprep.subr.bf16.mxu0 0
    %579 = vmatpush1.bf16.msra.mxu0 0
    %580 = vmatprep.subr.bf16.mxu0 0
    %581 = vmatpush1.bf16.msra.mxu0 0
    %582 = vmatprep.subr.bf16.mxu0 0
    %583 = vmatpush1.bf16.msra.mxu0 0
    %584 = vmatprep.mubr.bf16.mxu0 0
    %585 = vmatmul.mubr.bf16.gmra.mrb[0].mxu0 %v551
    %v586 = vpop.f32.mrb[0].mxu0
    %v587 = vadd.f32 0.0, %v586
    %v588 = vpop.f32.mrb[0].mxu0
    %v589 = vpop.f32.mrb[0].mxu0
    %v590 = vpop.f32.mrb[0].mxu0
    %591 = vdwg.mxu0
    %v592 = vadd.f32 %v550, %v587
    %v593 = vxor.u32 %v592, 2147483648
    %v594 = vmul.f32 %v593, 1.442695
    %v595 = vpow.pop %v594
    %v596 = vadd.f32 %v595, 1.0
    %v597 = vrcp.pop %v596
    %v598 = vmul.f32 1.0, %v597
    %599 = vrot.lane.b32.xlu0 %v598, 64
    %v600 = vpop.permute.xlu0 %599
    %v601 = vadd.f32 %v587, %v84
    %v602 = vmul.f32 %v600, %v601
    %v603 = vadd.f32 %v550, %v602
    %v604 = vtanh.pop %v603
    %605 = vrot.lane.b32.xlu0 %v598, 32
    %v606 = vpop.permute.xlu0 %605
    %607 = vrot.lane.b32.xlu0 %v604, 64
    %v608 = vpop.permute.xlu0 %607
    %v609 = vsub.f32 1.0, %v606
    %v610 = vmul.f32 %v609, %v608
    %v611 = vmul.f32 %v606, %v548
    %v612 = vadd.f32 %v610, %v611
    %613 = vst [vmem:[#allocation2 + $0xa] sm:$0x3] %v612
    %v614 = vld [vmem:[#allocation4 + $0xc] sm:$0x3]
    %v615 = vpack.c.bf16 %v612, %v612
    %616 = vmatprep.subr.bf16.mxu0 0
    %617 = vmatpush1.bf16.msra.mxu0 %v216
    %618 = vmatprep.subr.bf16.mxu0 0
    %619 = vmatpush1.bf16.msra.mxu0 %v217
    %620 = vmatprep.subr.bf16.mxu0 0
    %621 = vmatpush1.bf16.msra.mxu0 %v218
    %622 = vmatprep.subr.bf16.mxu0 0
    %623 = vmatpush1.bf16.msra.mxu0 %v219
    %624 = vmatprep.subr.bf16.mxu0 0
    %625 = vmatpush1.bf16.msra.mxu0 %v220
    %626 = vmatprep.subr.bf16.mxu0 0
    %627 = vmatpush1.bf16.msra.mxu0 %v221
    %628 = vmatprep.subr.bf16.mxu0 0
    %629 = vmatpush1.bf16.msra.mxu0 %v222
    %630 = vmatprep.subr.bf16.mxu0 0
    %631 = vmatpush1.bf16.msra.mxu0 %v223
    %632 = vmatprep.subr.bf16.mxu0 0
    %633 = vmatpush1.bf16.msra.mxu0 0
    %634 = vmatprep.subr.bf16.mxu0 0
    %635 = vmatpush1.bf16.msra.mxu0 0
    %636 = vmatprep.subr.bf16.mxu0 0
    %637 = vmatpush1.bf16.msra.mxu0 0
    %638 = vmatprep.subr.bf16.mxu0 0
    %639 = vmatpush1.bf16.msra.mxu0 0
    %640 = vmatprep.subr.bf16.mxu0 0
    %641 = vmatpush1.bf16.msra.mxu0 0
    %642 = vmatprep.subr.bf16.mxu0 0
    %643 = vmatpush1.bf16.msra.mxu0 0
    %644 = vmatprep.subr.bf16.mxu0 0
    %645 = vmatpush1.bf16.msra.mxu0 0
    %646 = vmatprep.subr.bf16.mxu0 0
    %647 = vmatpush1.bf16.msra.mxu0 0
    %648 = vmatprep.mubr.bf16.mxu0 0
    %649 = vmatmul.mubr.bf16.gmra.mrb[0].mxu0 %v615
    %v650 = vpop.f32.mrb[0].mxu0
    %v651 = vadd.f32 0.0, %v650
    %v652 = vpop.f32.mrb[0].mxu0
    %v653 = vpop.f32.mrb[0].mxu0
    %v654 = vpop.f32.mrb[0].mxu0
    %655 = vdwg.mxu0
    %v656 = vadd.f32 %v614, %v651
    %v657 = vxor.u32 %v656, 2147483648
    %v658 = vmul.f32 %v657, 1.442695
    %v659 = vpow.pop %v658
    %v660 = vadd.f32 %v659, 1.0
    %v661 = vrcp.pop %v660
    %v662 = vmul.f32 1.0, %v661
    %663 = vrot.lane.b32.xlu0 %v662, 64
    %v664 = vpop.permute.xlu0 %663
    %v665 = vadd.f32 %v651, %v84
    %v666 = vmul.f32 %v664, %v665
    %v667 = vadd.f32 %v614, %v666
    %v668 = vtanh.pop %v667
    %669 = vrot.lane.b32.xlu0 %v662, 32
    %v670 = vpop.permute.xlu0 %669
    %671 = vrot.lane.b32.xlu0 %v668, 64
    %v672 = vpop.permute.xlu0 %671
    %v673 = vsub.f32 1.0, %v670
    %v674 = vmul.f32 %v673, %v672
    %v675 = vmul.f32 %v670, %v612
    %v676 = vadd.f32 %v674, %v675
    %677 = vst [vmem:[#allocation2 + $0xc] sm:$0x3] %v676
    %v678 = vld [vmem:[#allocation4 + $0xe] sm:$0x3]
    %v679 = vpack.c.bf16 %v676, %v676
    %680 = vmatprep.subr.bf16.mxu0 0
    %681 = vmatpush1.bf16.msra.mxu0 %v216
    %682 = vmatprep.subr.bf16.mxu0 0
    %683 = vmatpush1.bf16.msra.mxu0 %v217
    %684 = vmatprep.subr.bf16.mxu0 0
    %685 = vmatpush1.bf16.msra.mxu0 %v218
    %686 = vmatprep.subr.bf16.mxu0 0
    %687 = vmatpush1.bf16.msra.mxu0 %v219
    %688 = vmatprep.subr.bf16.mxu0 0
    %689 = vmatpush1.bf16.msra.mxu0 %v220
    %690 = vmatprep.subr.bf16.mxu0 0
    %691 = vmatpush1.bf16.msra.mxu0 %v221
    %692 = vmatprep.subr.bf16.mxu0 0
    %693 = vmatpush1.bf16.msra.mxu0 %v222
    %694 = vmatprep.subr.bf16.mxu0 0
    %695 = vmatpush1.bf16.msra.mxu0 %v223
    %696 = vmatprep.subr.bf16.mxu0 0
    %697 = vmatpush1.bf16.msra.mxu0 0
    %698 = vmatprep.subr.bf16.mxu0 0
    %699 = vmatpush1.bf16.msra.mxu0 0
    %700 = vmatprep.subr.bf16.mxu0 0
    %701 = vmatpush1.bf16.msra.mxu0 0
    %702 = vmatprep.subr.bf16.mxu0 0
    %703 = vmatpush1.bf16.msra.mxu0 0
    %704 = vmatprep.subr.bf16.mxu0 0
    %705 = vmatpush1.bf16.msra.mxu0 0
    %706 = vmatprep.subr.bf16.mxu0 0
    %707 = vmatpush1.bf16.msra.mxu0 0
    %708 = vmatprep.subr.bf16.mxu0 0
    %709 = vmatpush1.bf16.msra.mxu0 0
    %710 = vmatprep.subr.bf16.mxu0 0
    %711 = vmatpush1.bf16.msra.mxu0 0
    %712 = vmatprep.mubr.bf16.mxu0 0
    %713 = vmatmul.mubr.bf16.gmra.mrb[0].mxu0 %v679
    %v714 = vpop.f32.mrb[0].mxu0
    %v715 = vadd.f32 0.0, %v714
    %v716 = vpop.f32.mrb[0].mxu0
    %v717 = vpop.f32.mrb[0].mxu0
    %v718 = vpop.f32.mrb[0].mxu0
    %719 = vdwg.mxu0
    %v720 = vadd.f32 %v678, %v715
    %v721 = vxor.u32 %v720, 2147483648
    %v722 = vmul.f32 %v721, 1.442695
    %v723 = vpow.pop %v722
    %v724 = vadd.f32 %v723, 1.0
    %v725 = vrcp.pop %v724
    %v726 = vmul.f32 1.0, %v725
    %727 = vrot.lane.b32.xlu0 %v726, 64
    %v728 = vpop.permute.xlu0 %727
    %v729 = vadd.f32 %v715, %v84
    %v730 = vmul.f32 %v728, %v729
    %v731 = vadd.f32 %v678, %v730
    %v732 = vtanh.pop %v731
    %733 = vrot.lane.b32.xlu0 %v726, 32
    %v734 = vpop.permute.xlu0 %733
    %735 = vrot.lane.b32.xlu0 %v732, 64
    %v736 = vpop.permute.xlu0 %735
    %v737 = vsub.f32 1.0, %v734
    %v738 = vmul.f32 %v737, %v736
    %v739 = vmul.f32 %v734, %v676
    %v740 = vadd.f32 %v738, %v739
    %741 = vst [vmem:[#allocation2 + $0xe] sm:$0x3] %v740
    %v742 = vld [vmem:[#allocation5 + $0x80] sm:$0xf]
    %v743 = vld [vmem:[#allocation5 + $0x84] sm:$0xf]
    %v744 = vld [vmem:[#allocation5 + $0x88] sm:$0xf]
    %v745 = vld [vmem:[#allocation5 + $0x8c] sm:$0xf]
    %v746 = vld [vmem:[#allocation5 + $0x90] sm:$0xf]
    %v747 = vld [vmem:[#allocation5 + $0x94] sm:$0xf]
    %v748 = vld [vmem:[#allocation5 + $0x98] sm:$0xf]
    %v749 = vld [vmem:[#allocation5 + $0x9c] sm:$0xf]
    %v750 = vld [vmem:[#allocation5 + $0xa0] sm:$0xf]
    %v751 = vld [vmem:[#allocation5 + $0xa4] sm:$0xf]
    %v752 = vld [vmem:[#allocation5 + $0xa8] sm:$0xf]
    %v753 = vld [vmem:[#allocation5 + $0xac] sm:$0xf]
    %v754 = vld [vmem:[#allocation5 + $0xb0] sm:$0xf]
    %v755 = vld [vmem:[#allocation5 + $0xb4] sm:$0xf]
    %v756 = vld [vmem:[#allocation5 + $0xb8] sm:$0xf]
    %v757 = vld [vmem:[#allocation5 + $0xbc] sm:$0xf]
    %v758 = vld [vmem:[#allocation5 + $0xc0] sm:$0xf]
    %v759 = vld [vmem:[#allocation5 + $0xc4] sm:$0xf]
    %v760 = vld [vmem:[#allocation5 + $0xc8] sm:$0xf]
    %v761 = vld [vmem:[#allocation5 + $0xcc] sm:$0xf]
    %v762 = vld [vmem:[#allocation5 + $0xd0] sm:$0xf]
    %v763 = vld [vmem:[#allocation5 + $0xd4] sm:$0xf]
    %v764 = vld [vmem:[#allocation5 + $0xd8] sm:$0xf]
    %v765 = vld [vmem:[#allocation5 + $0xdc] sm:$0xf]
    %v766 = vld [vmem:[#allocation5 + $0xe0] sm:$0xf]
    %v767 = vld [vmem:[#allocation5 + $0xe4] sm:$0xf]
    %v768 = vld [vmem:[#allocation5 + $0xe8] sm:$0xf]
    %v769 = vld [vmem:[#allocation5 + $0xec] sm:$0xf]
    %v770 = vld [vmem:[#allocation5 + $0xf0] sm:$0xf]
    %v771 = vld [vmem:[#allocation5 + $0xf4] sm:$0xf]
    %v772 = vld [vmem:[#allocation5 + $0xf8] sm:$0xf]
    %v773 = vld [vmem:[#allocation5 + $0xfc] sm:$0xf]
    %v774 = vld [vmem:[%s2 + $0x2] sm:$0x1]
    %v775 = vld [vmem:[%s2 + $0x3] sm:$0x1]
    %v776 = vlaneseq
    %v777 = vshrl.u32 %v776, 7
    %v778 = vsub.s32 0, %v777
    %v779 = vrot.slane %v775, %v778
    %v780 = vld [vmem:[#allocation2] sm:$0xff]
    %v781 = vld [vmem:[#allocation2 + $0x8] sm:$0xff]
    %v782 = vpack.c.bf16 %v781, %v780
    %v783 = vlaneseq
    %v784 = vshrl.u32 %v783, 7
    %v785 = vsub.s32 0, %v784
    %v786 = vrot.slane %v774, %v785
    %v803 = vunpack.c.l.b16 %v742
    %v804 = vunpack.c.l.b16 %v743
    %v805 = vunpack.c.l.b16 %v744
    %v806 = vunpack.c.l.b16 %v745
    %v807 = vunpack.c.l.b16 %v746
    %v808 = vunpack.c.l.b16 %v747
    %v809 = vunpack.c.l.b16 %v748
    %v810 = vunpack.c.l.b16 %v749
    %v811 = vunpack.c.l.b16 %v750
    %v812 = vunpack.c.l.b16 %v751
    %v813 = vunpack.c.l.b16 %v752
    %v814 = vunpack.c.l.b16 %v753
    %v815 = vunpack.c.l.b16 %v754
    %v816 = vunpack.c.l.b16 %v755
    %v817 = vunpack.c.l.b16 %v756
    %v818 = vunpack.c.l.b16 %v757
    %v819 = vpack.c.b16 %v804, %v803
    %v820 = vpack.c.b16 %v806, %v805
    %v821 = vpack.c.b16 %v808, %v807
    %v822 = vpack.c.b16 %v810, %v809
    %v823 = vpack.c.b16 %v812, %v811
    %v824 = vpack.c.b16 %v814, %v813
    %v825 = vpack.c.b16 %v816, %v815
    %v826 = vpack.c.b16 %v818, %v817
    %835 = vmatprep.subr.bf16.mxu0 0
    %836 = vmatpush1.bf16.msra.mxu0 %v819
    %837 = vmatprep.subr.bf16.mxu0 0
    %838 = vmatpush1.bf16.msra.mxu0 %v820
    %839 = vmatprep.subr.bf16.mxu0 0
    %840 = vmatpush1.bf16.msra.mxu0 %v821
    %841 = vmatprep.subr.bf16.mxu0 0
    %842 = vmatpush1.bf16.msra.mxu0 %v822
    %843 = vmatprep.subr.bf16.mxu0 0
    %844 = vmatpush1.bf16.msra.mxu0 %v823
    %845 = vmatprep.subr.bf16.mxu0 0
    %846 = vmatpush1.bf16.msra.mxu0 %v824
    %847 = vmatprep.subr.bf16.mxu0 0
    %848 = vmatpush1.bf16.msra.mxu0 %v825
    %849 = vmatprep.subr.bf16.mxu0 0
    %850 = vmatpush1.bf16.msra.mxu0 %v826
    %851 = vmatprep.subr.bf16.mxu0 0
    %852 = vmatpush1.bf16.msra.mxu0 0
    %853 = vmatprep.subr.bf16.mxu0 0
    %854 = vmatpush1.bf16.msra.mxu0 0
    %855 = vmatprep.subr.bf16.mxu0 0
    %856 = vmatpush1.bf16.msra.mxu0 0
    %857 = vmatprep.subr.bf16.mxu0 0
    %858 = vmatpush1.bf16.msra.mxu0 0
    %859 = vmatprep.subr.bf16.mxu0 0
    %860 = vmatpush1.bf16.msra.mxu0 0
    %861 = vmatprep.subr.bf16.mxu0 0
    %862 = vmatpush1.bf16.msra.mxu0 0
    %863 = vmatprep.subr.bf16.mxu0 0
    %864 = vmatpush1.bf16.msra.mxu0 0
    %865 = vmatprep.subr.bf16.mxu0 0
    %866 = vmatpush1.bf16.msra.mxu0 0
    %867 = vmatprep.mubr.bf16.mxu0 0
    %868 = vmatmul.mubr.bf16.gmra.mrb[0].mxu0 %v782
    %v869 = vpop.f32.mrb[0].mxu0
    %v870 = vadd.f32 %v786, %v869
    %v871 = vpop.f32.mrb[0].mxu0
    %v872 = vpop.f32.mrb[0].mxu0
    %v873 = vadd.f32 %v786, %v872
    %v874 = vpop.f32.mrb[0].mxu0
    %875 = vdwg.mxu0
    %876 = vst [vmem:[#allocation4] sm:$0xff] %v870
    %877 = vst [vmem:[#allocation4 + $0x8] sm:$0xff] %v873
    %v878 = vld [vmem:[#allocation4] sm:$0x3]
    %v895 = vunpack.c.l.b16 %v758
    %v896 = vunpack.c.l.b16 %v759
    %v897 = vunpack.c.l.b16 %v760
    %v898 = vunpack.c.l.b16 %v761
    %v899 = vunpack.c.l.b16 %v762
    %v900 = vunpack.c.l.b16 %v763
    %v901 = vunpack.c.l.b16 %v764
    %v902 = vunpack.c.l.b16 %v765
    %v903 = vunpack.c.l.b16 %v766
    %v904 = vunpack.c.l.b16 %v767
    %v905 = vunpack.c.l.b16 %v768
    %v906 = vunpack.c.l.b16 %v769
    %v907 = vunpack.c.l.b16 %v770
    %v908 = vunpack.c.l.b16 %v771
    %v909 = vunpack.c.l.b16 %v772
    %v910 = vunpack.c.l.b16 %v773
    %v911 = vpack.c.b16 %v896, %v895
    %v912 = vpack.c.b16 %v898, %v897
    %v913 = vpack.c.b16 %v900, %v899
    %v914 = vpack.c.b16 %v902, %v901
    %v915 = vpack.c.b16 %v904, %v903
    %v916 = vpack.c.b16 %v906, %v905
    %v917 = vpack.c.b16 %v908, %v907
    %v918 = vpack.c.b16 %v910, %v909
    %927 = vmatprep.subr.bf16.mxu0 0
    %928 = vmatpush1.bf16.msra.mxu0 %v911
    %929 = vmatprep.subr.bf16.mxu0 0
    %930 = vmatpush1.bf16.msra.mxu0 %v912
    %931 = vmatprep.subr.bf16.mxu0 0
    %932 = vmatpush1.bf16.msra.mxu0 %v913
    %933 = vmatprep.subr.bf16.mxu0 0
    %934 = vmatpush1.bf16.msra.mxu0 %v914
    %935 = vmatprep.subr.bf16.mxu0 0
    %936 = vmatpush1.bf16.msra.mxu0 %v915
    %937 = vmatprep.subr.bf16.mxu0 0
    %938 = vmatpush1.bf16.msra.mxu0 %v916
    %939 = vmatprep.subr.bf16.mxu0 0
    %940 = vmatpush1.bf16.msra.mxu0 %v917
    %941 = vmatprep.subr.bf16.mxu0 0
    %942 = vmatpush1.bf16.msra.mxu0 %v918
    %943 = vmatprep.subr.bf16.mxu0 0
    %944 = vmatpush1.bf16.msra.mxu0 0
    %945 = vmatprep.subr.bf16.mxu0 0
    %946 = vmatpush1.bf16.msra.mxu0 0
    %947 = vmatprep.subr.bf16.mxu0 0
    %948 = vmatpush1.bf16.msra.mxu0 0
    %949 = vmatprep.subr.bf16.mxu0 0
    %950 = vmatpush1.bf16.msra.mxu0 0
    %951 = vmatprep.subr.bf16.mxu0 0
    %952 = vmatpush1.bf16.msra.mxu0 0
    %953 = vmatprep.subr.bf16.mxu0 0
    %954 = vmatpush1.bf16.msra.mxu0 0
    %955 = vmatprep.subr.bf16.mxu0 0
    %956 = vmatpush1.bf16.msra.mxu0 0
    %957 = vmatprep.subr.bf16.mxu0 0
    %958 = vmatpush1.bf16.msra.mxu0 0
    %959 = vmatprep.mubr.bf16.mxu0 0
    %960 = vmatmul.mubr.bf16.gmra.mrb[0].mxu0 0
    %v961 = vpop.f32.mrb[0].mxu0
    %v962 = vadd.f32 0.0, %v961
    %v963 = vpop.f32.mrb[0].mxu0
    %v964 = vpop.f32.mrb[0].mxu0
    %v965 = vpop.f32.mrb[0].mxu0
    %966 = vdwg.mxu0
    %v967 = vadd.f32 %v878, %v962
    %v968 = vxor.u32 %v967, 2147483648
    %v969 = vmul.f32 %v968, 1.442695
    %v970 = vpow.pop %v969
    %v971 = vadd.f32 %v970, 1.0
    %v972 = vrcp.pop %v971
    %v973 = vmul.f32 1.0, %v972
    %974 = vrot.lane.b32.xlu0 %v973, 64
    %v975 = vpop.permute.xlu0 %974
    %v976 = vadd.f32 %v962, %v779
    %v977 = vmul.f32 %v975, %v976
    %v978 = vadd.f32 %v878, %v977
    %v979 = vtanh.pop %v978
    %980 = vrot.lane.b32.xlu0 %v973, 32
    %v981 = vpop.permute.xlu0 %980
    %982 = vrot.lane.b32.xlu0 %v979, 64
    %v983 = vpop.permute.xlu0 %982
    %v984 = vsub.f32 1.0, %v981
    %v985 = vmul.f32 %v984, %v983
    %v986 = vmul.f32 %v981, 0.0
    %v987 = vadd.f32 %v985, %v986
    %988 = vst [vmem:[#allocation3] sm:$0x3] %v987
    %v989 = vld [vmem:[#allocation4 + $0x2] sm:$0x3]
    %v990 = vpack.c.bf16 %v987, %v987
    %991 = vmatprep.subr.bf16.mxu0 0
    %992 = vmatpush1.bf16.msra.mxu0 %v911
    %993 = vmatprep.subr.bf16.mxu0 0
    %994 = vmatpush1.bf16.msra.mxu0 %v912
    %995 = vmatprep.subr.bf16.mxu0 0
    %996 = vmatpush1.bf16.msra.mxu0 %v913
    %997 = vmatprep.subr.bf16.mxu0 0
    %998 = vmatpush1.bf16.msra.mxu0 %v914
    %999 = vmatprep.subr.bf16.mxu0 0
    %1000 = vmatpush1.bf16.msra.mxu0 %v915
    %1001 = vmatprep.subr.bf16.mxu0 0
    %1002 = vmatpush1.bf16.msra.mxu0 %v916
    %1003 = vmatprep.subr.bf16.mxu0 0
    %1004 = vmatpush1.bf16.msra.mxu0 %v917
    %1005 = vmatprep.subr.bf16.mxu0 0
    %1006 = vmatpush1.bf16.msra.mxu0 %v918
    %1007 = vmatprep.subr.bf16.mxu0 0
    %1008 = vmatpush1.bf16.msra.mxu0 0
    %1009 = vmatprep.subr.bf16.mxu0 0
    %1010 = vmatpush1.bf16.msra.mxu0 0
    %1011 = vmatprep.subr.bf16.mxu0 0
    %1012 = vmatpush1.bf16.msra.mxu0 0
    %1013 = vmatprep.subr.bf16.mxu0 0
    %1014 = vmatpush1.bf16.msra.mxu0 0
    %1015 = vmatprep.subr.bf16.mxu0 0
    %1016 = vmatpush1.bf16.msra.mxu0 0
    %1017 = vmatprep.subr.bf16.mxu0 0
    %1018 = vmatpush1.bf16.msra.mxu0 0
    %1019 = vmatprep.subr.bf16.mxu0 0
    %1020 = vmatpush1.bf16.msra.mxu0 0
    %1021 = vmatprep.subr.bf16.mxu0 0
    %1022 = vmatpush1.bf16.msra.mxu0 0
    %1023 = vmatprep.mubr.bf16.mxu0 0
    %1024 = vmatmul.mubr.bf16.gmra.mrb[0].mxu0 %v990
    %v1025 = vpop.f32.mrb[0].mxu0
    %v1026 = vadd.f32 0.0, %v1025
    %v1027 = vpop.f32.mrb[0].mxu0
    %v1028 = vpop.f32.mrb[0].mxu0
    %v1029 = vpop.f32.mrb[0].mxu0
    %1030 = vdwg.mxu0
    %v1031 = vadd.f32 %v989, %v1026
    %v1032 = vxor.u32 %v1031, 2147483648
    %v1033 = vmul.f32 %v1032, 1.442695
    %v1034 = vpow.pop %v1033
    %v1035 = vadd.f32 %v1034, 1.0
    %v1036 = vrcp.pop %v1035
    %v1037 = vmul.f32 1.0, %v1036
    %1038 = vrot.lane.b32.xlu0 %v1037, 64
    %v1039 = vpop.permute.xlu0 %1038
    %v1040 = vadd.f32 %v1026, %v779
    %v1041 = vmul.f32 %v1039, %v1040
    %v1042 = vadd.f32 %v989, %v1041
    %v1043 = vtanh.pop %v1042
    %1044 = vrot.lane.b32.xlu0 %v1037, 32
    %v1045 = vpop.permute.xlu0 %1044
    %1046 = vrot.lane.b32.xlu0 %v1043, 64
    %v1047 = vpop.permute.xlu0 %1046
    %v1048 = vsub.f32 1.0, %v1045
    %v1049 = vmul.f32 %v1048, %v1047
    %v1050 = vmul.f32 %v1045, %v987
    %v1051 = vadd.f32 %v1049, %v1050
    %1052 = vst [vmem:[#allocation3 + $0x2] sm:$0x3] %v1051
    %v1053 = vld [vmem:[#allocation4 + $0x4] sm:$0x3]
    %v1054 = vpack.c.bf16 %v1051, %v1051
    %1055 = vmatprep.subr.bf16.mxu0 0
    %1056 = vmatpush1.bf16.msra.mxu0 %v911
    %1057 = vmatprep.subr.bf16.mxu0 0
    %1058 = vmatpush1.bf16.msra.mxu0 %v912
    %1059 = vmatprep.subr.bf16.mxu0 0
    %1060 = vmatpush1.bf16.msra.mxu0 %v913
    %1061 = vmatprep.subr.bf16.mxu0 0
    %1062 = vmatpush1.bf16.msra.mxu0 %v914
    %1063 = vmatprep.subr.bf16.mxu0 0
    %1064 = vmatpush1.bf16.msra.mxu0 %v915
    %1065 = vmatprep.subr.bf16.mxu0 0
    %1066 = vmatpush1.bf16.msra.mxu0 %v916
    %1067 = vmatprep.subr.bf16.mxu0 0
    %1068 = vmatpush1.bf16.msra.mxu0 %v917
    %1069 = vmatprep.subr.bf16.mxu0 0
    %1070 = vmatpush1.bf16.msra.mxu0 %v918
    %1071 = vmatprep.subr.bf16.mxu0 0
    %1072 = vmatpush1.bf16.msra.mxu0 0
    %1073 = vmatprep.subr.bf16.mxu0 0
    %1074 = vmatpush1.bf16.msra.mxu0 0
    %1075 = vmatprep.subr.bf16.mxu0 0
    %1076 = vmatpush1.bf16.msra.mxu0 0
    %1077 = vmatprep.subr.bf16.mxu0 0
    %1078 = vmatpush1.bf16.msra.mxu0 0
    %1079 = vmatprep.subr.bf16.mxu0 0
    %1080 = vmatpush1.bf16.msra.mxu0 0
    %1081 = vmatprep.subr.bf16.mxu0 0
    %1082 = vmatpush1.bf16.msra.mxu0 0
    %1083 = vmatprep.subr.bf16.mxu0 0
    %1084 = vmatpush1.bf16.msra.mxu0 0
    %1085 = vmatprep.subr.bf16.mxu0 0
    %1086 = vmatpush1.bf16.msra.mxu0 0
    %1087 = vmatprep.mubr.bf16.mxu0 0
    %1088 = vmatmul.mubr.bf16.gmra.mrb[0].mxu0 %v1054
    %v1089 = vpop.f32.mrb[0].mxu0
    %v1090 = vadd.f32 0.0, %v1089
    %v1091 = vpop.f32.mrb[0].mxu0
    %v1092 = vpop.f32.mrb[0].mxu0
    %v1093 = vpop.f32.mrb[0].mxu0
    %1094 = vdwg.mxu0
    %v1095 = vadd.f32 %v1053, %v1090
    %v1096 = vxor.u32 %v1095, 2147483648
    %v1097 = vmul.f32 %v1096, 1.442695
    %v1098 = vpow.pop %v1097
    %v1099 = vadd.f32 %v1098, 1.0
    %v1100 = vrcp.pop %v1099
    %v1101 = vmul.f32 1.0, %v1100
    %1102 = vrot.lane.b32.xlu0 %v1101, 64
    %v1103 = vpop.permute.xlu0 %1102
    %v1104 = vadd.f32 %v1090, %v779
    %v1105 = vmul.f32 %v1103, %v1104
    %v1106 = vadd.f32 %v1053, %v1105
    %v1107 = vtanh.pop %v1106
    %1108 = vrot.lane.b32.xlu0 %v1101, 32
    %v1109 = vpop.permute.xlu0 %1108
    %1110 = vrot.lane.b32.xlu0 %v1107, 64
    %v1111 = vpop.permute.xlu0 %1110
    %v1112 = vsub.f32 1.0, %v1109
    %v1113 = vmul.f32 %v1112, %v1111
    %v1114 = vmul.f32 %v1109, %v1051
    %v1115 = vadd.f32 %v1113, %v1114
    %1116 = vst [vmem:[#allocation3 + $0x4] sm:$0x3] %v1115
    %v1117 = vld [vmem:[#allocation4 + $0x6] sm:$0x3]
    %v1118 = vpack.c.bf16 %v1115, %v1115
    %1119 = vmatprep.subr.bf16.mxu0 0
    %1120 = vmatpush1.bf16.msra.mxu0 %v911
    %1121 = vmatprep.subr.bf16.mxu0 0
    %1122 = vmatpush1.bf16.msra.mxu0 %v912
    %1123 = vmatprep.subr.bf16.mxu0 0
    %1124 = vmatpush1.bf16.msra.mxu0 %v913
    %1125 = vmatprep.subr.bf16.mxu0 0
    %1126 = vmatpush1.bf16.msra.mxu0 %v914
    %1127 = vmatprep.subr.bf16.mxu0 0
    %1128 = vmatpush1.bf16.msra.mxu0 %v915
    %1129 = vmatprep.subr.bf16.mxu0 0
    %1130 = vmatpush1.bf16.msra.mxu0 %v916
    %1131 = vmatprep.subr.bf16.mxu0 0
    %1132 = vmatpush1.bf16.msra.mxu0 %v917
    %1133 = vmatprep.subr.bf16.mxu0 0
    %1134 = vmatpush1.bf16.msra.mxu0 %v918
    %1135 = vmatprep.subr.bf16.mxu0 0
    %1136 = vmatpush1.bf16.msra.mxu0 0
    %1137 = vmatprep.subr.bf16.mxu0 0
    %1138 = vmatpush1.bf16.msra.mxu0 0
    %1139 = vmatprep.subr.bf16.mxu0 0
    %1140 = vmatpush1.bf16.msra.mxu0 0
    %1141 = vmatprep.subr.bf16.mxu0 0
    %1142 = vmatpush1.bf16.msra.mxu0 0
    %1143 = vmatprep.subr.bf16.mxu0 0
    %1144 = vmatpush1.bf16.msra.mxu0 0
    %1145 = vmatprep.subr.bf16.mxu0 0
    %1146 = vmatpush1.bf16.msra.mxu0 0
    %1147 = vmatprep.subr.bf16.mxu0 0
    %1148 = vmatpush1.bf16.msra.mxu0 0
    %1149 = vmatprep.subr.bf16.mxu0 0
    %1150 = vmatpush1.bf16.msra.mxu0 0
    %1151 = vmatprep.mubr.bf16.mxu0 0
    %1152 = vmatmul.mubr.bf16.gmra.mrb[0].mxu0 %v1118
    %v1153 = vpop.f32.mrb[0].mxu0
    %v1154 = vadd.f32 0.0, %v1153
    %v1155 = vpop.f32.mrb[0].mxu0
    %v1156 = vpop.f32.mrb[0].mxu0
    %v1157 = vpop.f32.mrb[0].mxu0
    %1158 = vdwg.mxu0
    %v1159 = vadd.f32 %v1117, %v1154
    %v1160 = vxor.u32 %v1159, 2147483648
    %v1161 = vmul.f32 %v1160, 1.442695
    %v1162 = vpow.pop %v1161
    %v1163 = vadd.f32 %v1162, 1.0
    %v1164 = vrcp.pop %v1163
    %v1165 = vmul.f32 1.0, %v1164
    %1166 = vrot.lane.b32.xlu0 %v1165, 64
    %v1167 = vpop.permute.xlu0 %1166
    %v1168 = vadd.f32 %v1154, %v779
    %v1169 = vmul.f32 %v1167, %v1168
    %v1170 = vadd.f32 %v1117, %v1169
    %v1171 = vtanh.pop %v1170
    %1172 = vrot.lane.b32.xlu0 %v1165, 32
    %v1173 = vpop.permute.xlu0 %1172
    %1174 = vrot.lane.b32.xlu0 %v1171, 64
    %v1175 = vpop.permute.xlu0 %1174
    %v1176 = vsub.f32 1.0, %v1173
    %v1177 = vmul.f32 %v1176, %v1175
    %v1178 = vmul.f32 %v1173, %v1115
    %v1179 = vadd.f32 %v1177, %v1178
    %1180 = vst [vmem:[#allocation3 + $0x6] sm:$0x3] %v1179
    %v1181 = vld [vmem:[#allocation4 + $0x8] sm:$0x3]
    %v1182 = vpack.c.bf16 %v1179, %v1179
    %1183 = vmatprep.subr.bf16.mxu0 0
    %1184 = vmatpush1.bf16.msra.mxu0 %v911
    %1185 = vmatprep.subr.bf16.mxu0 0
    %1186 = vmatpush1.bf16.msra.mxu0 %v912
    %1187 = vmatprep.subr.bf16.mxu0 0
    %1188 = vmatpush1.bf16.msra.mxu0 %v913
    %1189 = vmatprep.subr.bf16.mxu0 0
    %1190 = vmatpush1.bf16.msra.mxu0 %v914
    %1191 = vmatprep.subr.bf16.mxu0 0
    %1192 = vmatpush1.bf16.msra.mxu0 %v915
    %1193 = vmatprep.subr.bf16.mxu0 0
    %1194 = vmatpush1.bf16.msra.mxu0 %v916
    %1195 = vmatprep.subr.bf16.mxu0 0
    %1196 = vmatpush1.bf16.msra.mxu0 %v917
    %1197 = vmatprep.subr.bf16.mxu0 0
    %1198 = vmatpush1.bf16.msra.mxu0 %v918
    %1199 = vmatprep.subr.bf16.mxu0 0
    %1200 = vmatpush1.bf16.msra.mxu0 0
    %1201 = vmatprep.subr.bf16.mxu0 0
    %1202 = vmatpush1.bf16.msra.mxu0 0
    %1203 = vmatprep.subr.bf16.mxu0 0
    %1204 = vmatpush1.bf16.msra.mxu0 0
    %1205 = vmatprep.subr.bf16.mxu0 0
    %1206 = vmatpush1.bf16.msra.mxu0 0
    %1207 = vmatprep.subr.bf16.mxu0 0
    %1208 = vmatpush1.bf16.msra.mxu0 0
    %1209 = vmatprep.subr.bf16.mxu0 0
    %1210 = vmatpush1.bf16.msra.mxu0 0
    %1211 = vmatprep.subr.bf16.mxu0 0
    %1212 = vmatpush1.bf16.msra.mxu0 0
    %1213 = vmatprep.subr.bf16.mxu0 0
    %1214 = vmatpush1.bf16.msra.mxu0 0
    %1215 = vmatprep.mubr.bf16.mxu0 0
    %1216 = vmatmul.mubr.bf16.gmra.mrb[0].mxu0 %v1182
    %v1217 = vpop.f32.mrb[0].mxu0
    %v1218 = vadd.f32 0.0, %v1217
    %v1219 = vpop.f32.mrb[0].mxu0
    %v1220 = vpop.f32.mrb[0].mxu0
    %v1221 = vpop.f32.mrb[0].mxu0
    %1222 = vdwg.mxu0
    %v1223 = vadd.f32 %v1181, %v1218
    %v1224 = vxor.u32 %v1223, 2147483648
    %v1225 = vmul.f32 %v1224, 1.442695
    %v1226 = vpow.pop %v1225
    %v1227 = vadd.f32 %v1226, 1.0
    %v1228 = vrcp.pop %v1227
    %v1229 = vmul.f32 1.0, %v1228
    %1230 = vrot.lane.b32.xlu0 %v1229, 64
    %v1231 = vpop.permute.xlu0 %1230
    %v1232 = vadd.f32 %v1218, %v779
    %v1233 = vmul.f32 %v1231, %v1232
    %v1234 = vadd.f32 %v1181, %v1233
    %v1235 = vtanh.pop %v1234
    %1236 = vrot.lane.b32.xlu0 %v1229, 32
    %v1237 = vpop.permute.xlu0 %1236
    %1238 = vrot.lane.b32.xlu0 %v1235, 64
    %v1239 = vpop.permute.xlu0 %1238
    %v1240 = vsub.f32 1.0, %v1237
    %v1241 = vmul.f32 %v1240, %v1239
    %v1242 = vmul.f32 %v1237, %v1179
    %v1243 = vadd.f32 %v1241, %v1242
    %1244 = vst [vmem:[#allocation3 + $0x8] sm:$0x3] %v1243
    %v1245 = vld [vmem:[#allocation4 + $0xa] sm:$0x3]
    %v1246 = vpack.c.bf16 %v1243, %v1243
    %1247 = vmatprep.subr.bf16.mxu0 0
    %1248 = vmatpush1.bf16.msra.mxu0 %v911
    %1249 = vmatprep.subr.bf16.mxu0 0
    %1250 = vmatpush1.bf16.msra.mxu0 %v912
    %1251 = vmatprep.subr.bf16.mxu0 0
    %1252 = vmatpush1.bf16.msra.mxu0 %v913
    %1253 = vmatprep.subr.bf16.mxu0 0
    %1254 = vmatpush1.bf16.msra.mxu0 %v914
    %1255 = vmatprep.subr.bf16.mxu0 0
    %1256 = vmatpush1.bf16.msra.mxu0 %v915
    %1257 = vmatprep.subr.bf16.mxu0 0
    %1258 = vmatpush1.bf16.msra.mxu0 %v916
    %1259 = vmatprep.subr.bf16.mxu0 0
    %1260 = vmatpush1.bf16.msra.mxu0 %v917
    %1261 = vmatprep.subr.bf16.mxu0 0
    %1262 = vmatpush1.bf16.msra.mxu0 %v918
    %1263 = vmatprep.subr.bf16.mxu0 0
    %1264 = vmatpush1.bf16.msra.mxu0 0
    %1265 = vmatprep.subr.bf16.mxu0 0
    %1266 = vmatpush1.bf16.msra.mxu0 0
    %1267 = vmatprep.subr.bf16.mxu0 0
    %1268 = vmatpush1.bf16.msra.mxu0 0
    %1269 = vmatprep.subr.bf16.mxu0 0
    %1270 = vmatpush1.bf16.msra.mxu0 0
    %1271 = vmatprep.subr.bf16.mxu0 0
    %1272 = vmatpush1.bf16.msra.mxu0 0
    %1273 = vmatprep.subr.bf16.mxu0 0
    %1274 = vmatpush1.bf16.msra.mxu0 0
    %1275 = vmatprep.subr.bf16.mxu0 0
    %1276 = vmatpush1.bf16.msra.mxu0 0
    %1277 = vmatprep.subr.bf16.mxu0 0
    %1278 = vmatpush1.bf16.msra.mxu0 0
    %1279 = vmatprep.mubr.bf16.mxu0 0
    %1280 = vmatmul.mubr.bf16.gmra.mrb[0].mxu0 %v1246
    %v1281 = vpop.f32.mrb[0].mxu0
    %v1282 = vadd.f32 0.0, %v1281
    %v1283 = vpop.f32.mrb[0].mxu0
    %v1284 = vpop.f32.mrb[0].mxu0
    %v1285 = vpop.f32.mrb[0].mxu0
    %1286 = vdwg.mxu0
    %v1287 = vadd.f32 %v1245, %v1282
    %v1288 = vxor.u32 %v1287, 2147483648
    %v1289 = vmul.f32 %v1288, 1.442695
    %v1290 = vpow.pop %v1289
    %v1291 = vadd.f32 %v1290, 1.0
    %v1292 = vrcp.pop %v1291
    %v1293 = vmul.f32 1.0, %v1292
    %1294 = vrot.lane.b32.xlu0 %v1293, 64
    %v1295 = vpop.permute.xlu0 %1294
    %v1296 = vadd.f32 %v1282, %v779
    %v1297 = vmul.f32 %v1295, %v1296
    %v1298 = vadd.f32 %v1245, %v1297
    %v1299 = vtanh.pop %v1298
    %1300 = vrot.lane.b32.xlu0 %v1293, 32
    %v1301 = vpop.permute.xlu0 %1300
    %1302 = vrot.lane.b32.xlu0 %v1299, 64
    %v1303 = vpop.permute.xlu0 %1302
    %v1304 = vsub.f32 1.0, %v1301
    %v1305 = vmul.f32 %v1304, %v1303
    %v1306 = vmul.f32 %v1301, %v1243
    %v1307 = vadd.f32 %v1305, %v1306
    %1308 = vst [vmem:[#allocation3 + $0xa] sm:$0x3] %v1307
    %v1309 = vld [vmem:[#allocation4 + $0xc] sm:$0x3]
    %v1310 = vpack.c.bf16 %v1307, %v1307
    %1311 = vmatprep.subr.bf16.mxu0 0
    %1312 = vmatpush1.bf16.msra.mxu0 %v911
    %1313 = vmatprep.subr.bf16.mxu0 0
    %1314 = vmatpush1.bf16.msra.mxu0 %v912
    %1315 = vmatprep.subr.bf16.mxu0 0
    %1316 = vmatpush1.bf16.msra.mxu0 %v913
    %1317 = vmatprep.subr.bf16.mxu0 0
    %1318 = vmatpush1.bf16.msra.mxu0 %v914
    %1319 = vmatprep.subr.bf16.mxu0 0
    %1320 = vmatpush1.bf16.msra.mxu0 %v915
    %1321 = vmatprep.subr.bf16.mxu0 0
    %1322 = vmatpush1.bf16.msra.mxu0 %v916
    %1323 = vmatprep.subr.bf16.mxu0 0
    %1324 = vmatpush1.bf16.msra.mxu0 %v917
    %1325 = vmatprep.subr.bf16.mxu0 0
    %1326 = vmatpush1.bf16.msra.mxu0 %v918
    %1327 = vmatprep.subr.bf16.mxu0 0
    %1328 = vmatpush1.bf16.msra.mxu0 0
    %1329 = vmatprep.subr.bf16.mxu0 0
    %1330 = vmatpush1.bf16.msra.mxu0 0
    %1331 = vmatprep.subr.bf16.mxu0 0
    %1332 = vmatpush1.bf16.msra.mxu0 0
    %1333 = vmatprep.subr.bf16.mxu0 0
    %1334 = vmatpush1.bf16.msra.mxu0 0
    %1335 = vmatprep.subr.bf16.mxu0 0
    %1336 = vmatpush1.bf16.msra.mxu0 0
    %1337 = vmatprep.subr.bf16.mxu0 0
    %1338 = vmatpush1.bf16.msra.mxu0 0
    %1339 = vmatprep.subr.bf16.mxu0 0
    %1340 = vmatpush1.bf16.msra.mxu0 0
    %1341 = vmatprep.subr.bf16.mxu0 0
    %1342 = vmatpush1.bf16.msra.mxu0 0
    %1343 = vmatprep.mubr.bf16.mxu0 0
    %1344 = vmatmul.mubr.bf16.gmra.mrb[0].mxu0 %v1310
    %v1345 = vpop.f32.mrb[0].mxu0
    %v1346 = vadd.f32 0.0, %v1345
    %v1347 = vpop.f32.mrb[0].mxu0
    %v1348 = vpop.f32.mrb[0].mxu0
    %v1349 = vpop.f32.mrb[0].mxu0
    %1350 = vdwg.mxu0
    %v1351 = vadd.f32 %v1309, %v1346
    %v1352 = vxor.u32 %v1351, 2147483648
    %v1353 = vmul.f32 %v1352, 1.442695
    %v1354 = vpow.pop %v1353
    %v1355 = vadd.f32 %v1354, 1.0
    %v1356 = vrcp.pop %v1355
    %v1357 = vmul.f32 1.0, %v1356
    %1358 = vrot.lane.b32.xlu0 %v1357, 64
    %v1359 = vpop.permute.xlu0 %1358
    %v1360 = vadd.f32 %v1346, %v779
    %v1361 = vmul.f32 %v1359, %v1360
    %v1362 = vadd.f32 %v1309, %v1361
    %v1363 = vtanh.pop %v1362
    %1364 = vrot.lane.b32.xlu0 %v1357, 32
    %v1365 = vpop.permute.xlu0 %1364
    %1366 = vrot.lane.b32.xlu0 %v1363, 64
    %v1367 = vpop.permute.xlu0 %1366
    %v1368 = vsub.f32 1.0, %v1365
    %v1369 = vmul.f32 %v1368, %v1367
    %v1370 = vmul.f32 %v1365, %v1307
    %v1371 = vadd.f32 %v1369, %v1370
    %1372 = vst [vmem:[#allocation3 + $0xc] sm:$0x3] %v1371
    %v1373 = vld [vmem:[#allocation4 + $0xe] sm:$0x3]
    %v1374 = vpack.c.bf16 %v1371, %v1371
    %1375 = vmatprep.subr.bf16.mxu0 0
    %1376 = vmatpush1.bf16.msra.mxu0 %v911
    %1377 = vmatprep.subr.bf16.mxu0 0
    %1378 = vmatpush1.bf16.msra.mxu0 %v912
    %1379 = vmatprep.subr.bf16.mxu0 0
    %1380 = vmatpush1.bf16.msra.mxu0 %v913
    %1381 = vmatprep.subr.bf16.mxu0 0
    %1382 = vmatpush1.bf16.msra.mxu0 %v914
    %1383 = vmatprep.subr.bf16.mxu0 0
    %1384 = vmatpush1.bf16.msra.mxu0 %v915
    %1385 = vmatprep.subr.bf16.mxu0 0
    %1386 = vmatpush1.bf16.msra.mxu0 %v916
    %1387 = vmatprep.subr.bf16.mxu0 0
    %1388 = vmatpush1.bf16.msra.mxu0 %v917
    %1389 = vmatprep.subr.bf16.mxu0 0
    %1390 = vmatpush1.bf16.msra.mxu0 %v918
    %1391 = vmatprep.subr.bf16.mxu0 0
    %1392 = vmatpush1.bf16.msra.mxu0 0
    %1393 = vmatprep.subr.bf16.mxu0 0
    %1394 = vmatpush1.bf16.msra.mxu0 0
    %1395 = vmatprep.subr.bf16.mxu0 0
    %1396 = vmatpush1.bf16.msra.mxu0 0
    %1397 = vmatprep.subr.bf16.mxu0 0
    %1398 = vmatpush1.bf16.msra.mxu0 0
    %1399 = vmatprep.subr.bf16.mxu0 0
    %1400 = vmatpush1.bf16.msra.mxu0 0
    %1401 = vmatprep.subr.bf16.mxu0 0
    %1402 = vmatpush1.bf16.msra.mxu0 0
    %1403 = vmatprep.subr.bf16.mxu0 0
    %1404 = vmatpush1.bf16.msra.mxu0 0
    %1405 = vmatprep.subr.bf16.mxu0 0
    %1406 = vmatpush1.bf16.msra.mxu0 0
    %1407 = vmatprep.mubr.bf16.mxu0 0
    %1408 = vmatmul.mubr.bf16.gmra.mrb[0].mxu0 %v1374
    %v1409 = vpop.f32.mrb[0].mxu0
    %v1410 = vadd.f32 0.0, %v1409
    %v1411 = vpop.f32.mrb[0].mxu0
    %v1412 = vpop.f32.mrb[0].mxu0
    %v1413 = vpop.f32.mrb[0].mxu0
    %1414 = vdwg.mxu0
    %v1415 = vadd.f32 %v1373, %v1410
    %v1416 = vxor.u32 %v1415, 2147483648
    %v1417 = vmul.f32 %v1416, 1.442695
    %v1418 = vpow.pop %v1417
    %v1419 = vadd.f32 %v1418, 1.0
    %v1420 = vrcp.pop %v1419
    %v1421 = vmul.f32 1.0, %v1420
    %1422 = vrot.lane.b32.xlu0 %v1421, 64
    %v1423 = vpop.permute.xlu0 %1422
    %v1424 = vadd.f32 %v1410, %v779
    %v1425 = vmul.f32 %v1423, %v1424
    %v1426 = vadd.f32 %v1373, %v1425
    %v1427 = vtanh.pop %v1426
    %1428 = vrot.lane.b32.xlu0 %v1421, 32
    %v1429 = vpop.permute.xlu0 %1428
    %1430 = vrot.lane.b32.xlu0 %v1427, 64
    %v1431 = vpop.permute.xlu0 %1430
    %v1432 = vsub.f32 1.0, %v1429
    %v1433 = vmul.f32 %v1432, %v1431
    %v1434 = vmul.f32 %v1429, %v1371
    %v1435 = vadd.f32 %v1433, %v1434
    %1436 = vst [vmem:[#allocation3 + $0xe] sm:$0x3] %v1435
    %v1437 = vld [vmem:[#allocation5 + $0x100] sm:$0xf]
    %v1438 = vld [vmem:[#allocation5 + $0x104] sm:$0xf]
    %v1439 = vld [vmem:[#allocation5 + $0x108] sm:$0xf]
    %v1440 = vld [vmem:[#allocation5 + $0x10c] sm:$0xf]
    %v1441 = vld [vmem:[#allocation5 + $0x110] sm:$0xf]
    %v1442 = vld [vmem:[#allocation5 + $0x114] sm:$0xf]
    %v1443 = vld [vmem:[#allocation5 + $0x118] sm:$0xf]
    %v1444 = vld [vmem:[#allocation5 + $0x11c] sm:$0xf]
    %v1445 = vld [vmem:[#allocation5 + $0x120] sm:$0xf]
    %v1446 = vld [vmem:[#allocation5 + $0x124] sm:$0xf]
    %v1447 = vld [vmem:[#allocation5 + $0x128] sm:$0xf]
    %v1448 = vld [vmem:[#allocation5 + $0x12c] sm:$0xf]
    %v1449 = vld [vmem:[#allocation5 + $0x130] sm:$0xf]
    %v1450 = vld [vmem:[#allocation5 + $0x134] sm:$0xf]
    %v1451 = vld [vmem:[#allocation5 + $0x138] sm:$0xf]
    %v1452 = vld [vmem:[#allocation5 + $0x13c] sm:$0xf]
    %v1453 = vld [vmem:[#allocation5 + $0x140] sm:$0xf]
    %v1454 = vld [vmem:[#allocation5 + $0x144] sm:$0xf]
    %v1455 = vld [vmem:[#allocation5 + $0x148] sm:$0xf]
    %v1456 = vld [vmem:[#allocation5 + $0x14c] sm:$0xf]
    %v1457 = vld [vmem:[#allocation5 + $0x150] sm:$0xf]
    %v1458 = vld [vmem:[#allocation5 + $0x154] sm:$0xf]
    %v1459 = vld [vmem:[#allocation5 + $0x158] sm:$0xf]
    %v1460 = vld [vmem:[#allocation5 + $0x15c] sm:$0xf]
    %v1461 = vld [vmem:[#allocation5 + $0x160] sm:$0xf]
    %v1462 = vld [vmem:[#allocation5 + $0x164] sm:$0xf]
    %v1463 = vld [vmem:[#allocation5 + $0x168] sm:$0xf]
    %v1464 = vld [vmem:[#allocation5 + $0x16c] sm:$0xf]
    %v1465 = vld [vmem:[#allocation5 + $0x170] sm:$0xf]
    %v1466 = vld [vmem:[#allocation5 + $0x174] sm:$0xf]
    %v1467 = vld [vmem:[#allocation5 + $0x178] sm:$0xf]
    %v1468 = vld [vmem:[#allocation5 + $0x17c] sm:$0xf]
    %v1469 = vld [vmem:[%s2 + $0x4] sm:$0x1]
    %v1470 = vld [vmem:[%s2 + $0x5] sm:$0x1]
    %v1471 = vlaneseq
    %v1472 = vshrl.u32 %v1471, 7
    %v1473 = vsub.s32 0, %v1472
    %v1474 = vrot.slane %v1470, %v1473
    %v1475 = vld [vmem:[#allocation3] sm:$0xff]
    %v1476 = vld [vmem:[#allocation3 + $0x8] sm:$0xff]
    %v1477 = vpack.c.bf16 %v1476, %v1475
    %v1478 = vlaneseq
    %v1479 = vshrl.u32 %v1478, 7
    %v1480 = vsub.s32 0, %v1479
    %v1481 = vrot.slane %v1469, %v1480
    %v1498 = vunpack.c.l.b16 %v1437
    %v1499 = vunpack.c.l.b16 %v1438
    %v1500 = vunpack.c.l.b16 %v1439
    %v1501 = vunpack.c.l.b16 %v1440
    %v1502 = vunpack.c.l.b16 %v1441
    %v1503 = vunpack.c.l.b16 %v1442
    %v1504 = vunpack.c.l.b16 %v1443
    %v1505 = vunpack.c.l.b16 %v1444
    %v1506 = vunpack.c.l.b16 %v1445
    %v1507 = vunpack.c.l.b16 %v1446
    %v1508 = vunpack.c.l.b16 %v1447
    %v1509 = vunpack.c.l.b16 %v1448
    %v1510 = vunpack.c.l.b16 %v1449
    %v1511 = vunpack.c.l.b16 %v1450
    %v1512 = vunpack.c.l.b16 %v1451
    %v1513 = vunpack.c.l.b16 %v1452
    %v1514 = vpack.c.b16 %v1499, %v1498
    %v1515 = vpack.c.b16 %v1501, %v1500
    %v1516 = vpack.c.b16 %v1503, %v1502
    %v1517 = vpack.c.b16 %v1505, %v1504
    %v1518 = vpack.c.b16 %v1507, %v1506
    %v1519 = vpack.c.b16 %v1509, %v1508
    %v1520 = vpack.c.b16 %v1511, %v1510
    %v1521 = vpack.c.b16 %v1513, %v1512
    %1530 = vmatprep.subr.bf16.mxu0 0
    %1531 = vmatpush1.bf16.msra.mxu0 %v1514
    %1532 = vmatprep.subr.bf16.mxu0 0
    %1533 = vmatpush1.bf16.msra.mxu0 %v1515
    %1534 = vmatprep.subr.bf16.mxu0 0
    %1535 = vmatpush1.bf16.msra.mxu0 %v1516
    %1536 = vmatprep.subr.bf16.mxu0 0
    %1537 = vmatpush1.bf16.msra.mxu0 %v1517
    %1538 = vmatprep.subr.bf16.mxu0 0
    %1539 = vmatpush1.bf16.msra.mxu0 %v1518
    %1540 = vmatprep.subr.bf16.mxu0 0
    %1541 = vmatpush1.bf16.msra.mxu0 %v1519
    %1542 = vmatprep.subr.bf16.mxu0 0
    %1543 = vmatpush1.bf16.msra.mxu0 %v1520
    %1544 = vmatprep.subr.bf16.mxu0 0
    %1545 = vmatpush1.bf16.msra.mxu0 %v1521
    %1546 = vmatprep.subr.bf16.mxu0 0
    %1547 = vmatpush1.bf16.msra.mxu0 0
    %1548 = vmatprep.subr.bf16.mxu0 0
    %1549 = vmatpush1.bf16.msra.mxu0 0
    %1550 = vmatprep.subr.bf16.mxu0 0
    %1551 = vmatpush1.bf16.msra.mxu0 0
    %1552 = vmatprep.subr.bf16.mxu0 0
    %1553 = vmatpush1.bf16.msra.mxu0 0
    %1554 = vmatprep.subr.bf16.mxu0 0
    %1555 = vmatpush1.bf16.msra.mxu0 0
    %1556 = vmatprep.subr.bf16.mxu0 0
    %1557 = vmatpush1.bf16.msra.mxu0 0
    %1558 = vmatprep.subr.bf16.mxu0 0
    %1559 = vmatpush1.bf16.msra.mxu0 0
    %1560 = vmatprep.subr.bf16.mxu0 0
    %1561 = vmatpush1.bf16.msra.mxu0 0
    %1562 = vmatprep.mubr.bf16.mxu0 0
    %1563 = vmatmul.mubr.bf16.gmra.mrb[0].mxu0 %v1477
    %v1564 = vpop.f32.mrb[0].mxu0
    %v1565 = vadd.f32 %v1481, %v1564
    %v1566 = vpop.f32.mrb[0].mxu0
    %v1567 = vpop.f32.mrb[0].mxu0
    %v1568 = vadd.f32 %v1481, %v1567
    %v1569 = vpop.f32.mrb[0].mxu0
    %1570 = vdwg.mxu0
    %1571 = vst [vmem:[#allocation4] sm:$0xff] %v1565
    %1572 = vst [vmem:[#allocation4 + $0x8] sm:$0xff] %v1568
    %v1573 = vld [vmem:[#allocation4] sm:$0x3]
    %v1590 = vunpack.c.l.b16 %v1453
    %v1591 = vunpack.c.l.b16 %v1454
    %v1592 = vunpack.c.l.b16 %v1455
    %v1593 = vunpack.c.l.b16 %v1456
    %v1594 = vunpack.c.l.b16 %v1457
    %v1595 = vunpack.c.l.b16 %v1458
    %v1596 = vunpack.c.l.b16 %v1459
    %v1597 = vunpack.c.l.b16 %v1460
    %v1598 = vunpack.c.l.b16 %v1461
    %v1599 = vunpack.c.l.b16 %v1462
    %v1600 = vunpack.c.l.b16 %v1463
    %v1601 = vunpack.c.l.b16 %v1464
    %v1602 = vunpack.c.l.b16 %v1465
    %v1603 = vunpack.c.l.b16 %v1466
    %v1604 = vunpack.c.l.b16 %v1467
    %v1605 = vunpack.c.l.b16 %v1468
    %v1606 = vpack.c.b16 %v1591, %v1590
    %v1607 = vpack.c.b16 %v1593, %v1592
    %v1608 = vpack.c.b16 %v1595, %v1594
    %v1609 = vpack.c.b16 %v1597, %v1596
    %v1610 = vpack.c.b16 %v1599, %v1598
    %v1611 = vpack.c.b16 %v1601, %v1600
    %v1612 = vpack.c.b16 %v1603, %v1602
    %v1613 = vpack.c.b16 %v1605, %v1604
    %1622 = vmatprep.subr.bf16.mxu0 0
    %1623 = vmatpush1.bf16.msra.mxu0 %v1606
    %1624 = vmatprep.subr.bf16.mxu0 0
    %1625 = vmatpush1.bf16.msra.mxu0 %v1607
    %1626 = vmatprep.subr.bf16.mxu0 0
    %1627 = vmatpush1.bf16.msra.mxu0 %v1608
    %1628 = vmatprep.subr.bf16.mxu0 0
    %1629 = vmatpush1.bf16.msra.mxu0 %v1609
    %1630 = vmatprep.subr.bf16.mxu0 0
    %1631 = vmatpush1.bf16.msra.mxu0 %v1610
    %1632 = vmatprep.subr.bf16.mxu0 0
    %1633 = vmatpush1.bf16.msra.mxu0 %v1611
    %1634 = vmatprep.subr.bf16.mxu0 0
    %1635 = vmatpush1.bf16.msra.mxu0 %v1612
    %1636 = vmatprep.subr.bf16.mxu0 0
    %1637 = vmatpush1.bf16.msra.mxu0 %v1613
    %1638 = vmatprep.subr.bf16.mxu0 0
    %1639 = vmatpush1.bf16.msra.mxu0 0
    %1640 = vmatprep.subr.bf16.mxu0 0
    %1641 = vmatpush1.bf16.msra.mxu0 0
    %1642 = vmatprep.subr.bf16.mxu0 0
    %1643 = vmatpush1.bf16.msra.mxu0 0
    %1644 = vmatprep.subr.bf16.mxu0 0
    %1645 = vmatpush1.bf16.msra.mxu0 0
    %1646 = vmatprep.subr.bf16.mxu0 0
    %1647 = vmatpush1.bf16.msra.mxu0 0
    %1648 = vmatprep.subr.bf16.mxu0 0
    %1649 = vmatpush1.bf16.msra.mxu0 0
    %1650 = vmatprep.subr.bf16.mxu0 0
    %1651 = vmatpush1.bf16.msra.mxu0 0
    %1652 = vmatprep.subr.bf16.mxu0 0
    %1653 = vmatpush1.bf16.msra.mxu0 0
    %1654 = vmatprep.mubr.bf16.mxu0 0
    %1655 = vmatmul.mubr.bf16.gmra.mrb[0].mxu0 0
    %v1656 = vpop.f32.mrb[0].mxu0
    %v1657 = vadd.f32 0.0, %v1656
    %v1658 = vpop.f32.mrb[0].mxu0
    %v1659 = vpop.f32.mrb[0].mxu0
    %v1660 = vpop.f32.mrb[0].mxu0
    %1661 = vdwg.mxu0
    %v1662 = vadd.f32 %v1573, %v1657
    %v1663 = vxor.u32 %v1662, 2147483648
    %v1664 = vmul.f32 %v1663, 1.442695
    %v1665 = vpow.pop %v1664
    %v1666 = vadd.f32 %v1665, 1.0
    %v1667 = vrcp.pop %v1666
    %v1668 = vmul.f32 1.0, %v1667
    %1669 = vrot.lane.b32.xlu0 %v1668, 64
    %v1670 = vpop.permute.xlu0 %1669
    %v1671 = vadd.f32 %v1657, %v1474
    %v1672 = vmul.f32 %v1670, %v1671
    %v1673 = vadd.f32 %v1573, %v1672
    %v1674 = vtanh.pop %v1673
    %1675 = vrot.lane.b32.xlu0 %v1668, 32
    %v1676 = vpop.permute.xlu0 %1675
    %1677 = vrot.lane.b32.xlu0 %v1674, 64
    %v1678 = vpop.permute.xlu0 %1677
    %v1679 = vsub.f32 1.0, %v1676
    %v1680 = vmul.f32 %v1679, %v1678
    %v1681 = vmul.f32 %v1676, 0.0
    %v1682 = vadd.f32 %v1680, %v1681
    %1683 = vst [vmem:[#allocation2] sm:$0x3] %v1682
    %v1684 = vld [vmem:[#allocation4 + $0x2] sm:$0x3]
    %v1685 = vpack.c.bf16 %v1682, %v1682
    %1686 = vmatprep.subr.bf16.mxu0 0
    %1687 = vmatpush1.bf16.msra.mxu0 %v1606
    %1688 = vmatprep.subr.bf16.mxu0 0
    %1689 = vmatpush1.bf16.msra.mxu0 %v1607
    %1690 = vmatprep.subr.bf16.mxu0 0
    %1691 = vmatpush1.bf16.msra.mxu0 %v1608
    %1692 = vmatprep.subr.bf16.mxu0 0
    %1693 = vmatpush1.bf16.msra.mxu0 %v1609
    %1694 = vmatprep.subr.bf16.mxu0 0
    %1695 = vmatpush1.bf16.msra.mxu0 %v1610
    %1696 = vmatprep.subr.bf16.mxu0 0
    %1697 = vmatpush1.bf16.msra.mxu0 %v1611
    %1698 = vmatprep.subr.bf16.mxu0 0
    %1699 = vmatpush1.bf16.msra.mxu0 %v1612
    %1700 = vmatprep.subr.bf16.mxu0 0
    %1701 = vmatpush1.bf16.msra.mxu0 %v1613
    %1702 = vmatprep.subr.bf16.mxu0 0
    %1703 = vmatpush1.bf16.msra.mxu0 0
    %1704 = vmatprep.subr.bf16.mxu0 0
    %1705 = vmatpush1.bf16.msra.mxu0 0
    %1706 = vmatprep.subr.bf16.mxu0 0
    %1707 = vmatpush1.bf16.msra.mxu0 0
    %1708 = vmatprep.subr.bf16.mxu0 0
    %1709 = vmatpush1.bf16.msra.mxu0 0
    %1710 = vmatprep.subr.bf16.mxu0 0
    %1711 = vmatpush1.bf16.msra.mxu0 0
    %1712 = vmatprep.subr.bf16.mxu0 0
    %1713 = vmatpush1.bf16.msra.mxu0 0
    %1714 = vmatprep.subr.bf16.mxu0 0
    %1715 = vmatpush1.bf16.msra.mxu0 0
    %1716 = vmatprep.subr.bf16.mxu0 0
    %1717 = vmatpush1.bf16.msra.mxu0 0
    %1718 = vmatprep.mubr.bf16.mxu0 0
    %1719 = vmatmul.mubr.bf16.gmra.mrb[0].mxu0 %v1685
    %v1720 = vpop.f32.mrb[0].mxu0
    %v1721 = vadd.f32 0.0, %v1720
    %v1722 = vpop.f32.mrb[0].mxu0
    %v1723 = vpop.f32.mrb[0].mxu0
    %v1724 = vpop.f32.mrb[0].mxu0
    %1725 = vdwg.mxu0
    %v1726 = vadd.f32 %v1684, %v1721
    %v1727 = vxor.u32 %v1726, 2147483648
    %v1728 = vmul.f32 %v1727, 1.442695
    %v1729 = vpow.pop %v1728
    %v1730 = vadd.f32 %v1729, 1.0
    %v1731 = vrcp.pop %v1730
    %v1732 = vmul.f32 1.0, %v1731
    %1733 = vrot.lane.b32.xlu0 %v1732, 64
    %v1734 = vpop.permute.xlu0 %1733
    %v1735 = vadd.f32 %v1721, %v1474
    %v1736 = vmul.f32 %v1734, %v1735
    %v1737 = vadd.f32 %v1684, %v1736
    %v1738 = vtanh.pop %v1737
    %1739 = vrot.lane.b32.xlu0 %v1732, 32
    %v1740 = vpop.permute.xlu0 %1739
    %1741 = vrot.lane.b32.xlu0 %v1738, 64
    %v1742 = vpop.permute.xlu0 %1741
    %v1743 = vsub.f32 1.0, %v1740
    %v1744 = vmul.f32 %v1743, %v1742
    %v1745 = vmul.f32 %v1740, %v1682
    %v1746 = vadd.f32 %v1744, %v1745
    %1747 = vst [vmem:[#allocation2 + $0x2] sm:$0x3] %v1746
    %v1748 = vld [vmem:[#allocation4 + $0x4] sm:$0x3]
    %v1749 = vpack.c.bf16 %v1746, %v1746
    %1750 = vmatprep.subr.bf16.mxu0 0
    %1751 = vmatpush1.bf16.msra.mxu0 %v1606
    %1752 = vmatprep.subr.bf16.mxu0 0
    %1753 = vmatpush1.bf16.msra.mxu0 %v1607
    %1754 = vmatprep.subr.bf16.mxu0 0
    %1755 = vmatpush1.bf16.msra.mxu0 %v1608
    %1756 = vmatprep.subr.bf16.mxu0 0
    %1757 = vmatpush1.bf16.msra.mxu0 %v1609
    %1758 = vmatprep.subr.bf16.mxu0 0
    %1759 = vmatpush1.bf16.msra.mxu0 %v1610
    %1760 = vmatprep.subr.bf16.mxu0 0
    %1761 = vmatpush1.bf16.msra.mxu0 %v1611
    %1762 = vmatprep.subr.bf16.mxu0 0
    %1763 = vmatpush1.bf16.msra.mxu0 %v1612
    %1764 = vmatprep.subr.bf16.mxu0 0
    %1765 = vmatpush1.bf16.msra.mxu0 %v1613
    %1766 = vmatprep.subr.bf16.mxu0 0
    %1767 = vmatpush1.bf16.msra.mxu0 0
    %1768 = vmatprep.subr.bf16.mxu0 0
    %1769 = vmatpush1.bf16.msra.mxu0 0
    %1770 = vmatprep.subr.bf16.mxu0 0
    %1771 = vmatpush1.bf16.msra.mxu0 0
    %1772 = vmatprep.subr.bf16.mxu0 0
    %1773 = vmatpush1.bf16.msra.mxu0 0
    %1774 = vmatprep.subr.bf16.mxu0 0
    %1775 = vmatpush1.bf16.msra.mxu0 0
    %1776 = vmatprep.subr.bf16.mxu0 0
    %1777 = vmatpush1.bf16.msra.mxu0 0
    %1778 = vmatprep.subr.bf16.mxu0 0
    %1779 = vmatpush1.bf16.msra.mxu0 0
    %1780 = vmatprep.subr.bf16.mxu0 0
    %1781 = vmatpush1.bf16.msra.mxu0 0
    %1782 = vmatprep.mubr.bf16.mxu0 0
    %1783 = vmatmul.mubr.bf16.gmra.mrb[0].mxu0 %v1749
    %v1784 = vpop.f32.mrb[0].mxu0
    %v1785 = vadd.f32 0.0, %v1784
    %v1786 = vpop.f32.mrb[0].mxu0
    %v1787 = vpop.f32.mrb[0].mxu0
    %v1788 = vpop.f32.mrb[0].mxu0
    %1789 = vdwg.mxu0
    %v1790 = vadd.f32 %v1748, %v1785
    %v1791 = vxor.u32 %v1790, 2147483648
    %v1792 = vmul.f32 %v1791, 1.442695
    %v1793 = vpow.pop %v1792
    %v1794 = vadd.f32 %v1793, 1.0
    %v1795 = vrcp.pop %v1794
    %v1796 = vmul.f32 1.0, %v1795
    %1797 = vrot.lane.b32.xlu0 %v1796, 64
    %v1798 = vpop.permute.xlu0 %1797
    %v1799 = vadd.f32 %v1785, %v1474
    %v1800 = vmul.f32 %v1798, %v1799
    %v1801 = vadd.f32 %v1748, %v1800
    %v1802 = vtanh.pop %v1801
    %1803 = vrot.lane.b32.xlu0 %v1796, 32
    %v1804 = vpop.permute.xlu0 %1803
    %1805 = vrot.lane.b32.xlu0 %v1802, 64
    %v1806 = vpop.permute.xlu0 %1805
    %v1807 = vsub.f32 1.0, %v1804
    %v1808 = vmul.f32 %v1807, %v1806
    %v1809 = vmul.f32 %v1804, %v1746
    %v1810 = vadd.f32 %v1808, %v1809
    %1811 = vst [vmem:[#allocation2 + $0x4] sm:$0x3] %v1810
    %v1812 = vld [vmem:[#allocation4 + $0x6] sm:$0x3]
    %v1813 = vpack.c.bf16 %v1810, %v1810
    %1814 = vmatprep.subr.bf16.mxu0 0
    %1815 = vmatpush1.bf16.msra.mxu0 %v1606
    %1816 = vmatprep.subr.bf16.mxu0 0
    %1817 = vmatpush1.bf16.msra.mxu0 %v1607
    %1818 = vmatprep.subr.bf16.mxu0 0
    %1819 = vmatpush1.bf16.msra.mxu0 %v1608
    %1820 = vmatprep.subr.bf16.mxu0 0
    %1821 = vmatpush1.bf16.msra.mxu0 %v1609
    %1822 = vmatprep.subr.bf16.mxu0 0
    %1823 = vmatpush1.bf16.msra.mxu0 %v1610
    %1824 = vmatprep.subr.bf16.mxu0 0
    %1825 = vmatpush1.bf16.msra.mxu0 %v1611
    %1826 = vmatprep.subr.bf16.mxu0 0
    %1827 = vmatpush1.bf16.msra.mxu0 %v1612
    %1828 = vmatprep.subr.bf16.mxu0 0
    %1829 = vmatpush1.bf16.msra.mxu0 %v1613
    %1830 = vmatprep.subr.bf16.mxu0 0
    %1831 = vmatpush1.bf16.msra.mxu0 0
    %1832 = vmatprep.subr.bf16.mxu0 0
    %1833 = vmatpush1.bf16.msra.mxu0 0
    %1834 = vmatprep.subr.bf16.mxu0 0
    %1835 = vmatpush1.bf16.msra.mxu0 0
    %1836 = vmatprep.subr.bf16.mxu0 0
    %1837 = vmatpush1.bf16.msra.mxu0 0
    %1838 = vmatprep.subr.bf16.mxu0 0
    %1839 = vmatpush1.bf16.msra.mxu0 0
    %1840 = vmatprep.subr.bf16.mxu0 0
    %1841 = vmatpush1.bf16.msra.mxu0 0
    %1842 = vmatprep.subr.bf16.mxu0 0
    %1843 = vmatpush1.bf16.msra.mxu0 0
    %1844 = vmatprep.subr.bf16.mxu0 0
    %1845 = vmatpush1.bf16.msra.mxu0 0
    %1846 = vmatprep.mubr.bf16.mxu0 0
    %1847 = vmatmul.mubr.bf16.gmra.mrb[0].mxu0 %v1813
    %v1848 = vpop.f32.mrb[0].mxu0
    %v1849 = vadd.f32 0.0, %v1848
    %v1850 = vpop.f32.mrb[0].mxu0
    %v1851 = vpop.f32.mrb[0].mxu0
    %v1852 = vpop.f32.mrb[0].mxu0
    %1853 = vdwg.mxu0
    %v1854 = vadd.f32 %v1812, %v1849
    %v1855 = vxor.u32 %v1854, 2147483648
    %v1856 = vmul.f32 %v1855, 1.442695
    %v1857 = vpow.pop %v1856
    %v1858 = vadd.f32 %v1857, 1.0
    %v1859 = vrcp.pop %v1858
    %v1860 = vmul.f32 1.0, %v1859
    %1861 = vrot.lane.b32.xlu0 %v1860, 64
    %v1862 = vpop.permute.xlu0 %1861
    %v1863 = vadd.f32 %v1849, %v1474
    %v1864 = vmul.f32 %v1862, %v1863
    %v1865 = vadd.f32 %v1812, %v1864
    %v1866 = vtanh.pop %v1865
    %1867 = vrot.lane.b32.xlu0 %v1860, 32
    %v1868 = vpop.permute.xlu0 %1867
    %1869 = vrot.lane.b32.xlu0 %v1866, 64
    %v1870 = vpop.permute.xlu0 %1869
    %v1871 = vsub.f32 1.0, %v1868
    %v1872 = vmul.f32 %v1871, %v1870
    %v1873 = vmul.f32 %v1868, %v1810
    %v1874 = vadd.f32 %v1872, %v1873
    %1875 = vst [vmem:[#allocation2 + $0x6] sm:$0x3] %v1874
    %v1876 = vld [vmem:[#allocation4 + $0x8] sm:$0x3]
    %v1877 = vpack.c.bf16 %v1874, %v1874
    %1878 = vmatprep.subr.bf16.mxu0 0
    %1879 = vmatpush1.bf16.msra.mxu0 %v1606
    %1880 = vmatprep.subr.bf16.mxu0 0
    %1881 = vmatpush1.bf16.msra.mxu0 %v1607
    %1882 = vmatprep.subr.bf16.mxu0 0
    %1883 = vmatpush1.bf16.msra.mxu0 %v1608
    %1884 = vmatprep.subr.bf16.mxu0 0
    %1885 = vmatpush1.bf16.msra.mxu0 %v1609
    %1886 = vmatprep.subr.bf16.mxu0 0
    %1887 = vmatpush1.bf16.msra.mxu0 %v1610
    %1888 = vmatprep.subr.bf16.mxu0 0
    %1889 = vmatpush1.bf16.msra.mxu0 %v1611
    %1890 = vmatprep.subr.bf16.mxu0 0
    %1891 = vmatpush1.bf16.msra.mxu0 %v1612
    %1892 = vmatprep.subr.bf16.mxu0 0
    %1893 = vmatpush1.bf16.msra.mxu0 %v1613
    %1894 = vmatprep.subr.bf16.mxu0 0
    %1895 = vmatpush1.bf16.msra.mxu0 0
    %1896 = vmatprep.subr.bf16.mxu0 0
    %1897 = vmatpush1.bf16.msra.mxu0 0
    %1898 = vmatprep.subr.bf16.mxu0 0
    %1899 = vmatpush1.bf16.msra.mxu0 0
    %1900 = vmatprep.subr.bf16.mxu0 0
    %1901 = vmatpush1.bf16.msra.mxu0 0
    %1902 = vmatprep.subr.bf16.mxu0 0
    %1903 = vmatpush1.bf16.msra.mxu0 0
    %1904 = vmatprep.subr.bf16.mxu0 0
    %1905 = vmatpush1.bf16.msra.mxu0 0
    %1906 = vmatprep.subr.bf16.mxu0 0
    %1907 = vmatpush1.bf16.msra.mxu0 0
    %1908 = vmatprep.subr.bf16.mxu0 0
    %1909 = vmatpush1.bf16.msra.mxu0 0
    %1910 = vmatprep.mubr.bf16.mxu0 0
    %1911 = vmatmul.mubr.bf16.gmra.mrb[0].mxu0 %v1877
    %v1912 = vpop.f32.mrb[0].mxu0
    %v1913 = vadd.f32 0.0, %v1912
    %v1914 = vpop.f32.mrb[0].mxu0
    %v1915 = vpop.f32.mrb[0].mxu0
    %v1916 = vpop.f32.mrb[0].mxu0
    %1917 = vdwg.mxu0
    %v1918 = vadd.f32 %v1876, %v1913
    %v1919 = vxor.u32 %v1918, 2147483648
    %v1920 = vmul.f32 %v1919, 1.442695
    %v1921 = vpow.pop %v1920
    %v1922 = vadd.f32 %v1921, 1.0
    %v1923 = vrcp.pop %v1922
    %v1924 = vmul.f32 1.0, %v1923
    %1925 = vrot.lane.b32.xlu0 %v1924, 64
    %v1926 = vpop.permute.xlu0 %1925
    %v1927 = vadd.f32 %v1913, %v1474
    %v1928 = vmul.f32 %v1926, %v1927
    %v1929 = vadd.f32 %v1876, %v1928
    %v1930 = vtanh.pop %v1929
    %1931 = vrot.lane.b32.xlu0 %v1924, 32
    %v1932 = vpop.permute.xlu0 %1931
    %1933 = vrot.lane.b32.xlu0 %v1930, 64
    %v1934 = vpop.permute.xlu0 %1933
    %v1935 = vsub.f32 1.0, %v1932
    %v1936 = vmul.f32 %v1935, %v1934
    %v1937 = vmul.f32 %v1932, %v1874
    %v1938 = vadd.f32 %v1936, %v1937
    %1939 = vst [vmem:[#allocation2 + $0x8] sm:$0x3] %v1938
    %v1940 = vld [vmem:[#allocation4 + $0xa] sm:$0x3]
    %v1941 = vpack.c.bf16 %v1938, %v1938
    %1942 = vmatprep.subr.bf16.mxu0 0
    %1943 = vmatpush1.bf16.msra.mxu0 %v1606
    %1944 = vmatprep.subr.bf16.mxu0 0
    %1945 = vmatpush1.bf16.msra.mxu0 %v1607
    %1946 = vmatprep.subr.bf16.mxu0 0
    %1947 = vmatpush1.bf16.msra.mxu0 %v1608
    %1948 = vmatprep.subr.bf16.mxu0 0
    %1949 = vmatpush1.bf16.msra.mxu0 %v1609
    %1950 = vmatprep.subr.bf16.mxu0 0
    %1951 = vmatpush1.bf16.msra.mxu0 %v1610
    %1952 = vmatprep.subr.bf16.mxu0 0
    %1953 = vmatpush1.bf16.msra.mxu0 %v1611
    %1954 = vmatprep.subr.bf16.mxu0 0
    %1955 = vmatpush1.bf16.msra.mxu0 %v1612
    %1956 = vmatprep.subr.bf16.mxu0 0
    %1957 = vmatpush1.bf16.msra.mxu0 %v1613
    %1958 = vmatprep.subr.bf16.mxu0 0
    %1959 = vmatpush1.bf16.msra.mxu0 0
    %1960 = vmatprep.subr.bf16.mxu0 0
    %1961 = vmatpush1.bf16.msra.mxu0 0
    %1962 = vmatprep.subr.bf16.mxu0 0
    %1963 = vmatpush1.bf16.msra.mxu0 0
    %1964 = vmatprep.subr.bf16.mxu0 0
    %1965 = vmatpush1.bf16.msra.mxu0 0
    %1966 = vmatprep.subr.bf16.mxu0 0
    %1967 = vmatpush1.bf16.msra.mxu0 0
    %1968 = vmatprep.subr.bf16.mxu0 0
    %1969 = vmatpush1.bf16.msra.mxu0 0
    %1970 = vmatprep.subr.bf16.mxu0 0
    %1971 = vmatpush1.bf16.msra.mxu0 0
    %1972 = vmatprep.subr.bf16.mxu0 0
    %1973 = vmatpush1.bf16.msra.mxu0 0
    %1974 = vmatprep.mubr.bf16.mxu0 0
    %1975 = vmatmul.mubr.bf16.gmra.mrb[0].mxu0 %v1941
    %v1976 = vpop.f32.mrb[0].mxu0
    %v1977 = vadd.f32 0.0, %v1976
    %v1978 = vpop.f32.mrb[0].mxu0
    %v1979 = vpop.f32.mrb[0].mxu0
    %v1980 = vpop.f32.mrb[0].mxu0
    %1981 = vdwg.mxu0
    %v1982 = vadd.f32 %v1940, %v1977
    %v1983 = vxor.u32 %v1982, 2147483648
    %v1984 = vmul.f32 %v1983, 1.442695
    %v1985 = vpow.pop %v1984
    %v1986 = vadd.f32 %v1985, 1.0
    %v1987 = vrcp.pop %v1986
    %v1988 = vmul.f32 1.0, %v1987
    %1989 = vrot.lane.b32.xlu0 %v1988, 64
    %v1990 = vpop.permute.xlu0 %1989
    %v1991 = vadd.f32 %v1977, %v1474
    %v1992 = vmul.f32 %v1990, %v1991
    %v1993 = vadd.f32 %v1940, %v1992
    %v1994 = vtanh.pop %v1993
    %1995 = vrot.lane.b32.xlu0 %v1988, 32
    %v1996 = vpop.permute.xlu0 %1995
    %1997 = vrot.lane.b32.xlu0 %v1994, 64
    %v1998 = vpop.permute.xlu0 %1997
    %v1999 = vsub.f32 1.0, %v1996
    %v2000 = vmul.f32 %v1999, %v1998
    %v2001 = vmul.f32 %v1996, %v1938
    %v2002 = vadd.f32 %v2000, %v2001
    %2003 = vst [vmem:[#allocation2 + $0xa] sm:$0x3] %v2002
    %v2004 = vld [vmem:[#allocation4 + $0xc] sm:$0x3]
    %v2005 = vpack.c.bf16 %v2002, %v2002
    %2006 = vmatprep.subr.bf16.mxu0 0
    %2007 = vmatpush1.bf16.msra.mxu0 %v1606
    %2008 = vmatprep.subr.bf16.mxu0 0
    %2009 = vmatpush1.bf16.msra.mxu0 %v1607
    %2010 = vmatprep.subr.bf16.mxu0 0
    %2011 = vmatpush1.bf16.msra.mxu0 %v1608
    %2012 = vmatprep.subr.bf16.mxu0 0
    %2013 = vmatpush1.bf16.msra.mxu0 %v1609
    %2014 = vmatprep.subr.bf16.mxu0 0
    %2015 = vmatpush1.bf16.msra.mxu0 %v1610
    %2016 = vmatprep.subr.bf16.mxu0 0
    %2017 = vmatpush1.bf16.msra.mxu0 %v1611
    %2018 = vmatprep.subr.bf16.mxu0 0
    %2019 = vmatpush1.bf16.msra.mxu0 %v1612
    %2020 = vmatprep.subr.bf16.mxu0 0
    %2021 = vmatpush1.bf16.msra.mxu0 %v1613
    %2022 = vmatprep.subr.bf16.mxu0 0
    %2023 = vmatpush1.bf16.msra.mxu0 0
    %2024 = vmatprep.subr.bf16.mxu0 0
    %2025 = vmatpush1.bf16.msra.mxu0 0
    %2026 = vmatprep.subr.bf16.mxu0 0
    %2027 = vmatpush1.bf16.msra.mxu0 0
    %2028 = vmatprep.subr.bf16.mxu0 0
    %2029 = vmatpush1.bf16.msra.mxu0 0
    %2030 = vmatprep.subr.bf16.mxu0 0
    %2031 = vmatpush1.bf16.msra.mxu0 0
    %2032 = vmatprep.subr.bf16.mxu0 0
    %2033 = vmatpush1.bf16.msra.mxu0 0
    %2034 = vmatprep.subr.bf16.mxu0 0
    %2035 = vmatpush1.bf16.msra.mxu0 0
    %2036 = vmatprep.subr.bf16.mxu0 0
    %2037 = vmatpush1.bf16.msra.mxu0 0
    %2038 = vmatprep.mubr.bf16.mxu0 0
    %2039 = vmatmul.mubr.bf16.gmra.mrb[0].mxu0 %v2005
    %v2040 = vpop.f32.mrb[0].mxu0
    %v2041 = vadd.f32 0.0, %v2040
    %v2042 = vpop.f32.mrb[0].mxu0
    %v2043 = vpop.f32.mrb[0].mxu0
    %v2044 = vpop.f32.mrb[0].mxu0
    %2045 = vdwg.mxu0
    %v2046 = vadd.f32 %v2004, %v2041
    %v2047 = vxor.u32 %v2046, 2147483648
    %v2048 = vmul.f32 %v2047, 1.442695
    %v2049 = vpow.pop %v2048
    %v2050 = vadd.f32 %v2049, 1.0
    %v2051 = vrcp.pop %v2050
    %v2052 = vmul.f32 1.0, %v2051
    %2053 = vrot.lane.b32.xlu0 %v2052, 64
    %v2054 = vpop.permute.xlu0 %2053
    %v2055 = vadd.f32 %v2041, %v1474
    %v2056 = vmul.f32 %v2054, %v2055
    %v2057 = vadd.f32 %v2004, %v2056
    %v2058 = vtanh.pop %v2057
    %2059 = vrot.lane.b32.xlu0 %v2052, 32
    %v2060 = vpop.permute.xlu0 %2059
    %2061 = vrot.lane.b32.xlu0 %v2058, 64
    %v2062 = vpop.permute.xlu0 %2061
    %v2063 = vsub.f32 1.0, %v2060
    %v2064 = vmul.f32 %v2063, %v2062
    %v2065 = vmul.f32 %v2060, %v2002
    %v2066 = vadd.f32 %v2064, %v2065
    %2067 = vst [vmem:[#allocation2 + $0xc] sm:$0x3] %v2066
    %v2068 = vld [vmem:[#allocation4 + $0xe] sm:$0x3]
    %v2069 = vpack.c.bf16 %v2066, %v2066
    %2070 = vmatprep.subr.bf16.mxu0 0
    %2071 = vmatpush1.bf16.msra.mxu0 %v1606
    %2072 = vmatprep.subr.bf16.mxu0 0
    %2073 = vmatpush1.bf16.msra.mxu0 %v1607
    %2074 = vmatprep.subr.bf16.mxu0 0
    %2075 = vmatpush1.bf16.msra.mxu0 %v1608
    %2076 = vmatprep.subr.bf16.mxu0 0
    %2077 = vmatpush1.bf16.msra.mxu0 %v1609
    %2078 = vmatprep.subr.bf16.mxu0 0
    %2079 = vmatpush1.bf16.msra.mxu0 %v1610
    %2080 = vmatprep.subr.bf16.mxu0 0
    %2081 = vmatpush1.bf16.msra.mxu0 %v1611
    %2082 = vmatprep.subr.bf16.mxu0 0
    %2083 = vmatpush1.bf16.msra.mxu0 %v1612
    %2084 = vmatprep.subr.bf16.mxu0 0
    %2085 = vmatpush1.bf16.msra.mxu0 %v1613
    %2086 = vmatprep.subr.bf16.mxu0 0
    %2087 = vmatpush1.bf16.msra.mxu0 0
    %2088 = vmatprep.subr.bf16.mxu0 0
    %2089 = vmatpush1.bf16.msra.mxu0 0
    %2090 = vmatprep.subr.bf16.mxu0 0
    %2091 = vmatpush1.bf16.msra.mxu0 0
    %2092 = vmatprep.subr.bf16.mxu0 0
    %2093 = vmatpush1.bf16.msra.mxu0 0
    %2094 = vmatprep.subr.bf16.mxu0 0
    %2095 = vmatpush1.bf16.msra.mxu0 0
    %2096 = vmatprep.subr.bf16.mxu0 0
    %2097 = vmatpush1.bf16.msra.mxu0 0
    %2098 = vmatprep.subr.bf16.mxu0 0
    %2099 = vmatpush1.bf16.msra.mxu0 0
    %2100 = vmatprep.subr.bf16.mxu0 0
    %2101 = vmatpush1.bf16.msra.mxu0 0
    %2102 = vmatprep.mubr.bf16.mxu0 0
    %2103 = vmatmul.mubr.bf16.gmra.mrb[0].mxu0 %v2069
    %v2104 = vpop.f32.mrb[0].mxu0
    %v2105 = vadd.f32 0.0, %v2104
    %v2106 = vpop.f32.mrb[0].mxu0
    %v2107 = vpop.f32.mrb[0].mxu0
    %v2108 = vpop.f32.mrb[0].mxu0
    %2109 = vdwg.mxu0
    %v2110 = vadd.f32 %v2068, %v2105
    %v2111 = vxor.u32 %v2110, 2147483648
    %v2112 = vmul.f32 %v2111, 1.442695
    %v2113 = vpow.pop %v2112
    %v2114 = vadd.f32 %v2113, 1.0
    %v2115 = vrcp.pop %v2114
    %v2116 = vmul.f32 1.0, %v2115
    %2117 = vrot.lane.b32.xlu0 %v2116, 64
    %v2118 = vpop.permute.xlu0 %2117
    %v2119 = vadd.f32 %v2105, %v1474
    %v2120 = vmul.f32 %v2118, %v2119
    %v2121 = vadd.f32 %v2068, %v2120
    %v2122 = vtanh.pop %v2121
    %2123 = vrot.lane.b32.xlu0 %v2116, 32
    %v2124 = vpop.permute.xlu0 %2123
    %2125 = vrot.lane.b32.xlu0 %v2122, 64
    %v2126 = vpop.permute.xlu0 %2125
    %v2127 = vsub.f32 1.0, %v2124
    %v2128 = vmul.f32 %v2127, %v2126
    %v2129 = vmul.f32 %v2124, %v2066
    %v2130 = vadd.f32 %v2128, %v2129
    %2131 = vst [vmem:[#allocation2 + $0xe] sm:$0x3] %v2130
    %v2132 = vld [vmem:[#allocation8] sm:$0x1]
    %v2133 = vld [vmem:[#allocation2] sm:$0x3]
    %v2134 = vld [vmem:[#allocation2 + $0x2] sm:$0x3]
    %v2135 = vld [vmem:[#allocation2 + $0x4] sm:$0x3]
    %v2136 = vld [vmem:[#allocation2 + $0x6] sm:$0x3]
    %v2137 = vld [vmem:[#allocation2 + $0x8] sm:$0x3]
    %v2138 = vld [vmem:[#allocation2 + $0xa] sm:$0x3]
    %v2139 = vld [vmem:[#allocation2 + $0xc] sm:$0x3]
    %v2140 = vld [vmem:[#allocation2 + $0xe] sm:$0x3]
    %v2141 = vlaneseq
    %v2142 = vshrl.u32 %v2141, 7
    %v2143 = vsub.s32 0, %v2142
    %v2144 = vrot.slane %v2132, %v2143
    %v2145 = vmul.f32 %v2133, %v2144
    %vm2146 = vcmask 1041408
    %v2147 = vsel %vm2146, %v2145, 0.0
    %2148 = vadd.xlane.f32.xlu0 %v2147
    %v2149 = vpop.xlane.xlu0 %2148
    %v2150 = vmul.f32 %v2134, %v2144
    %v2151 = vsel %vm2146, %v2150, 0.0
    %2152 = vadd.xlane.f32.xlu0 %v2151
    %v2153 = vpop.xlane.xlu0 %2152
    %v2154 = vmul.f32 %v2135, %v2144
    %v2155 = vsel %vm2146, %v2154, 0.0
    %2156 = vadd.xlane.f32.xlu0 %v2155
    %v2157 = vpop.xlane.xlu0 %2156
    %v2158 = vmul.f32 %v2136, %v2144
    %v2159 = vsel %vm2146, %v2158, 0.0
    %2160 = vadd.xlane.f32.xlu0 %v2159
    %v2161 = vpop.xlane.xlu0 %2160
    %v2162 = vmul.f32 %v2137, %v2144
    %v2163 = vsel %vm2146, %v2162, 0.0
    %2164 = vadd.xlane.f32.xlu0 %v2163
    %v2165 = vpop.xlane.xlu0 %2164
    %v2166 = vmul.f32 %v2138, %v2144
    %v2167 = vsel %vm2146, %v2166, 0.0
    %2168 = vadd.xlane.f32.xlu0 %v2167
    %v2169 = vpop.xlane.xlu0 %2168
    %v2170 = vmul.f32 %v2139, %v2144
    %v2171 = vsel %vm2146, %v2170, 0.0
    %2172 = vadd.xlane.f32.xlu0 %v2171
    %v2173 = vpop.xlane.xlu0 %2172
    %v2174 = vmul.f32 %v2140, %v2144
    %v2175 = vsel %vm2146, %v2174, 0.0
    %2176 = vadd.xlane.f32.xlu0 %v2175
    %v2177 = vpop.xlane.xlu0 %2176
    %v2178 = vmax.f32 %v2149, %v2153
    %v2179 = vmax.f32 %v2178, %v2157
    %v2180 = vmax.f32 %v2179, %v2161
    %v2181 = vmax.f32 %v2180, %v2165
    %v2182 = vmax.f32 %v2181, %v2169
    %v2183 = vmax.f32 %v2182, %v2173
    %v2184 = vmax.f32 %v2183, %v2177
    %v2185 = vsub.f32 %v2149, %v2184
    %v2186 = vmul.f32 %v2185, 1.442695
    %v2187 = vpow.pop %v2186
    %v2188 = vsub.f32 %v2153, %v2184
    %v2189 = vmul.f32 %v2188, 1.442695
    %v2190 = vpow.pop %v2189
    %v2191 = vsub.f32 %v2157, %v2184
    %v2192 = vmul.f32 %v2191, 1.442695
    %v2193 = vpow.pop %v2192
    %v2194 = vsub.f32 %v2161, %v2184
    %v2195 = vmul.f32 %v2194, 1.442695
    %v2196 = vpow.pop %v2195
    %v2197 = vsub.f32 %v2165, %v2184
    %v2198 = vmul.f32 %v2197, 1.442695
    %v2199 = vpow.pop %v2198
    %v2200 = vsub.f32 %v2169, %v2184
    %v2201 = vmul.f32 %v2200, 1.442695
    %v2202 = vpow.pop %v2201
    %v2203 = vsub.f32 %v2173, %v2184
    %v2204 = vmul.f32 %v2203, 1.442695
    %v2205 = vpow.pop %v2204
    %v2206 = vsub.f32 %v2177, %v2184
    %v2207 = vmul.f32 %v2206, 1.442695
    %v2208 = vpow.pop %v2207
    %v2209 = vadd.f32 %v2187, %v2190
    %v2210 = vadd.f32 %v2209, %v2193
    %v2211 = vadd.f32 %v2210, %v2196
    %v2212 = vadd.f32 %v2211, %v2199
    %v2213 = vadd.f32 %v2212, %v2202
    %v2214 = vadd.f32 %v2213, %v2205
    %v2215 = vadd.f32 %v2214, %v2208
    %v2216 = vrcp.pop %v2215
    %v2217 = vmul.f32 %v2187, %v2216
    %v2218 = vmul.f32 %v2133, %v2217
    %v2219 = vmul.f32 %v2190, %v2216
    %v2220 = vmul.f32 %v2134, %v2219
    %v2221 = vadd.f32 %v2218, %v2220
    %v2222 = vmul.f32 %v2193, %v2216
    %v2223 = vmul.f32 %v2135, %v2222
    %v2224 = vadd.f32 %v2221, %v2223
    %v2225 = vmul.f32 %v2196, %v2216
    %v2226 = vmul.f32 %v2136, %v2225
    %v2227 = vadd.f32 %v2224, %v2226
    %v2228 = vmul.f32 %v2199, %v2216
    %v2229 = vmul.f32 %v2137, %v2228
    %v2230 = vadd.f32 %v2227, %v2229
    %v2231 = vmul.f32 %v2202, %v2216
    %v2232 = vmul.f32 %v2138, %v2231
    %v2233 = vadd.f32 %v2230, %v2232
    %v2234 = vmul.f32 %v2205, %v2216
    %v2235 = vmul.f32 %v2139, %v2234
    %v2236 = vadd.f32 %v2233, %v2235
    %v2237 = vmul.f32 %v2208, %v2216
    %v2238 = vmul.f32 %v2140, %v2237
    %v2239 = vadd.f32 %v2236, %v2238
    %v2240 = vld [vmem:[#allocation8 + $0x8] sm:$0xff]
    %v2241 = vld [vmem:[#allocation8 + $0x10] sm:$0xff]
    %v2242 = vld [vmem:[#allocation8 + $0x18] sm:$0xff]
    %v2243 = vld [vmem:[#allocation8 + $0x20] sm:$0xff]
    %v2244 = vld [vmem:[#allocation8 + $0x28] sm:$0xff]
    %v2245 = vld [vmem:[#allocation8 + $0x30] sm:$0xff]
    %v2246 = vld [vmem:[#allocation8 + $0x38] sm:$0xff]
    %v2247 = vld [vmem:[#allocation8 + $0x40] sm:$0xff]
    %v2248 = vld [vmem:[#allocation8 + $0x48] sm:$0xff]
    %v2249 = vld [vmem:[#allocation8 + $0x50] sm:$0xff]
    %v2250 = vld [vmem:[#allocation8 + $0x58] sm:$0xff]
    %v2251 = vld [vmem:[#allocation8 + $0x60] sm:$0xff]
    %v2252 = vld [vmem:[#allocation8 + $0x68] sm:$0xff]
    %v2253 = vld [vmem:[#allocation8 + $0x70] sm:$0xff]
    %v2254 = vld [vmem:[#allocation8 + $0x78] sm:$0xff]
    %v2255 = vld [vmem:[#allocation8 + $0x80] sm:$0xff]
    %v2256 = vld [vmem:[#allocation8 + $0x88] sm:$0x1]
    %v2257 = vld [vmem:[#allocation8 + $0x90] sm:$0xff]
    %v2258 = vld [vmem:[#allocation8 + $0x98] sm:$0xff]
    %v2259 = vld [vmem:[#allocation8 + $0xa0] sm:$0xff]
    %v2260 = vld [vmem:[#allocation8 + $0xa8] sm:$0xff]
    %v2261 = vld [vmem:[#allocation8 + $0xb0] sm:$0xff]
    %v2262 = vld [vmem:[#allocation8 + $0xb8] sm:$0xff]
    %v2263 = vld [vmem:[#allocation8 + $0xc0] sm:$0xff]
    %v2264 = vld [vmem:[#allocation8 + $0xc8] sm:$0xff]
    %v2265 = vld [vmem:[#allocation8 + $0xd0] sm:$0xff]
    %v2266 = vld [vmem:[#allocation8 + $0xd8] sm:$0xff]
    %v2267 = vld [vmem:[#allocation8 + $0xe0] sm:$0xff]
    %v2268 = vld [vmem:[#allocation8 + $0xe8] sm:$0xff]
    %v2269 = vld [vmem:[#allocation8 + $0xf0] sm:$0xff]
    %v2270 = vld [vmem:[#allocation8 + $0xf8] sm:$0xff]
    %v2271 = vld [vmem:[#allocation8 + $0x100] sm:$0xff]
    %v2272 = vld [vmem:[#allocation8 + $0x108] sm:$0xff]
    %v2273 = vld [vmem:[#allocation8 + $0x110] sm:$0x1]
    %v2274 = vld [vmem:[#allocation8 + $0x118] sm:$0xff]
    %v2275 = vld [vmem:[#allocation8 + $0x120] sm:$0xff]
    %v2276 = vld [vmem:[#allocation8 + $0x128] sm:$0xff]
    %v2277 = vld [vmem:[#allocation8 + $0x130] sm:$0xff]
    %v2278 = vld [vmem:[#allocation8 + $0x138] sm:$0xff]
    %v2279 = vld [vmem:[#allocation8 + $0x140] sm:$0xff]
    %v2280 = vld [vmem:[#allocation8 + $0x148] sm:$0xff]
    %v2281 = vld [vmem:[#allocation8 + $0x150] sm:$0xff]
    %v2282 = vld [vmem:[#allocation8 + $0x158] sm:$0xff]
    %v2283 = vld [vmem:[#allocation8 + $0x160] sm:$0xff]
    %v2284 = vld [vmem:[#allocation8 + $0x168] sm:$0xff]
    %v2285 = vld [vmem:[#allocation8 + $0x170] sm:$0xff]
    %v2286 = vld [vmem:[#allocation8 + $0x178] sm:$0xff]
    %v2287 = vld [vmem:[#allocation8 + $0x180] sm:$0xff]
    %v2288 = vld [vmem:[#allocation8 + $0x188] sm:$0xff]
    %v2289 = vld [vmem:[#allocation8 + $0x190] sm:$0xff]
    %v2290 = vld [vmem:[#allocation8 + $0x198] sm:$0x1]
    %v2291 = vlaneseq
    %v2292 = vshrl.u32 %v2291, 7
    %v2293 = vsub.s32 0, %v2292
    %v2294 = vrot.slane %v2256, %v2293
    %2295 = vmatprep.subr.mxu0 0.0
    %2296 = vmatpush1.msra.mxu0 %v2240
    %2297 = vmatprep.subr.mxu0 0.0
    %2298 = vmatpush1.msra.mxu0 %v2241
    %2299 = vmatprep.subr.mxu0 0.0
    %2300 = vmatpush1.msra.mxu0 %v2242
    %2301 = vmatprep.subr.mxu0 0.0
    %2302 = vmatpush1.msra.mxu0 %v2243
    %2303 = vmatprep.subr.mxu0 0.0
    %2304 = vmatpush1.msra.mxu0 %v2244
    %2305 = vmatprep.subr.mxu0 0.0
    %2306 = vmatpush1.msra.mxu0 %v2245
    %2307 = vmatprep.subr.mxu0 0.0
    %2308 = vmatpush1.msra.mxu0 %v2246
    %2309 = vmatprep.subr.mxu0 0.0
    %2310 = vmatpush1.msra.mxu0 %v2247
    %2311 = vmatprep.subr.mxu0 0.0
    %2312 = vmatpush1.msra.mxu0 %v2248
    %2313 = vmatprep.subr.mxu0 0.0
    %2314 = vmatpush1.msra.mxu0 %v2249
    %2315 = vmatprep.subr.mxu0 0.0
    %2316 = vmatpush1.msra.mxu0 %v2250
    %2317 = vmatprep.subr.mxu0 0.0
    %2318 = vmatpush1.msra.mxu0 %v2251
    %2319 = vmatprep.subr.mxu0 0.0
    %2320 = vmatpush1.msra.mxu0 %v2252
    %2321 = vmatprep.subr.mxu0 0.0
    %2322 = vmatpush1.msra.mxu0 %v2253
    %2323 = vmatprep.subr.mxu0 0.0
    %2324 = vmatpush1.msra.mxu0 %v2254
    %2325 = vmatprep.subr.mxu0 0.0
    %2326 = vmatpush1.msra.mxu0 %v2255
    %2327 = vmatprep.subr.mxu0 0.0
    %2328 = vmatpush1.msra.mxu0 0.0
    %2329 = vmatprep.subr.mxu0 0.0
    %2330 = vmatpush1.msra.mxu0 0.0
    %2331 = vmatprep.subr.mxu0 0.0
    %2332 = vmatpush1.msra.mxu0 0.0
    %2333 = vmatprep.subr.mxu0 0.0
    %2334 = vmatpush1.msra.mxu0 0.0
    %2335 = vmatprep.subr.mxu0 0.0
    %2336 = vmatpush1.msra.mxu0 0.0
    %2337 = vmatprep.subr.mxu0 0.0
    %2338 = vmatpush1.msra.mxu0 0.0
    %2339 = vmatprep.subr.mxu0 0.0
    %2340 = vmatpush1.msra.mxu0 0.0
    %2341 = vmatprep.subr.mxu0 0.0
    %2342 = vmatpush1.msra.mxu0 0.0
    %2343 = vmatprep.subr.mxu0 0.0
    %2344 = vmatpush1.msra.mxu0 0.0
    %2345 = vmatprep.subr.mxu0 0.0
    %2346 = vmatpush1.msra.mxu0 0.0
    %2347 = vmatprep.subr.mxu0 0.0
    %2348 = vmatpush1.msra.mxu0 0.0
    %2349 = vmatprep.subr.mxu0 0.0
    %2350 = vmatpush1.msra.mxu0 0.0
    %2351 = vmatprep.subr.mxu0 0.0
    %2352 = vmatpush1.msra.mxu0 0.0
    %2353 = vmatprep.subr.mxu0 0.0
    %2354 = vmatpush1.msra.mxu0 0.0
    %2355 = vmatprep.subr.mxu0 0.0
    %2356 = vmatpush1.msra.mxu0 0.0
    %2357 = vmatprep.subr.mxu0 0.0
    %2358 = vmatpush1.msra.mxu0 0.0
    %2359 = vmatprep.mubr.f32.mxu0 0.0
    %2360 = vmatmul.mubr.f32.gmra.mrb[0].mxu0 %v2239
    %v2361 = vpop.f32.mrb[0].mxu0
    %v2362 = vadd.f32 %v2294, %v2361
    %v2363 = vpop.f32.mrb[0].mxu0
    %2364 = vdwg.mxu0
    %v2365 = vmax.f32 %v2362, 0.0
    %v2366 = vlaneseq
    %v2367 = vshrl.u32 %v2366, 7
    %v2368 = vsub.s32 0, %v2367
    %v2369 = vrot.slane %v2273, %v2368
    %2370 = vmatprep.subr.mxu0 0.0
    %2371 = vmatpush1.msra.mxu0 %v2257
    %2372 = vmatprep.subr.mxu0 0.0
    %2373 = vmatpush1.msra.mxu0 %v2258
    %2374 = vmatprep.subr.mxu0 0.0
    %2375 = vmatpush1.msra.mxu0 %v2259
    %2376 = vmatprep.subr.mxu0 0.0
    %2377 = vmatpush1.msra.mxu0 %v2260
    %2378 = vmatprep.subr.mxu0 0.0
    %2379 = vmatpush1.msra.mxu0 %v2261
    %2380 = vmatprep.subr.mxu0 0.0
    %2381 = vmatpush1.msra.mxu0 %v2262
    %2382 = vmatprep.subr.mxu0 0.0
    %2383 = vmatpush1.msra.mxu0 %v2263
    %2384 = vmatprep.subr.mxu0 0.0
    %2385 = vmatpush1.msra.mxu0 %v2264
    %2386 = vmatprep.subr.mxu0 0.0
    %2387 = vmatpush1.msra.mxu0 %v2265
    %2388 = vmatprep.subr.mxu0 0.0
    %2389 = vmatpush1.msra.mxu0 %v2266
    %2390 = vmatprep.subr.mxu0 0.0
    %2391 = vmatpush1.msra.mxu0 %v2267
    %2392 = vmatprep.subr.mxu0 0.0
    %2393 = vmatpush1.msra.mxu0 %v2268
    %2394 = vmatprep.subr.mxu0 0.0
    %2395 = vmatpush1.msra.mxu0 %v2269
    %2396 = vmatprep.subr.mxu0 0.0
    %2397 = vmatpush1.msra.mxu0 %v2270
    %2398 = vmatprep.subr.mxu0 0.0
    %2399 = vmatpush1.msra.mxu0 %v2271
    %2400 = vmatprep.subr.mxu0 0.0
    %2401 = vmatpush1.msra.mxu0 %v2272
    %2402 = vmatprep.subr.mxu0 0.0
    %2403 = vmatpush1.msra.mxu0 0.0
    %2404 = vmatprep.subr.mxu0 0.0
    %2405 = vmatpush1.msra.mxu0 0.0
    %2406 = vmatprep.subr.mxu0 0.0
    %2407 = vmatpush1.msra.mxu0 0.0
    %2408 = vmatprep.subr.mxu0 0.0
    %2409 = vmatpush1.msra.mxu0 0.0
    %2410 = vmatprep.subr.mxu0 0.0
    %2411 = vmatpush1.msra.mxu0 0.0
    %2412 = vmatprep.subr.mxu0 0.0
    %2413 = vmatpush1.msra.mxu0 0.0
    %2414 = vmatprep.subr.mxu0 0.0
    %2415 = vmatpush1.msra.mxu0 0.0
    %2416 = vmatprep.subr.mxu0 0.0
    %2417 = vmatpush1.msra.mxu0 0.0
    %2418 = vmatprep.subr.mxu0 0.0
    %2419 = vmatpush1.msra.mxu0 0.0
    %2420 = vmatprep.subr.mxu0 0.0
    %2421 = vmatpush1.msra.mxu0 0.0
    %2422 = vmatprep.subr.mxu0 0.0
    %2423 = vmatpush1.msra.mxu0 0.0
    %2424 = vmatprep.subr.mxu0 0.0
    %2425 = vmatpush1.msra.mxu0 0.0
    %2426 = vmatprep.subr.mxu0 0.0
    %2427 = vmatpush1.msra.mxu0 0.0
    %2428 = vmatprep.subr.mxu0 0.0
    %2429 = vmatpush1.msra.mxu0 0.0
    %2430 = vmatprep.subr.mxu0 0.0
    %2431 = vmatpush1.msra.mxu0 0.0
    %2432 = vmatprep.subr.mxu0 0.0
    %2433 = vmatpush1.msra.mxu0 0.0
    %2434 = vmatprep.mubr.f32.mxu0 0.0
    %2435 = vmatmul.mubr.f32.gmra.mrb[0].mxu0 %v2365
    %v2436 = vpop.f32.mrb[0].mxu0
    %v2437 = vadd.f32 %v2369, %v2436
    %v2438 = vpop.f32.mrb[0].mxu0
    %2439 = vdwg.mxu0
    %v2440 = vmax.f32 %v2437, 0.0
    %v2441 = vlaneseq
    %v2442 = vshrl.u32 %v2441, 7
    %v2443 = vsub.s32 0, %v2442
    %v2444 = vrot.slane %v2290, %v2443
    %2445 = vmatprep.subr.mxu0 0.0
    %2446 = vmatpush1.msra.mxu0 %v2274
    %2447 = vmatprep.subr.mxu0 0.0
    %2448 = vmatpush1.msra.mxu0 %v2275
    %2449 = vmatprep.subr.mxu0 0.0
    %2450 = vmatpush1.msra.mxu0 %v2276
    %2451 = vmatprep.subr.mxu0 0.0
    %2452 = vmatpush1.msra.mxu0 %v2277
    %2453 = vmatprep.subr.mxu0 0.0
    %2454 = vmatpush1.msra.mxu0 %v2278
    %2455 = vmatprep.subr.mxu0 0.0
    %2456 = vmatpush1.msra.mxu0 %v2279
    %2457 = vmatprep.subr.mxu0 0.0
    %2458 = vmatpush1.msra.mxu0 %v2280
    %2459 = vmatprep.subr.mxu0 0.0
    %2460 = vmatpush1.msra.mxu0 %v2281
    %2461 = vmatprep.subr.mxu0 0.0
    %2462 = vmatpush1.msra.mxu0 %v2282
    %2463 = vmatprep.subr.mxu0 0.0
    %2464 = vmatpush1.msra.mxu0 %v2283
    %2465 = vmatprep.subr.mxu0 0.0
    %2466 = vmatpush1.msra.mxu0 %v2284
    %2467 = vmatprep.subr.mxu0 0.0
    %2468 = vmatpush1.msra.mxu0 %v2285
    %2469 = vmatprep.subr.mxu0 0.0
    %2470 = vmatpush1.msra.mxu0 %v2286
    %2471 = vmatprep.subr.mxu0 0.0
    %2472 = vmatpush1.msra.mxu0 %v2287
    %2473 = vmatprep.subr.mxu0 0.0
    %2474 = vmatpush1.msra.mxu0 %v2288
    %2475 = vmatprep.subr.mxu0 0.0
    %2476 = vmatpush1.msra.mxu0 %v2289
    %2477 = vmatprep.subr.mxu0 0.0
    %2478 = vmatpush1.msra.mxu0 0.0
    %2479 = vmatprep.subr.mxu0 0.0
    %2480 = vmatpush1.msra.mxu0 0.0
    %2481 = vmatprep.subr.mxu0 0.0
    %2482 = vmatpush1.msra.mxu0 0.0
    %2483 = vmatprep.subr.mxu0 0.0
    %2484 = vmatpush1.msra.mxu0 0.0
    %2485 = vmatprep.subr.mxu0 0.0
    %2486 = vmatpush1.msra.mxu0 0.0
    %2487 = vmatprep.subr.mxu0 0.0
    %2488 = vmatpush1.msra.mxu0 0.0
    %2489 = vmatprep.subr.mxu0 0.0
    %2490 = vmatpush1.msra.mxu0 0.0
    %2491 = vmatprep.subr.mxu0 0.0
    %2492 = vmatpush1.msra.mxu0 0.0
    %2493 = vmatprep.subr.mxu0 0.0
    %2494 = vmatpush1.msra.mxu0 0.0
    %2495 = vmatprep.subr.mxu0 0.0
    %2496 = vmatpush1.msra.mxu0 0.0
    %2497 = vmatprep.subr.mxu0 0.0
    %2498 = vmatpush1.msra.mxu0 0.0
    %2499 = vmatprep.subr.mxu0 0.0
    %2500 = vmatpush1.msra.mxu0 0.0
    %2501 = vmatprep.subr.mxu0 0.0
    %2502 = vmatpush1.msra.mxu0 0.0
    %2503 = vmatprep.subr.mxu0 0.0
    %2504 = vmatpush1.msra.mxu0 0.0
    %2505 = vmatprep.subr.mxu0 0.0
    %2506 = vmatpush1.msra.mxu0 0.0
    %2507 = vmatprep.subr.mxu0 0.0
    %2508 = vmatpush1.msra.mxu0 0.0
    %2509 = vmatprep.mubr.f32.mxu0 0.0
    %2510 = vmatmul.mubr.f32.gmra.mrb[0].mxu0 %v2440
    %v2511 = vpop.f32.mrb[0].mxu0
    %v2512 = vadd.f32 %v2444, %v2511
    %v2513 = vpop.f32.mrb[0].mxu0
    %2514 = vdwg.mxu0
    %2515 = vst [vmem:[#allocation10] sm:$0x3] %v2512
    // Predicated region
    $region26: #{enhanced_gru_forward.1} parent=1 // pred_check
      _
    $region27: #{enhanced_gru_forward.1} parent=1 // pred_check_branch
      %2517 = sbr.rel (0) target = $region29
    $region28: #{enhanced_gru_forward.1} parent=1 // pred_region
      %s2519 = ssub.s32 32, 32
      %2520 = vsyncadd [#allocation7], %s2519
      %s2522 = sshll.u32 [#allocation10], 4
      %s2523 = int_to_ptr.vmem [resolvable:$true] %s2522
      %2525 = dma.vmem_to_hbm [thread:$0]  %s2523, 32, %s4, [#allocation7]
    $region29: #{enhanced_gru_forward.1} parent=1 // pred_fallthru
      _
    // Predicated region
    $region30: #{enhanced_gru_forward.1} parent=1 // pred_check
      _
    $region31: #{enhanced_gru_forward.1} parent=1 // pred_check_branch
      %2527 = sbr.rel (0) target = $region33
    $region32: #{enhanced_gru_forward.1} parent=1 // pred_region
      %2528 = dma.done [#allocation7], 32
    $region33: #{enhanced_gru_forward.1} parent=1 // pred_fallthru
      _
    %2529 = vsyncpa [#allocation6], 1
    %2530 = vsyncpa [#allocation9], 1
    %2531 = vsyncpa [#allocation7], 1

</llo_original>
